<compile_context>
chip_gen: v5e
topology: v5e:2x2
jax: 0.10.0
libtpu: 0.0.40
codegen_flags: <defaults>
</compile_context>

<pallas_src>
import math

import numpy as np
import jax
import jax.numpy as jnp
from jax import lax
from jax.experimental import pallas as pl
from jax.experimental.pallas import tpu as pltpu  # noqa: F401  (TPU backend assumed)

# ----------------------------- configuration -----------------------------
IN_DIM = 8
HIDDEN = 32
EMBED = 32
L = 3
N_CLASSES = 6
BATCH = 2
NODES_PER_GRAPH = 8
N_NODES = BATCH * NODES_PER_GRAPH
ASSIGN_DIM = 8                 # total clusters across the batch after the first DiffPool
POOL_RATIO = 0.5
NUM_POOL = 2
CONCAT = False                 # net_params['cat']
RESIDUAL = True

F32 = jnp.float32
L2_EPS = 1e-12                 # F.normalize eps
BN_EPS = 1e-5                  # nn.BatchNorm1d eps

NPP = ASSIGN_DIM // BATCH                  # clusters per graph after first DiffPool (4)
ASSIGN2 = int(ASSIGN_DIM * POOL_RATIO)     # per-graph cluster count of the dense pool (4)
N_POOL = BATCH * NPP                       # flat pooled node count (8); stays 8 after 2nd pool


# ----------------------------- fused Pallas kernel -----------------------------
def _diffpool_kernel(*refs):
    """Whole DiffPoolNet forward on VMEM-resident tensors. Inputs in fixed order:
       adj, h, amask, bmask, cmat, gmask, <35 pre-transposed weights/biases>; output ypred."""
    out_ref = refs[-1]
    it = iter(refs[:-1])
    nxt = lambda: next(it)[...]

    adj = nxt()      # (16,16) block-diagonal dense adjacency
    h = nxt()        # (16,8)  node features
    amask = nxt()    # (16,8)  block_diag assignment mask (first DiffPool masked_softmax)
    bmask = nxt()    # (8,8)   block mask to build block-diagonal S of the dense DiffPool
    cmat = nxt()     # (8,8)   cmat[p,q]=1 iff p%NPP==q%NPP  (per-node-channel BN stats)
    gmask = nxt()    # (2,8)   pooled graph membership (final per-graph readout)

    def mm(a, b):
        return jnp.dot(a, b, preferred_element_type=jnp.float32)

    def tdot(a, b):  # a^T @ b (contract dim 0 of both) without an explicit transpose
        return lax.dot_general(a, b, (((0,), (0,)), ((), ())),
                               preferred_element_type=jnp.float32)

    def l2norm_rows(y):   # F.normalize(y, p=2, dim=-1)
        sq = jnp.sum(y * y, axis=1, keepdims=True)
        return y * lax.rsqrt(jnp.maximum(sq, L2_EPS * L2_EPS))

    def softmax_rows(x):
        m = jnp.max(x, axis=-1, keepdims=True)
        e = jnp.exp(x - m)
        return e / jnp.sum(e, axis=-1, keepdims=True)

    def bn_feature(y):    # nn.BatchNorm1d(D) on (N,D), train mode, gamma=1 beta=0
        mean = jnp.mean(y, axis=0, keepdims=True)
        var = jnp.mean((y - mean) ** 2, axis=0, keepdims=True)
        return (y - mean) * lax.rsqrt(var + BN_EPS)

    def bn_nodechannel(y):
        # lazy nn.BatchNorm1d(n) on (B,n,D) kept in flat block-diagonal (B*n, D) form:
        # channel = node index within graph, stats over (batch, feature).
        inv = 1.0 / float(BATCH * y.shape[1])
        mean_f = jnp.sum(mm(cmat, y), axis=1, keepdims=True) * inv     # per-row channel mean
        diff = y - mean_f
        var_f = jnp.sum(mm(cmat, diff * diff), axis=1, keepdims=True) * inv
        return diff * lax.rsqrt(var_f + BN_EPS)

    deg_inv = 1.0 / jnp.maximum(jnp.sum(adj, axis=1, keepdims=True), 1.0)

    def sage(hin, wh, wc, b, act, use_bn, residual):
        # GraphSageLayer (mean aggregator), dropout=0, train-mode BN.
        c = mm(adj, hin) * deg_inv                       # mean aggregation
        y = mm(hin, wh) + mm(c, wc) + b                  # NodeApply: Linear(cat(h, c))
        y = l2norm_rows(y)
        if act:
            y = jnp.maximum(y, 0.0)
        if use_bn:
            y = bn_feature(y)
        if residual and hin.shape[1] == y.shape[1]:
            y = hin + y
        return y

    def dense_sage(x, a, wt, b, residual):
        # DenseGraphSage (tensorized) on block-diagonal flat tensors, with lazy BN.
        hk = mm(mm(a, x), wt) + b
        hk = l2norm_rows(hk)
        hk = jnp.maximum(hk, 0.0)
        if residual and x.shape[1] == hk.shape[1]:
            hk = x + hk
        return bn_nodechannel(hk)

    # ---------------- embedding_h + gc_before_pool ----------------
    wt, b = nxt(), nxt()
    h = mm(h, wt) + b
    for i in range(L):
        wh, wc, b = nxt(), nxt(), nxt()
        last = i == L - 1
        h = sage(h, wh, wc, b, act=not last, use_bn=not last, residual=RESIDUAL)
    g_embedding = h
    # dgl.sum_nodes readout -> out_all[0]; unused for ypred (concat=False, num_aggs=1)

    # ---------------- first DiffPoolLayer ----------------
    wh, wc, b = nxt(), nxt(), nxt()
    feat = sage(g_embedding, wh, wc, b, act=True, use_bn=False, residual=False)
    wh, wc, b = nxt(), nxt(), nxt()
    assign = sage(g_embedding, wh, wc, b, act=True, use_bn=False, residual=False)
    # masked_softmax(..., memory_efficient=False)
    sm = softmax_rows(assign * amask) * amask
    assign = sm / (jnp.sum(sm, axis=-1, keepdims=True) + 1e-13)
    # TODO(synk): link-pred / entropy regularisation terms only populate loss_log; not part of ypred.
    ht = tdot(assign, feat) * float(math.sqrt(1.0 / NPP))   # batch2tensor node scaling sqrt(1/n)
    at = tdot(assign, mm(adj, assign))                      # exactly block-diagonal (== diag blocks)

    # ---------------- gc_after_pool[0] ----------------
    for _ in range(L):
        wt, b = nxt(), nxt()
        ht = dense_sage(ht, at, wt, b, residual=RESIDUAL)
    # intermediate sum-readout -> out_all[1]; unused for ypred

    # ---------------- DenseDiffPool layers ----------------
    for _ in range(NUM_POOL - 1):
        wt, b = nxt(), nxt()
        z = dense_sage(ht, at, wt, b, residual=False)
        wt, b = nxt(), nxt()
        s = softmax_rows(dense_sage(ht, at, wt, b, residual=False))
        # block-diagonal assignment S: (B*NPP, B*ASSIGN2)
        S = jnp.concatenate([s] * BATCH, axis=1) * bmask
        ht = tdot(S, z)
        at = tdot(S, mm(at, S))
        for _ in range(L):
            wt, b = nxt(), nxt()
            ht = dense_sage(ht, at, wt, b, residual=RESIDUAL)

    # final readout (sum over nodes per graph) + prediction head
    readout = mm(gmask, ht)                      # (BATCH, EMBED)
    wt, b = nxt(), nxt()
    out_ref[...] = mm(readout, wt) + b           # (BATCH, N_CLASSES)

    leftover = list(it)
    assert not leftover, f"unconsumed kernel inputs: {len(leftover)}"


@jax.jit
def diffpool_forward(adj, h, consts, weights):
    return pl.pallas_call(
        _diffpool_kernel,
        out_shape=jax.ShapeDtypeStruct((BATCH, N_CLASSES), F32),
    )(adj.astype(F32), h.astype(F32), *consts, *weights)


# ----------------------------- hoisted parameter packing -----------------------------
def pack_params(params):
    """Pre-transpose / split / reshape all weights once (outside jit), in kernel order."""
    args = []

    def lin_t(p):                       # nn.Linear / DenseGraphSage: y = x @ W^T + b
        args.append(jnp.asarray(p['W'].T, F32))
        args.append(jnp.asarray(p['b'].reshape(1, -1), F32))

    def sage_t(p, din):                 # GraphSage NodeApply Linear on cat(h, c)
        W = jnp.asarray(p['W'], F32)
        args.append(W[:, :din].T)       # wh
        args.append(W[:, din:].T)       # wc
        args.append(jnp.asarray(p['b'].reshape(1, -1), F32))

    pool_emb_dim = EMBED if not CONCAT else HIDDEN * (L - 1) + EMBED

    lin_t(params['emb'])
    for p in params['gc_before']:
        sage_t(p, HIDDEN)
    sage_t(params['dp_feat'], pool_emb_dim)
    sage_t(params['dp_pool'], pool_emb_dim)
    for p in params['gc_after'][0]:
        lin_t(p)
    for li in range(NUM_POOL - 1):
        lin_t(params['dense_dp'][li]['embed'])
        lin_t(params['dense_dp'][li]['assign'])
        for p in params['gc_after'][li + 1]:
            lin_t(p)
    lin_t(params['pred'])
    return tuple(args)


def build_constants():
    npp = ASSIGN_DIM // BATCH
    # first DiffPool masked-softmax mask: block_diag(ones(nodes_per_graph, clusters_per_graph))
    amask = np.kron(np.eye(BATCH, dtype=np.float32),
                    np.ones((NODES_PER_GRAPH, npp), np.float32))            # (16, 8)
    # block mask to build the block-diagonal S of the (single) dense DiffPool layer
    bmask = np.kron(np.eye(BATCH, dtype=np.float32),
                    np.ones((npp, ASSIGN2), np.float32))                    # (8, 8)
    # per-node-channel BN grouping (channel = node index within graph); valid for both
    # pooled levels here because NPP == ASSIGN2 for this config.
    idx = np.arange(N_POOL)
    cmat = (idx[:, None] % npp == idx[None, :] % npp).astype(np.float32)    # (8, 8)
    # per-graph membership of the final pooled graph (sum readout)
    gmask = np.kron(np.eye(BATCH, dtype=np.float32),
                    np.ones((1, ASSIGN2), np.float32))                      # (2, 8)
    return tuple(jnp.asarray(x) for x in (amask, bmask, cmat, gmask))


# ----------------------------- parameter init (same as PyTorch init) -----------------------------
def init_params(key):
    gain = math.sqrt(2.0)  # nn.init.calculate_gain('relu')
    kit = iter(jax.random.split(key, 32))

    def lin(out_f, in_f):
        bound = gain * math.sqrt(6.0 / (in_f + out_f))   # xavier_uniform_
        W = jax.random.uniform(next(kit), (out_f, in_f), F32, -bound, bound)
        return {'W': W, 'b': jnp.zeros((out_f,), F32)}

    pool_embedding_dim = EMBED if not CONCAT else HIDDEN * (L - 1) + EMBED

    params = {
        'emb': lin(HIDDEN, IN_DIM),
        # GraphSage NodeApply linear takes cat(h, c): in = 2 * in_feats
        'gc_before': [lin(HIDDEN, 2 * HIDDEN) for _ in range(L - 1)] + [lin(EMBED, 2 * HIDDEN)],
        'dp_feat': lin(HIDDEN, 2 * pool_embedding_dim),
        'dp_pool': lin(ASSIGN_DIM, 2 * pool_embedding_dim),
        'gc_after': [],
        'dense_dp': [],
    }
    params['gc_after'].append([lin(HIDDEN, HIDDEN) for _ in range(L - 1)] + [lin(EMBED, HIDDEN)])
    assign_dim = int(ASSIGN_DIM * POOL_RATIO)
    for _ in range(NUM_POOL - 1):
        params['dense_dp'].append({
            'embed': lin(HIDDEN, pool_embedding_dim),
            'assign': lin(assign_dim, pool_embedding_dim),
        })
        params['gc_after'].append([lin(HIDDEN, HIDDEN) for _ in range(L - 1)] + [lin(EMBED, HIDDEN)])
        assign_dim = int(assign_dim * POOL_RATIO)
    params['pred'] = lin(N_CLASSES, EMBED)   # concat=False, num_aggs=1 -> pred_input_dim = embedding_dim
    return params


def build_graph():
    # Batched undirected graph: 2 graphs of 8 nodes (ring + chord), block-diagonal dense adjacency.
    A = np.zeros((N_NODES, N_NODES), np.float32)
    for b in range(BATCH):
        off = b * NODES_PER_GRAPH
        for i in range(NODES_PER_GRAPH):
            j = (i + 1) % NODES_PER_GRAPH
            k = (i + 3) % NODES_PER_GRAPH
            A[off + i, off + j] = 1.0
            A[off + j, off + i] = 1.0
            A[off + i, off + k] = 1.0
            A[off + k, off + i] = 1.0
    return jnp.asarray(A)


if __name__ == "__main__":
    key = jax.random.PRNGKey(0)
    k_param, k_x = jax.random.split(key)
    params = init_params(k_param)
    adj = build_graph()
    consts = build_constants()
    weights = pack_params(params)
    h = jax.random.normal(k_x, (N_NODES, IN_DIM), F32)

    ypred = diffpool_forward(adj, h, consts, weights)
    ypred = jax.block_until_ready(ypred)

    assert ypred.shape == (BATCH, N_CLASSES), ypred.shape
    assert bool(jnp.all(jnp.isfinite(ypred)))
    print("KERNEL_OK")
</pallas_src>

<mosaic_0001>
module attributes {stable_mosaic.version = 11 : i64} {
  func.func @_diffpool_kernel(%arg0: memref<16x16xf32, #tpu.memory_space<vmem>>, %arg1: memref<16x8xf32, #tpu.memory_space<vmem>>, %arg2: memref<16x8xf32, #tpu.memory_space<vmem>>, %arg3: memref<8x8xf32, #tpu.memory_space<vmem>>, %arg4: memref<8x8xf32, #tpu.memory_space<vmem>>, %arg5: memref<2x8xf32, #tpu.memory_space<vmem>>, %arg6: memref<8x32xf32, #tpu.memory_space<vmem>>, %arg7: memref<1x32xf32, #tpu.memory_space<vmem>>, %arg8: memref<32x32xf32, #tpu.memory_space<vmem>>, %arg9: memref<32x32xf32, #tpu.memory_space<vmem>>, %arg10: memref<1x32xf32, #tpu.memory_space<vmem>>, %arg11: memref<32x32xf32, #tpu.memory_space<vmem>>, %arg12: memref<32x32xf32, #tpu.memory_space<vmem>>, %arg13: memref<1x32xf32, #tpu.memory_space<vmem>>, %arg14: memref<32x32xf32, #tpu.memory_space<vmem>>, %arg15: memref<32x32xf32, #tpu.memory_space<vmem>>, %arg16: memref<1x32xf32, #tpu.memory_space<vmem>>, %arg17: memref<32x32xf32, #tpu.memory_space<vmem>>, %arg18: memref<32x32xf32, #tpu.memory_space<vmem>>, %arg19: memref<1x32xf32, #tpu.memory_space<vmem>>, %arg20: memref<32x8xf32, #tpu.memory_space<vmem>>, %arg21: memref<32x8xf32, #tpu.memory_space<vmem>>, %arg22: memref<1x8xf32, #tpu.memory_space<vmem>>, %arg23: memref<32x32xf32, #tpu.memory_space<vmem>>, %arg24: memref<1x32xf32, #tpu.memory_space<vmem>>, %arg25: memref<32x32xf32, #tpu.memory_space<vmem>>, %arg26: memref<1x32xf32, #tpu.memory_space<vmem>>, %arg27: memref<32x32xf32, #tpu.memory_space<vmem>>, %arg28: memref<1x32xf32, #tpu.memory_space<vmem>>, %arg29: memref<32x32xf32, #tpu.memory_space<vmem>>, %arg30: memref<1x32xf32, #tpu.memory_space<vmem>>, %arg31: memref<32x4xf32, #tpu.memory_space<vmem>>, %arg32: memref<1x4xf32, #tpu.memory_space<vmem>>, %arg33: memref<32x32xf32, #tpu.memory_space<vmem>>, %arg34: memref<1x32xf32, #tpu.memory_space<vmem>>, %arg35: memref<32x32xf32, #tpu.memory_space<vmem>>, %arg36: memref<1x32xf32, #tpu.memory_space<vmem>>, %arg37: memref<32x32xf32, #tpu.memory_space<vmem>>, %arg38: memref<1x32xf32, #tpu.memory_space<vmem>>, %arg39: memref<32x6xf32, #tpu.memory_space<vmem>>, %arg40: memref<1x6xf32, #tpu.memory_space<vmem>>, %arg41: memref<2x6xf32, #tpu.memory_space<vmem>>) attributes {dimension_semantics = [], scalar_prefetch = 0 : i64, scratch_operands = 0 : i64, tpu.core_type = #tpu.core_type<tc>} {
    %c0 = arith.constant 0 : index
    %c0_0 = arith.constant 0 : index
    %0 = vector.load %arg0[%c0, %c0_0] : memref<16x16xf32, #tpu.memory_space<vmem>>, vector<16x16xf32>
    %c0_1 = arith.constant 0 : index
    %c0_2 = arith.constant 0 : index
    %1 = vector.load %arg1[%c0_1, %c0_2] : memref<16x8xf32, #tpu.memory_space<vmem>>, vector<16x8xf32>
    %c0_3 = arith.constant 0 : index
    %c0_4 = arith.constant 0 : index
    %2 = vector.load %arg2[%c0_3, %c0_4] : memref<16x8xf32, #tpu.memory_space<vmem>>, vector<16x8xf32>
    %c0_5 = arith.constant 0 : index
    %c0_6 = arith.constant 0 : index
    %3 = vector.load %arg3[%c0_5, %c0_6] : memref<8x8xf32, #tpu.memory_space<vmem>>, vector<8x8xf32>
    %c0_7 = arith.constant 0 : index
    %c0_8 = arith.constant 0 : index
    %4 = vector.load %arg4[%c0_7, %c0_8] : memref<8x8xf32, #tpu.memory_space<vmem>>, vector<8x8xf32>
    %c0_9 = arith.constant 0 : index
    %c0_10 = arith.constant 0 : index
    %5 = vector.load %arg5[%c0_9, %c0_10] : memref<2x8xf32, #tpu.memory_space<vmem>>, vector<2x8xf32>
    %cst = arith.constant dense<0.000000e+00> : vector<16xf32>
    %6 = vector.multi_reduction <add>, %0, %cst [1] : vector<16x16xf32> to vector<16xf32>
    %7 = vector.shape_cast %6 : vector<16xf32> to vector<16x1xf32>
    %cst_11 = arith.constant 1.000000e+00 : f32
    %8 = vector.broadcast %cst_11 : f32 to vector<16x1xf32>
    %9 = arith.maximumf %7, %8 : vector<16x1xf32>
    %cst_12 = arith.constant 1.000000e+00 : f32
    %10 = vector.broadcast %cst_12 : f32 to vector<16x1xf32>
    %11 = arith.divf %10, %9 : vector<16x1xf32>
    %c0_13 = arith.constant 0 : index
    %c0_14 = arith.constant 0 : index
    %12 = vector.load %arg6[%c0_13, %c0_14] : memref<8x32xf32, #tpu.memory_space<vmem>>, vector<8x32xf32>
    %c0_15 = arith.constant 0 : index
    %c0_16 = arith.constant 0 : index
    %13 = vector.load %arg7[%c0_15, %c0_16] : memref<1x32xf32, #tpu.memory_space<vmem>>, vector<1x32xf32>
    %cst_17 = arith.constant dense<0.000000e+00> : vector<16x32xf32>
    %14 = tpu.matmul %1, %12, %cst_17 {dimension_numbers = #tpu.dot_dimension_numbers<[1], [0], [0], [1], [0, 0, 1, 1], [], []>} : vector<16x8xf32>, vector<8x32xf32>, vector<16x32xf32> -> vector<16x32xf32>
    %15 = vector.broadcast %13 : vector<1x32xf32> to vector<16x32xf32>
    %16 = arith.addf %14, %15 : vector<16x32xf32>
    %c0_18 = arith.constant 0 : index
    %c0_19 = arith.constant 0 : index
    %17 = vector.load %arg8[%c0_18, %c0_19] : memref<32x32xf32, #tpu.memory_space<vmem>>, vector<32x32xf32>
    %c0_20 = arith.constant 0 : index
    %c0_21 = arith.constant 0 : index
    %18 = vector.load %arg9[%c0_20, %c0_21] : memref<32x32xf32, #tpu.memory_space<vmem>>, vector<32x32xf32>
    %c0_22 = arith.constant 0 : index
    %c0_23 = arith.constant 0 : index
    %19 = vector.load %arg10[%c0_22, %c0_23] : memref<1x32xf32, #tpu.memory_space<vmem>>, vector<1x32xf32>
    %cst_24 = arith.constant dense<0.000000e+00> : vector<16x32xf32>
    %20 = tpu.matmul %0, %16, %cst_24 {dimension_numbers = #tpu.dot_dimension_numbers<[1], [0], [0], [1], [0, 0, 1, 1], [], []>} : vector<16x16xf32>, vector<16x32xf32>, vector<16x32xf32> -> vector<16x32xf32>
    %21 = vector.broadcast %11 : vector<16x1xf32> to vector<16x32xf32>
    %22 = arith.mulf %20, %21 : vector<16x32xf32>
    %cst_25 = arith.constant dense<0.000000e+00> : vector<16x32xf32>
    %23 = tpu.matmul %16, %17, %cst_25 {dimension_numbers = #tpu.dot_dimension_numbers<[1], [0], [0], [1], [0, 0, 1, 1], [], []>} : vector<16x32xf32>, vector<32x32xf32>, vector<16x32xf32> -> vector<16x32xf32>
    %cst_26 = arith.constant dense<0.000000e+00> : vector<16x32xf32>
    %24 = tpu.matmul %22, %18, %cst_26 {dimension_numbers = #tpu.dot_dimension_numbers<[1], [0], [0], [1], [0, 0, 1, 1], [], []>} : vector<16x32xf32>, vector<32x32xf32>, vector<16x32xf32> -> vector<16x32xf32>
    %25 = arith.addf %23, %24 : vector<16x32xf32>
    %26 = vector.broadcast %19 : vector<1x32xf32> to vector<16x32xf32>
    %27 = arith.addf %25, %26 : vector<16x32xf32>
    %28 = arith.mulf %27, %27 : vector<16x32xf32>
    %cst_27 = arith.constant dense<0.000000e+00> : vector<16xf32>
    %29 = vector.multi_reduction <add>, %28, %cst_27 [1] : vector<16x32xf32> to vector<16xf32>
    %30 = vector.shape_cast %29 : vector<16xf32> to vector<16x1xf32>
    %cst_28 = arith.constant 1.000000e-24 : f32
    %31 = vector.broadcast %cst_28 : f32 to vector<16x1xf32>
    %32 = arith.maximumf %30, %31 : vector<16x1xf32>
    %33 = math.rsqrt %32 : vector<16x1xf32>
    %34 = vector.broadcast %33 : vector<16x1xf32> to vector<16x32xf32>
    %35 = arith.mulf %27, %34 : vector<16x32xf32>
    %cst_29 = arith.constant 0.000000e+00 : f32
    %36 = vector.broadcast %cst_29 : f32 to vector<16x32xf32>
    %37 = arith.maximumf %35, %36 : vector<16x32xf32>
    %cst_30 = arith.constant dense<0.000000e+00> : vector<32xf32>
    %38 = vector.multi_reduction <add>, %37, %cst_30 [0] : vector<16x32xf32> to vector<32xf32>
    %39 = vector.shape_cast %38 : vector<32xf32> to vector<1x32xf32>
    %cst_31 = arith.constant 1.600000e+01 : f32
    %40 = vector.broadcast %cst_31 : f32 to vector<1x32xf32>
    %41 = arith.divf %39, %40 : vector<1x32xf32>
    %42 = vector.broadcast %41 : vector<1x32xf32> to vector<16x32xf32>
    %43 = arith.subf %37, %42 : vector<16x32xf32>
    %44 = arith.mulf %43, %43 : vector<16x32xf32>
    %cst_32 = arith.constant dense<0.000000e+00> : vector<32xf32>
    %45 = vector.multi_reduction <add>, %44, %cst_32 [0] : vector<16x32xf32> to vector<32xf32>
    %46 = vector.shape_cast %45 : vector<32xf32> to vector<1x32xf32>
    %cst_33 = arith.constant 1.600000e+01 : f32
    %47 = vector.broadcast %cst_33 : f32 to vector<1x32xf32>
    %48 = arith.divf %46, %47 : vector<1x32xf32>
    %49 = vector.broadcast %41 : vector<1x32xf32> to vector<16x32xf32>
    %50 = arith.subf %37, %49 : vector<16x32xf32>
    %cst_34 = arith.constant 9.99999974E-6 : f32
    %51 = vector.broadcast %cst_34 : f32 to vector<1x32xf32>
    %52 = arith.addf %48, %51 : vector<1x32xf32>
    %53 = math.rsqrt %52 : vector<1x32xf32>
    %54 = vector.broadcast %53 : vector<1x32xf32> to vector<16x32xf32>
    %55 = arith.mulf %50, %54 : vector<16x32xf32>
    %56 = arith.addf %16, %55 : vector<16x32xf32>
    %c0_35 = arith.constant 0 : index
    %c0_36 = arith.constant 0 : index
    %57 = vector.load %arg11[%c0_35, %c0_36] : memref<32x32xf32, #tpu.memory_space<vmem>>, vector<32x32xf32>
    %c0_37 = arith.constant 0 : index
    %c0_38 = arith.constant 0 : index
    %58 = vector.load %arg12[%c0_37, %c0_38] : memref<32x32xf32, #tpu.memory_space<vmem>>, vector<32x32xf32>
    %c0_39 = arith.constant 0 : index
    %c0_40 = arith.constant 0 : index
    %59 = vector.load %arg13[%c0_39, %c0_40] : memref<1x32xf32, #tpu.memory_space<vmem>>, vector<1x32xf32>
    %cst_41 = arith.constant dense<0.000000e+00> : vector<16x32xf32>
    %60 = tpu.matmul %0, %56, %cst_41 {dimension_numbers = #tpu.dot_dimension_numbers<[1], [0], [0], [1], [0, 0, 1, 1], [], []>} : vector<16x16xf32>, vector<16x32xf32>, vector<16x32xf32> -> vector<16x32xf32>
    %61 = vector.broadcast %11 : vector<16x1xf32> to vector<16x32xf32>
    %62 = arith.mulf %60, %61 : vector<16x32xf32>
    %cst_42 = arith.constant dense<0.000000e+00> : vector<16x32xf32>
    %63 = tpu.matmul %56, %57, %cst_42 {dimension_numbers = #tpu.dot_dimension_numbers<[1], [0], [0], [1], [0, 0, 1, 1], [], []>} : vector<16x32xf32>, vector<32x32xf32>, vector<16x32xf32> -> vector<16x32xf32>
    %cst_43 = arith.constant dense<0.000000e+00> : vector<16x32xf32>
    %64 = tpu.matmul %62, %58, %cst_43 {dimension_numbers = #tpu.dot_dimension_numbers<[1], [0], [0], [1], [0, 0, 1, 1], [], []>} : vector<16x32xf32>, vector<32x32xf32>, vector<16x32xf32> -> vector<16x32xf32>
    %65 = arith.addf %63, %64 : vector<16x32xf32>
    %66 = vector.broadcast %59 : vector<1x32xf32> to vector<16x32xf32>
    %67 = arith.addf %65, %66 : vector<16x32xf32>
    %68 = arith.mulf %67, %67 : vector<16x32xf32>
    %cst_44 = arith.constant dense<0.000000e+00> : vector<16xf32>
    %69 = vector.multi_reduction <add>, %68, %cst_44 [1] : vector<16x32xf32> to vector<16xf32>
    %70 = vector.shape_cast %69 : vector<16xf32> to vector<16x1xf32>
    %cst_45 = arith.constant 1.000000e-24 : f32
    %71 = vector.broadcast %cst_45 : f32 to vector<16x1xf32>
    %72 = arith.maximumf %70, %71 : vector<16x1xf32>
    %73 = math.rsqrt %72 : vector<16x1xf32>
    %74 = vector.broadcast %73 : vector<16x1xf32> to vector<16x32xf32>
    %75 = arith.mulf %67, %74 : vector<16x32xf32>
    %cst_46 = arith.constant 0.000000e+00 : f32
    %76 = vector.broadcast %cst_46 : f32 to vector<16x32xf32>
    %77 = arith.maximumf %75, %76 : vector<16x32xf32>
    %cst_47 = arith.constant dense<0.000000e+00> : vector<32xf32>
    %78 = vector.multi_reduction <add>, %77, %cst_47 [0] : vector<16x32xf32> to vector<32xf32>
    %79 = vector.shape_cast %78 : vector<32xf32> to vector<1x32xf32>
    %cst_48 = arith.constant 1.600000e+01 : f32
    %80 = vector.broadcast %cst_48 : f32 to vector<1x32xf32>
    %81 = arith.divf %79, %80 : vector<1x32xf32>
    %82 = vector.broadcast %81 : vector<1x32xf32> to vector<16x32xf32>
    %83 = arith.subf %77, %82 : vector<16x32xf32>
    %84 = arith.mulf %83, %83 : vector<16x32xf32>
    %cst_49 = arith.constant dense<0.000000e+00> : vector<32xf32>
    %85 = vector.multi_reduction <add>, %84, %cst_49 [0] : vector<16x32xf32> to vector<32xf32>
    %86 = vector.shape_cast %85 : vector<32xf32> to vector<1x32xf32>
    %cst_50 = arith.constant 1.600000e+01 : f32
    %87 = vector.broadcast %cst_50 : f32 to vector<1x32xf32>
    %88 = arith.divf %86, %87 : vector<1x32xf32>
    %89 = vector.broadcast %81 : vector<1x32xf32> to vector<16x32xf32>
    %90 = arith.subf %77, %89 : vector<16x32xf32>
    %cst_51 = arith.constant 9.99999974E-6 : f32
    %91 = vector.broadcast %cst_51 : f32 to vector<1x32xf32>
    %92 = arith.addf %88, %91 : vector<1x32xf32>
    %93 = math.rsqrt %92 : vector<1x32xf32>
    %94 = vector.broadcast %93 : vector<1x32xf32> to vector<16x32xf32>
    %95 = arith.mulf %90, %94 : vector<16x32xf32>
    %96 = arith.addf %56, %95 : vector<16x32xf32>
    %c0_52 = arith.constant 0 : index
    %c0_53 = arith.constant 0 : index
    %97 = vector.load %arg14[%c0_52, %c0_53] : memref<32x32xf32, #tpu.memory_space<vmem>>, vector<32x32xf32>
    %c0_54 = arith.constant 0 : index
    %c0_55 = arith.constant 0 : index
    %98 = vector.load %arg15[%c0_54, %c0_55] : memref<32x32xf32, #tpu.memory_space<vmem>>, vector<32x32xf32>
    %c0_56 = arith.constant 0 : index
    %c0_57 = arith.constant 0 : index
    %99 = vector.load %arg16[%c0_56, %c0_57] : memref<1x32xf32, #tpu.memory_space<vmem>>, vector<1x32xf32>
    %cst_58 = arith.constant dense<0.000000e+00> : vector<16x32xf32>
    %100 = tpu.matmul %0, %96, %cst_58 {dimension_numbers = #tpu.dot_dimension_numbers<[1], [0], [0], [1], [0, 0, 1, 1], [], []>} : vector<16x16xf32>, vector<16x32xf32>, vector<16x32xf32> -> vector<16x32xf32>
    %101 = vector.broadcast %11 : vector<16x1xf32> to vector<16x32xf32>
    %102 = arith.mulf %100, %101 : vector<16x32xf32>
    %cst_59 = arith.constant dense<0.000000e+00> : vector<16x32xf32>
    %103 = tpu.matmul %96, %97, %cst_59 {dimension_numbers = #tpu.dot_dimension_numbers<[1], [0], [0], [1], [0, 0, 1, 1], [], []>} : vector<16x32xf32>, vector<32x32xf32>, vector<16x32xf32> -> vector<16x32xf32>
    %cst_60 = arith.constant dense<0.000000e+00> : vector<16x32xf32>
    %104 = tpu.matmul %102, %98, %cst_60 {dimension_numbers = #tpu.dot_dimension_numbers<[1], [0], [0], [1], [0, 0, 1, 1], [], []>} : vector<16x32xf32>, vector<32x32xf32>, vector<16x32xf32> -> vector<16x32xf32>
    %105 = arith.addf %103, %104 : vector<16x32xf32>
    %106 = vector.broadcast %99 : vector<1x32xf32> to vector<16x32xf32>
    %107 = arith.addf %105, %106 : vector<16x32xf32>
    %108 = arith.mulf %107, %107 : vector<16x32xf32>
    %cst_61 = arith.constant dense<0.000000e+00> : vector<16xf32>
    %109 = vector.multi_reduction <add>, %108, %cst_61 [1] : vector<16x32xf32> to vector<16xf32>
    %110 = vector.shape_cast %109 : vector<16xf32> to vector<16x1xf32>
    %cst_62 = arith.constant 1.000000e-24 : f32
    %111 = vector.broadcast %cst_62 : f32 to vector<16x1xf32>
    %112 = arith.maximumf %110, %111 : vector<16x1xf32>
    %113 = math.rsqrt %112 : vector<16x1xf32>
    %114 = vector.broadcast %113 : vector<16x1xf32> to vector<16x32xf32>
    %115 = arith.mulf %107, %114 : vector<16x32xf32>
    %116 = arith.addf %96, %115 : vector<16x32xf32>
    %c0_63 = arith.constant 0 : index
    %c0_64 = arith.constant 0 : index
    %117 = vector.load %arg17[%c0_63, %c0_64] : memref<32x32xf32, #tpu.memory_space<vmem>>, vector<32x32xf32>
    %c0_65 = arith.constant 0 : index
    %c0_66 = arith.constant 0 : index
    %118 = vector.load %arg18[%c0_65, %c0_66] : memref<32x32xf32, #tpu.memory_space<vmem>>, vector<32x32xf32>
    %c0_67 = arith.constant 0 : index
    %c0_68 = arith.constant 0 : index
    %119 = vector.load %arg19[%c0_67, %c0_68] : memref<1x32xf32, #tpu.memory_space<vmem>>, vector<1x32xf32>
    %cst_69 = arith.constant dense<0.000000e+00> : vector<16x32xf32>
    %120 = tpu.matmul %0, %116, %cst_69 {dimension_numbers = #tpu.dot_dimension_numbers<[1], [0], [0], [1], [0, 0, 1, 1], [], []>} : vector<16x16xf32>, vector<16x32xf32>, vector<16x32xf32> -> vector<16x32xf32>
    %121 = vector.broadcast %11 : vector<16x1xf32> to vector<16x32xf32>
    %122 = arith.mulf %120, %121 : vector<16x32xf32>
    %cst_70 = arith.constant dense<0.000000e+00> : vector<16x32xf32>
    %123 = tpu.matmul %116, %117, %cst_70 {dimension_numbers = #tpu.dot_dimension_numbers<[1], [0], [0], [1], [0, 0, 1, 1], [], []>} : vector<16x32xf32>, vector<32x32xf32>, vector<16x32xf32> -> vector<16x32xf32>
    %cst_71 = arith.constant dense<0.000000e+00> : vector<16x32xf32>
    %124 = tpu.matmul %122, %118, %cst_71 {dimension_numbers = #tpu.dot_dimension_numbers<[1], [0], [0], [1], [0, 0, 1, 1], [], []>} : vector<16x32xf32>, vector<32x32xf32>, vector<16x32xf32> -> vector<16x32xf32>
    %125 = arith.addf %123, %124 : vector<16x32xf32>
    %126 = vector.broadcast %119 : vector<1x32xf32> to vector<16x32xf32>
    %127 = arith.addf %125, %126 : vector<16x32xf32>
    %128 = arith.mulf %127, %127 : vector<16x32xf32>
    %cst_72 = arith.constant dense<0.000000e+00> : vector<16xf32>
    %129 = vector.multi_reduction <add>, %128, %cst_72 [1] : vector<16x32xf32> to vector<16xf32>
    %130 = vector.shape_cast %129 : vector<16xf32> to vector<16x1xf32>
    %cst_73 = arith.constant 1.000000e-24 : f32
    %131 = vector.broadcast %cst_73 : f32 to vector<16x1xf32>
    %132 = arith.maximumf %130, %131 : vector<16x1xf32>
    %133 = math.rsqrt %132 : vector<16x1xf32>
    %134 = vector.broadcast %133 : vector<16x1xf32> to vector<16x32xf32>
    %135 = arith.mulf %127, %134 : vector<16x32xf32>
    %cst_74 = arith.constant 0.000000e+00 : f32
    %136 = vector.broadcast %cst_74 : f32 to vector<16x32xf32>
    %137 = arith.maximumf %135, %136 : vector<16x32xf32>
    %c0_75 = arith.constant 0 : index
    %c0_76 = arith.constant 0 : index
    %138 = vector.load %arg20[%c0_75, %c0_76] : memref<32x8xf32, #tpu.memory_space<vmem>>, vector<32x8xf32>
    %c0_77 = arith.constant 0 : index
    %c0_78 = arith.constant 0 : index
    %139 = vector.load %arg21[%c0_77, %c0_78] : memref<32x8xf32, #tpu.memory_space<vmem>>, vector<32x8xf32>
    %c0_79 = arith.constant 0 : index
    %c0_80 = arith.constant 0 : index
    %140 = vector.load %arg22[%c0_79, %c0_80] : memref<1x8xf32, #tpu.memory_space<vmem>>, vector<1x8xf32>
    %cst_81 = arith.constant dense<0.000000e+00> : vector<16x32xf32>
    %141 = tpu.matmul %0, %116, %cst_81 {dimension_numbers = #tpu.dot_dimension_numbers<[1], [0], [0], [1], [0, 0, 1, 1], [], []>} : vector<16x16xf32>, vector<16x32xf32>, vector<16x32xf32> -> vector<16x32xf32>
    %142 = vector.broadcast %11 : vector<16x1xf32> to vector<16x32xf32>
    %143 = arith.mulf %141, %142 : vector<16x32xf32>
    %cst_82 = arith.constant dense<0.000000e+00> : vector<16x8xf32>
    %144 = tpu.matmul %116, %138, %cst_82 {dimension_numbers = #tpu.dot_dimension_numbers<[1], [0], [0], [1], [0, 0, 1, 1], [], []>} : vector<16x32xf32>, vector<32x8xf32>, vector<16x8xf32> -> vector<16x8xf32>
    %cst_83 = arith.constant dense<0.000000e+00> : vector<16x8xf32>
    %145 = tpu.matmul %143, %139, %cst_83 {dimension_numbers = #tpu.dot_dimension_numbers<[1], [0], [0], [1], [0, 0, 1, 1], [], []>} : vector<16x32xf32>, vector<32x8xf32>, vector<16x8xf32> -> vector<16x8xf32>
    %146 = arith.addf %144, %145 : vector<16x8xf32>
    %147 = vector.broadcast %140 : vector<1x8xf32> to vector<16x8xf32>
    %148 = arith.addf %146, %147 : vector<16x8xf32>
    %149 = arith.mulf %148, %148 : vector<16x8xf32>
    %cst_84 = arith.constant dense<0.000000e+00> : vector<16xf32>
    %150 = vector.multi_reduction <add>, %149, %cst_84 [1] : vector<16x8xf32> to vector<16xf32>
    %151 = vector.shape_cast %150 : vector<16xf32> to vector<16x1xf32>
    %cst_85 = arith.constant 1.000000e-24 : f32
    %152 = vector.broadcast %cst_85 : f32 to vector<16x1xf32>
    %153 = arith.maximumf %151, %152 : vector<16x1xf32>
    %154 = math.rsqrt %153 : vector<16x1xf32>
    %155 = vector.broadcast %154 : vector<16x1xf32> to vector<16x8xf32>
    %156 = arith.mulf %148, %155 : vector<16x8xf32>
    %cst_86 = arith.constant 0.000000e+00 : f32
    %157 = vector.broadcast %cst_86 : f32 to vector<16x8xf32>
    %158 = arith.maximumf %156, %157 : vector<16x8xf32>
    %159 = arith.mulf %158, %2 : vector<16x8xf32>
    %cst_87 = arith.constant dense<0xFF800000> : vector<16xf32>
    %160 = vector.multi_reduction <maximumf>, %159, %cst_87 [1] : vector<16x8xf32> to vector<16xf32>
    %161 = vector.shape_cast %160 : vector<16xf32> to vector<16x1xf32>
    %162 = vector.broadcast %161 : vector<16x1xf32> to vector<16x8xf32>
    %163 = arith.subf %159, %162 : vector<16x8xf32>
    %164 = math.exp %163 : vector<16x8xf32>
    %cst_88 = arith.constant dense<0.000000e+00> : vector<16xf32>
    %165 = vector.multi_reduction <add>, %164, %cst_88 [1] : vector<16x8xf32> to vector<16xf32>
    %166 = vector.shape_cast %165 : vector<16xf32> to vector<16x1xf32>
    %167 = vector.broadcast %166 : vector<16x1xf32> to vector<16x8xf32>
    %168 = arith.divf %164, %167 : vector<16x8xf32>
    %169 = arith.mulf %168, %2 : vector<16x8xf32>
    %cst_89 = arith.constant dense<0.000000e+00> : vector<16xf32>
    %170 = vector.multi_reduction <add>, %169, %cst_89 [1] : vector<16x8xf32> to vector<16xf32>
    %171 = vector.shape_cast %170 : vector<16xf32> to vector<16x1xf32>
    %cst_90 = arith.constant 9.99999982E-14 : f32
    %172 = vector.broadcast %cst_90 : f32 to vector<16x1xf32>
    %173 = arith.addf %171, %172 : vector<16x1xf32>
    %174 = vector.broadcast %173 : vector<16x1xf32> to vector<16x8xf32>
    %175 = arith.divf %169, %174 : vector<16x8xf32>
    %cst_91 = arith.constant dense<0.000000e+00> : vector<8x32xf32>
    %176 = tpu.matmul %175, %137, %cst_91 {dimension_numbers = #tpu.dot_dimension_numbers<[0], [0], [1], [1], [0, 1, 1, 1], [], []>} : vector<16x8xf32>, vector<16x32xf32>, vector<8x32xf32> -> vector<8x32xf32>
    %cst_92 = arith.constant 5.000000e-01 : f32
    %177 = vector.broadcast %cst_92 : f32 to vector<8x32xf32>
    %178 = arith.mulf %176, %177 : vector<8x32xf32>
    %cst_93 = arith.constant dense<0.000000e+00> : vector<16x8xf32>
    %179 = tpu.matmul %0, %175, %cst_93 {dimension_numbers = #tpu.dot_dimension_numbers<[1], [0], [0], [1], [0, 0, 1, 1], [], []>} : vector<16x16xf32>, vector<16x8xf32>, vector<16x8xf32> -> vector<16x8xf32>
    %cst_94 = arith.constant dense<0.000000e+00> : vector<8x8xf32>
    %180 = tpu.matmul %175, %179, %cst_94 {dimension_numbers = #tpu.dot_dimension_numbers<[0], [0], [1], [1], [0, 1, 1, 1], [], []>} : vector<16x8xf32>, vector<16x8xf32>, vector<8x8xf32> -> vector<8x8xf32>
    %c0_95 = arith.constant 0 : index
    %c0_96 = arith.constant 0 : index
    %181 = vector.load %arg23[%c0_95, %c0_96] : memref<32x32xf32, #tpu.memory_space<vmem>>, vector<32x32xf32>
    %c0_97 = arith.constant 0 : index
    %c0_98 = arith.constant 0 : index
    %182 = vector.load %arg24[%c0_97, %c0_98] : memref<1x32xf32, #tpu.memory_space<vmem>>, vector<1x32xf32>
    %cst_99 = arith.constant dense<0.000000e+00> : vector<8x32xf32>
    %183 = tpu.matmul %180, %178, %cst_99 {dimension_numbers = #tpu.dot_dimension_numbers<[1], [0], [0], [1], [0, 0, 1, 1], [], []>} : vector<8x8xf32>, vector<8x32xf32>, vector<8x32xf32> -> vector<8x32xf32>
    %cst_100 = arith.constant dense<0.000000e+00> : vector<8x32xf32>
    %184 = tpu.matmul %183, %181, %cst_100 {dimension_numbers = #tpu.dot_dimension_numbers<[1], [0], [0], [1], [0, 0, 1, 1], [], []>} : vector<8x32xf32>, vector<32x32xf32>, vector<8x32xf32> -> vector<8x32xf32>
    %185 = vector.broadcast %182 : vector<1x32xf32> to vector<8x32xf32>
    %186 = arith.addf %184, %185 : vector<8x32xf32>
    %187 = arith.mulf %186, %186 : vector<8x32xf32>
    %cst_101 = arith.constant dense<0.000000e+00> : vector<8xf32>
    %188 = vector.multi_reduction <add>, %187, %cst_101 [1] : vector<8x32xf32> to vector<8xf32>
    %189 = vector.shape_cast %188 : vector<8xf32> to vector<8x1xf32>
    %cst_102 = arith.constant 1.000000e-24 : f32
    %190 = vector.broadcast %cst_102 : f32 to vector<8x1xf32>
    %191 = arith.maximumf %189, %190 : vector<8x1xf32>
    %192 = math.rsqrt %191 : vector<8x1xf32>
    %193 = vector.broadcast %192 : vector<8x1xf32> to vector<8x32xf32>
    %194 = arith.mulf %186, %193 : vector<8x32xf32>
    %cst_103 = arith.constant 0.000000e+00 : f32
    %195 = vector.broadcast %cst_103 : f32 to vector<8x32xf32>
    %196 = arith.maximumf %194, %195 : vector<8x32xf32>
    %197 = arith.addf %178, %196 : vector<8x32xf32>
    %cst_104 = arith.constant dense<0.000000e+00> : vector<8x32xf32>
    %198 = tpu.matmul %4, %197, %cst_104 {dimension_numbers = #tpu.dot_dimension_numbers<[1], [0], [0], [1], [0, 0, 1, 1], [], []>} : vector<8x8xf32>, vector<8x32xf32>, vector<8x32xf32> -> vector<8x32xf32>
    %cst_105 = arith.constant dense<0.000000e+00> : vector<8xf32>
    %199 = vector.multi_reduction <add>, %198, %cst_105 [1] : vector<8x32xf32> to vector<8xf32>
    %200 = vector.shape_cast %199 : vector<8xf32> to vector<8x1xf32>
    %cst_106 = arith.constant 1.562500e-02 : f32
    %201 = vector.broadcast %cst_106 : f32 to vector<8x1xf32>
    %202 = arith.mulf %200, %201 : vector<8x1xf32>
    %203 = vector.broadcast %202 : vector<8x1xf32> to vector<8x32xf32>
    %204 = arith.subf %197, %203 : vector<8x32xf32>
    %205 = arith.mulf %204, %204 : vector<8x32xf32>
    %cst_107 = arith.constant dense<0.000000e+00> : vector<8x32xf32>
    %206 = tpu.matmul %4, %205, %cst_107 {dimension_numbers = #tpu.dot_dimension_numbers<[1], [0], [0], [1], [0, 0, 1, 1], [], []>} : vector<8x8xf32>, vector<8x32xf32>, vector<8x32xf32> -> vector<8x32xf32>
    %cst_108 = arith.constant dense<0.000000e+00> : vector<8xf32>
    %207 = vector.multi_reduction <add>, %206, %cst_108 [1] : vector<8x32xf32> to vector<8xf32>
    %208 = vector.shape_cast %207 : vector<8xf32> to vector<8x1xf32>
    %cst_109 = arith.constant 1.562500e-02 : f32
    %209 = vector.broadcast %cst_109 : f32 to vector<8x1xf32>
    %210 = arith.mulf %208, %209 : vector<8x1xf32>
    %cst_110 = arith.constant 9.99999974E-6 : f32
    %211 = vector.broadcast %cst_110 : f32 to vector<8x1xf32>
    %212 = arith.addf %210, %211 : vector<8x1xf32>
    %213 = math.rsqrt %212 : vector<8x1xf32>
    %214 = vector.broadcast %213 : vector<8x1xf32> to vector<8x32xf32>
    %215 = arith.mulf %204, %214 : vector<8x32xf32>
    %c0_111 = arith.constant 0 : index
    %c0_112 = arith.constant 0 : index
    %216 = vector.load %arg25[%c0_111, %c0_112] : memref<32x32xf32, #tpu.memory_space<vmem>>, vector<32x32xf32>
    %c0_113 = arith.constant 0 : index
    %c0_114 = arith.constant 0 : index
    %217 = vector.load %arg26[%c0_113, %c0_114] : memref<1x32xf32, #tpu.memory_space<vmem>>, vector<1x32xf32>
    %cst_115 = arith.constant dense<0.000000e+00> : vector<8x32xf32>
    %218 = tpu.matmul %180, %215, %cst_115 {dimension_numbers = #tpu.dot_dimension_numbers<[1], [0], [0], [1], [0, 0, 1, 1], [], []>} : vector<8x8xf32>, vector<8x32xf32>, vector<8x32xf32> -> vector<8x32xf32>
    %cst_116 = arith.constant dense<0.000000e+00> : vector<8x32xf32>
    %219 = tpu.matmul %218, %216, %cst_116 {dimension_numbers = #tpu.dot_dimension_numbers<[1], [0], [0], [1], [0, 0, 1, 1], [], []>} : vector<8x32xf32>, vector<32x32xf32>, vector<8x32xf32> -> vector<8x32xf32>
    %220 = vector.broadcast %217 : vector<1x32xf32> to vector<8x32xf32>
    %221 = arith.addf %219, %220 : vector<8x32xf32>
    %222 = arith.mulf %221, %221 : vector<8x32xf32>
    %cst_117 = arith.constant dense<0.000000e+00> : vector<8xf32>
    %223 = vector.multi_reduction <add>, %222, %cst_117 [1] : vector<8x32xf32> to vector<8xf32>
    %224 = vector.shape_cast %223 : vector<8xf32> to vector<8x1xf32>
    %cst_118 = arith.constant 1.000000e-24 : f32
    %225 = vector.broadcast %cst_118 : f32 to vector<8x1xf32>
    %226 = arith.maximumf %224, %225 : vector<8x1xf32>
    %227 = math.rsqrt %226 : vector<8x1xf32>
    %228 = vector.broadcast %227 : vector<8x1xf32> to vector<8x32xf32>
    %229 = arith.mulf %221, %228 : vector<8x32xf32>
    %cst_119 = arith.constant 0.000000e+00 : f32
    %230 = vector.broadcast %cst_119 : f32 to vector<8x32xf32>
    %231 = arith.maximumf %229, %230 : vector<8x32xf32>
    %232 = arith.addf %215, %231 : vector<8x32xf32>
    %cst_120 = arith.constant dense<0.000000e+00> : vector<8x32xf32>
    %233 = tpu.matmul %4, %232, %cst_120 {dimension_numbers = #tpu.dot_dimension_numbers<[1], [0], [0], [1], [0, 0, 1, 1], [], []>} : vector<8x8xf32>, vector<8x32xf32>, vector<8x32xf32> -> vector<8x32xf32>
    %cst_121 = arith.constant dense<0.000000e+00> : vector<8xf32>
    %234 = vector.multi_reduction <add>, %233, %cst_121 [1] : vector<8x32xf32> to vector<8xf32>
    %235 = vector.shape_cast %234 : vector<8xf32> to vector<8x1xf32>
    %cst_122 = arith.constant 1.562500e-02 : f32
    %236 = vector.broadcast %cst_122 : f32 to vector<8x1xf32>
    %237 = arith.mulf %235, %236 : vector<8x1xf32>
    %238 = vector.broadcast %237 : vector<8x1xf32> to vector<8x32xf32>
    %239 = arith.subf %232, %238 : vector<8x32xf32>
    %240 = arith.mulf %239, %239 : vector<8x32xf32>
    %cst_123 = arith.constant dense<0.000000e+00> : vector<8x32xf32>
    %241 = tpu.matmul %4, %240, %cst_123 {dimension_numbers = #tpu.dot_dimension_numbers<[1], [0], [0], [1], [0, 0, 1, 1], [], []>} : vector<8x8xf32>, vector<8x32xf32>, vector<8x32xf32> -> vector<8x32xf32>
    %cst_124 = arith.constant dense<0.000000e+00> : vector<8xf32>
    %242 = vector.multi_reduction <add>, %241, %cst_124 [1] : vector<8x32xf32> to vector<8xf32>
    %243 = vector.shape_cast %242 : vector<8xf32> to vector<8x1xf32>
    %cst_125 = arith.constant 1.562500e-02 : f32
    %244 = vector.broadcast %cst_125 : f32 to vector<8x1xf32>
    %245 = arith.mulf %243, %244 : vector<8x1xf32>
    %cst_126 = arith.constant 9.99999974E-6 : f32
    %246 = vector.broadcast %cst_126 : f32 to vector<8x1xf32>
    %247 = arith.addf %245, %246 : vector<8x1xf32>
    %248 = math.rsqrt %247 : vector<8x1xf32>
    %249 = vector.broadcast %248 : vector<8x1xf32> to vector<8x32xf32>
    %250 = arith.mulf %239, %249 : vector<8x32xf32>
    %c0_127 = arith.constant 0 : index
    %c0_128 = arith.constant 0 : index
    %251 = vector.load %arg27[%c0_127, %c0_128] : memref<32x32xf32, #tpu.memory_space<vmem>>, vector<32x32xf32>
    %c0_129 = arith.constant 0 : index
    %c0_130 = arith.constant 0 : index
    %252 = vector.load %arg28[%c0_129, %c0_130] : memref<1x32xf32, #tpu.memory_space<vmem>>, vector<1x32xf32>
    %cst_131 = arith.constant dense<0.000000e+00> : vector<8x32xf32>
    %253 = tpu.matmul %180, %250, %cst_131 {dimension_numbers = #tpu.dot_dimension_numbers<[1], [0], [0], [1], [0, 0, 1, 1], [], []>} : vector<8x8xf32>, vector<8x32xf32>, vector<8x32xf32> -> vector<8x32xf32>
    %cst_132 = arith.constant dense<0.000000e+00> : vector<8x32xf32>
    %254 = tpu.matmul %253, %251, %cst_132 {dimension_numbers = #tpu.dot_dimension_numbers<[1], [0], [0], [1], [0, 0, 1, 1], [], []>} : vector<8x32xf32>, vector<32x32xf32>, vector<8x32xf32> -> vector<8x32xf32>
    %255 = vector.broadcast %252 : vector<1x32xf32> to vector<8x32xf32>
    %256 = arith.addf %254, %255 : vector<8x32xf32>
    %257 = arith.mulf %256, %256 : vector<8x32xf32>
    %cst_133 = arith.constant dense<0.000000e+00> : vector<8xf32>
    %258 = vector.multi_reduction <add>, %257, %cst_133 [1] : vector<8x32xf32> to vector<8xf32>
    %259 = vector.shape_cast %258 : vector<8xf32> to vector<8x1xf32>
    %cst_134 = arith.constant 1.000000e-24 : f32
    %260 = vector.broadcast %cst_134 : f32 to vector<8x1xf32>
    %261 = arith.maximumf %259, %260 : vector<8x1xf32>
    %262 = math.rsqrt %261 : vector<8x1xf32>
    %263 = vector.broadcast %262 : vector<8x1xf32> to vector<8x32xf32>
    %264 = arith.mulf %256, %263 : vector<8x32xf32>
    %cst_135 = arith.constant 0.000000e+00 : f32
    %265 = vector.broadcast %cst_135 : f32 to vector<8x32xf32>
    %266 = arith.maximumf %264, %265 : vector<8x32xf32>
    %267 = arith.addf %250, %266 : vector<8x32xf32>
    %cst_136 = arith.constant dense<0.000000e+00> : vector<8x32xf32>
    %268 = tpu.matmul %4, %267, %cst_136 {dimension_numbers = #tpu.dot_dimension_numbers<[1], [0], [0], [1], [0, 0, 1, 1], [], []>} : vector<8x8xf32>, vector<8x32xf32>, vector<8x32xf32> -> vector<8x32xf32>
    %cst_137 = arith.constant dense<0.000000e+00> : vector<8xf32>
    %269 = vector.multi_reduction <add>, %268, %cst_137 [1] : vector<8x32xf32> to vector<8xf32>
    %270 = vector.shape_cast %269 : vector<8xf32> to vector<8x1xf32>
    %cst_138 = arith.constant 1.562500e-02 : f32
    %271 = vector.broadcast %cst_138 : f32 to vector<8x1xf32>
    %272 = arith.mulf %270, %271 : vector<8x1xf32>
    %273 = vector.broadcast %272 : vector<8x1xf32> to vector<8x32xf32>
    %274 = arith.subf %267, %273 : vector<8x32xf32>
    %275 = arith.mulf %274, %274 : vector<8x32xf32>
    %cst_139 = arith.constant dense<0.000000e+00> : vector<8x32xf32>
    %276 = tpu.matmul %4, %275, %cst_139 {dimension_numbers = #tpu.dot_dimension_numbers<[1], [0], [0], [1], [0, 0, 1, 1], [], []>} : vector<8x8xf32>, vector<8x32xf32>, vector<8x32xf32> -> vector<8x32xf32>
    %cst_140 = arith.constant dense<0.000000e+00> : vector<8xf32>
    %277 = vector.multi_reduction <add>, %276, %cst_140 [1] : vector<8x32xf32> to vector<8xf32>
    %278 = vector.shape_cast %277 : vector<8xf32> to vector<8x1xf32>
    %cst_141 = arith.constant 1.562500e-02 : f32
    %279 = vector.broadcast %cst_141 : f32 to vector<8x1xf32>
    %280 = arith.mulf %278, %279 : vector<8x1xf32>
    %cst_142 = arith.constant 9.99999974E-6 : f32
    %281 = vector.broadcast %cst_142 : f32 to vector<8x1xf32>
    %282 = arith.addf %280, %281 : vector<8x1xf32>
    %283 = math.rsqrt %282 : vector<8x1xf32>
    %284 = vector.broadcast %283 : vector<8x1xf32> to vector<8x32xf32>
    %285 = arith.mulf %274, %284 : vector<8x32xf32>
    %c0_143 = arith.constant 0 : index
    %c0_144 = arith.constant 0 : index
    %286 = vector.load %arg29[%c0_143, %c0_144] : memref<32x32xf32, #tpu.memory_space<vmem>>, vector<32x32xf32>
    %c0_145 = arith.constant 0 : index
    %c0_146 = arith.constant 0 : index
    %287 = vector.load %arg30[%c0_145, %c0_146] : memref<1x32xf32, #tpu.memory_space<vmem>>, vector<1x32xf32>
    %cst_147 = arith.constant dense<0.000000e+00> : vector<8x32xf32>
    %288 = tpu.matmul %180, %285, %cst_147 {dimension_numbers = #tpu.dot_dimension_numbers<[1], [0], [0], [1], [0, 0, 1, 1], [], []>} : vector<8x8xf32>, vector<8x32xf32>, vector<8x32xf32> -> vector<8x32xf32>
    %cst_148 = arith.constant dense<0.000000e+00> : vector<8x32xf32>
    %289 = tpu.matmul %288, %286, %cst_148 {dimension_numbers = #tpu.dot_dimension_numbers<[1], [0], [0], [1], [0, 0, 1, 1], [], []>} : vector<8x32xf32>, vector<32x32xf32>, vector<8x32xf32> -> vector<8x32xf32>
    %290 = vector.broadcast %287 : vector<1x32xf32> to vector<8x32xf32>
    %291 = arith.addf %289, %290 : vector<8x32xf32>
    %292 = arith.mulf %291, %291 : vector<8x32xf32>
    %cst_149 = arith.constant dense<0.000000e+00> : vector<8xf32>
    %293 = vector.multi_reduction <add>, %292, %cst_149 [1] : vector<8x32xf32> to vector<8xf32>
    %294 = vector.shape_cast %293 : vector<8xf32> to vector<8x1xf32>
    %cst_150 = arith.constant 1.000000e-24 : f32
    %295 = vector.broadcast %cst_150 : f32 to vector<8x1xf32>
    %296 = arith.maximumf %294, %295 : vector<8x1xf32>
    %297 = math.rsqrt %296 : vector<8x1xf32>
    %298 = vector.broadcast %297 : vector<8x1xf32> to vector<8x32xf32>
    %299 = arith.mulf %291, %298 : vector<8x32xf32>
    %cst_151 = arith.constant 0.000000e+00 : f32
    %300 = vector.broadcast %cst_151 : f32 to vector<8x32xf32>
    %301 = arith.maximumf %299, %300 : vector<8x32xf32>
    %cst_152 = arith.constant dense<0.000000e+00> : vector<8x32xf32>
    %302 = tpu.matmul %4, %301, %cst_152 {dimension_numbers = #tpu.dot_dimension_numbers<[1], [0], [0], [1], [0, 0, 1, 1], [], []>} : vector<8x8xf32>, vector<8x32xf32>, vector<8x32xf32> -> vector<8x32xf32>
    %cst_153 = arith.constant dense<0.000000e+00> : vector<8xf32>
    %303 = vector.multi_reduction <add>, %302, %cst_153 [1] : vector<8x32xf32> to vector<8xf32>
    %304 = vector.shape_cast %303 : vector<8xf32> to vector<8x1xf32>
    %cst_154 = arith.constant 1.562500e-02 : f32
    %305 = vector.broadcast %cst_154 : f32 to vector<8x1xf32>
    %306 = arith.mulf %304, %305 : vector<8x1xf32>
    %307 = vector.broadcast %306 : vector<8x1xf32> to vector<8x32xf32>
    %308 = arith.subf %301, %307 : vector<8x32xf32>
    %309 = arith.mulf %308, %308 : vector<8x32xf32>
    %cst_155 = arith.constant dense<0.000000e+00> : vector<8x32xf32>
    %310 = tpu.matmul %4, %309, %cst_155 {dimension_numbers = #tpu.dot_dimension_numbers<[1], [0], [0], [1], [0, 0, 1, 1], [], []>} : vector<8x8xf32>, vector<8x32xf32>, vector<8x32xf32> -> vector<8x32xf32>
    %cst_156 = arith.constant dense<0.000000e+00> : vector<8xf32>
    %311 = vector.multi_reduction <add>, %310, %cst_156 [1] : vector<8x32xf32> to vector<8xf32>
    %312 = vector.shape_cast %311 : vector<8xf32> to vector<8x1xf32>
    %cst_157 = arith.constant 1.562500e-02 : f32
    %313 = vector.broadcast %cst_157 : f32 to vector<8x1xf32>
    %314 = arith.mulf %312, %313 : vector<8x1xf32>
    %cst_158 = arith.constant 9.99999974E-6 : f32
    %315 = vector.broadcast %cst_158 : f32 to vector<8x1xf32>
    %316 = arith.addf %314, %315 : vector<8x1xf32>
    %317 = math.rsqrt %316 : vector<8x1xf32>
    %318 = vector.broadcast %317 : vector<8x1xf32> to vector<8x32xf32>
    %319 = arith.mulf %308, %318 : vector<8x32xf32>
    %c0_159 = arith.constant 0 : index
    %c0_160 = arith.constant 0 : index
    %320 = vector.load %arg31[%c0_159, %c0_160] : memref<32x4xf32, #tpu.memory_space<vmem>>, vector<32x4xf32>
    %c0_161 = arith.constant 0 : index
    %c0_162 = arith.constant 0 : index
    %321 = vector.load %arg32[%c0_161, %c0_162] : memref<1x4xf32, #tpu.memory_space<vmem>>, vector<1x4xf32>
    %cst_163 = arith.constant dense<0.000000e+00> : vector<8x32xf32>
    %322 = tpu.matmul %180, %285, %cst_163 {dimension_numbers = #tpu.dot_dimension_numbers<[1], [0], [0], [1], [0, 0, 1, 1], [], []>} : vector<8x8xf32>, vector<8x32xf32>, vector<8x32xf32> -> vector<8x32xf32>
    %cst_164 = arith.constant dense<0.000000e+00> : vector<8x4xf32>
    %323 = tpu.matmul %322, %320, %cst_164 {dimension_numbers = #tpu.dot_dimension_numbers<[1], [0], [0], [1], [0, 0, 1, 1], [], []>} : vector<8x32xf32>, vector<32x4xf32>, vector<8x4xf32> -> vector<8x4xf32>
    %324 = vector.broadcast %321 : vector<1x4xf32> to vector<8x4xf32>
    %325 = arith.addf %323, %324 : vector<8x4xf32>
    %326 = arith.mulf %325, %325 : vector<8x4xf32>
    %cst_165 = arith.constant dense<0.000000e+00> : vector<8xf32>
    %327 = vector.multi_reduction <add>, %326, %cst_165 [1] : vector<8x4xf32> to vector<8xf32>
    %328 = vector.shape_cast %327 : vector<8xf32> to vector<8x1xf32>
    %cst_166 = arith.constant 1.000000e-24 : f32
    %329 = vector.broadcast %cst_166 : f32 to vector<8x1xf32>
    %330 = arith.maximumf %328, %329 : vector<8x1xf32>
    %331 = math.rsqrt %330 : vector<8x1xf32>
    %332 = vector.broadcast %331 : vector<8x1xf32> to vector<8x4xf32>
    %333 = arith.mulf %325, %332 : vector<8x4xf32>
    %cst_167 = arith.constant 0.000000e+00 : f32
    %334 = vector.broadcast %cst_167 : f32 to vector<8x4xf32>
    %335 = arith.maximumf %333, %334 : vector<8x4xf32>
    %cst_168 = arith.constant dense<0.000000e+00> : vector<8x4xf32>
    %336 = tpu.matmul %4, %335, %cst_168 {dimension_numbers = #tpu.dot_dimension_numbers<[1], [0], [0], [1], [0, 0, 1, 1], [], []>} : vector<8x8xf32>, vector<8x4xf32>, vector<8x4xf32> -> vector<8x4xf32>
    %cst_169 = arith.constant dense<0.000000e+00> : vector<8xf32>
    %337 = vector.multi_reduction <add>, %336, %cst_169 [1] : vector<8x4xf32> to vector<8xf32>
    %338 = vector.shape_cast %337 : vector<8xf32> to vector<8x1xf32>
    %cst_170 = arith.constant 1.250000e-01 : f32
    %339 = vector.broadcast %cst_170 : f32 to vector<8x1xf32>
    %340 = arith.mulf %338, %339 : vector<8x1xf32>
    %341 = vector.broadcast %340 : vector<8x1xf32> to vector<8x4xf32>
    %342 = arith.subf %335, %341 : vector<8x4xf32>
    %343 = arith.mulf %342, %342 : vector<8x4xf32>
    %cst_171 = arith.constant dense<0.000000e+00> : vector<8x4xf32>
    %344 = tpu.matmul %4, %343, %cst_171 {dimension_numbers = #tpu.dot_dimension_numbers<[1], [0], [0], [1], [0, 0, 1, 1], [], []>} : vector<8x8xf32>, vector<8x4xf32>, vector<8x4xf32> -> vector<8x4xf32>
    %cst_172 = arith.constant dense<0.000000e+00> : vector<8xf32>
    %345 = vector.multi_reduction <add>, %344, %cst_172 [1] : vector<8x4xf32> to vector<8xf32>
    %346 = vector.shape_cast %345 : vector<8xf32> to vector<8x1xf32>
    %cst_173 = arith.constant 1.250000e-01 : f32
    %347 = vector.broadcast %cst_173 : f32 to vector<8x1xf32>
    %348 = arith.mulf %346, %347 : vector<8x1xf32>
    %cst_174 = arith.constant 9.99999974E-6 : f32
    %349 = vector.broadcast %cst_174 : f32 to vector<8x1xf32>
    %350 = arith.addf %348, %349 : vector<8x1xf32>
    %351 = math.rsqrt %350 : vector<8x1xf32>
    %352 = vector.broadcast %351 : vector<8x1xf32> to vector<8x4xf32>
    %353 = arith.mulf %342, %352 : vector<8x4xf32>
    %cst_175 = arith.constant dense<0xFF800000> : vector<8xf32>
    %354 = vector.multi_reduction <maximumf>, %353, %cst_175 [1] : vector<8x4xf32> to vector<8xf32>
    %355 = vector.shape_cast %354 : vector<8xf32> to vector<8x1xf32>
    %356 = vector.broadcast %355 : vector<8x1xf32> to vector<8x4xf32>
    %357 = arith.subf %353, %356 : vector<8x4xf32>
    %358 = math.exp %357 : vector<8x4xf32>
    %cst_176 = arith.constant dense<0.000000e+00> : vector<8xf32>
    %359 = vector.multi_reduction <add>, %358, %cst_176 [1] : vector<8x4xf32> to vector<8xf32>
    %360 = vector.shape_cast %359 : vector<8xf32> to vector<8x1xf32>
    %361 = vector.broadcast %360 : vector<8x1xf32> to vector<8x4xf32>
    %362 = arith.divf %358, %361 : vector<8x4xf32>
    %363 = tpu.concatenate %362, %362 in 1 : vector<8x4xf32>, vector<8x4xf32> -> vector<8x8xf32>
    %364 = arith.mulf %363, %3 : vector<8x8xf32>
    %cst_177 = arith.constant dense<0.000000e+00> : vector<8x32xf32>
    %365 = tpu.matmul %364, %319, %cst_177 {dimension_numbers = #tpu.dot_dimension_numbers<[0], [0], [1], [1], [0, 1, 1, 1], [], []>} : vector<8x8xf32>, vector<8x32xf32>, vector<8x32xf32> -> vector<8x32xf32>
    %cst_178 = arith.constant dense<0.000000e+00> : vector<8x8xf32>
    %366 = tpu.matmul %180, %364, %cst_178 {dimension_numbers = #tpu.dot_dimension_numbers<[1], [0], [0], [1], [0, 0, 1, 1], [], []>} : vector<8x8xf32>, vector<8x8xf32>, vector<8x8xf32> -> vector<8x8xf32>
    %cst_179 = arith.constant dense<0.000000e+00> : vector<8x8xf32>
    %367 = tpu.matmul %364, %366, %cst_179 {dimension_numbers = #tpu.dot_dimension_numbers<[0], [0], [1], [1], [0, 1, 1, 1], [], []>} : vector<8x8xf32>, vector<8x8xf32>, vector<8x8xf32> -> vector<8x8xf32>
    %c0_180 = arith.constant 0 : index
    %c0_181 = arith.constant 0 : index
    %368 = vector.load %arg33[%c0_180, %c0_181] : memref<32x32xf32, #tpu.memory_space<vmem>>, vector<32x32xf32>
    %c0_182 = arith.constant 0 : index
    %c0_183 = arith.constant 0 : index
    %369 = vector.load %arg34[%c0_182, %c0_183] : memref<1x32xf32, #tpu.memory_space<vmem>>, vector<1x32xf32>
    %cst_184 = arith.constant dense<0.000000e+00> : vector<8x32xf32>
    %370 = tpu.matmul %367, %365, %cst_184 {dimension_numbers = #tpu.dot_dimension_numbers<[1], [0], [0], [1], [0, 0, 1, 1], [], []>} : vector<8x8xf32>, vector<8x32xf32>, vector<8x32xf32> -> vector<8x32xf32>
    %cst_185 = arith.constant dense<0.000000e+00> : vector<8x32xf32>
    %371 = tpu.matmul %370, %368, %cst_185 {dimension_numbers = #tpu.dot_dimension_numbers<[1], [0], [0], [1], [0, 0, 1, 1], [], []>} : vector<8x32xf32>, vector<32x32xf32>, vector<8x32xf32> -> vector<8x32xf32>
    %372 = vector.broadcast %369 : vector<1x32xf32> to vector<8x32xf32>
    %373 = arith.addf %371, %372 : vector<8x32xf32>
    %374 = arith.mulf %373, %373 : vector<8x32xf32>
    %cst_186 = arith.constant dense<0.000000e+00> : vector<8xf32>
    %375 = vector.multi_reduction <add>, %374, %cst_186 [1] : vector<8x32xf32> to vector<8xf32>
    %376 = vector.shape_cast %375 : vector<8xf32> to vector<8x1xf32>
    %cst_187 = arith.constant 1.000000e-24 : f32
    %377 = vector.broadcast %cst_187 : f32 to vector<8x1xf32>
    %378 = arith.maximumf %376, %377 : vector<8x1xf32>
    %379 = math.rsqrt %378 : vector<8x1xf32>
    %380 = vector.broadcast %379 : vector<8x1xf32> to vector<8x32xf32>
    %381 = arith.mulf %373, %380 : vector<8x32xf32>
    %cst_188 = arith.constant 0.000000e+00 : f32
    %382 = vector.broadcast %cst_188 : f32 to vector<8x32xf32>
    %383 = arith.maximumf %381, %382 : vector<8x32xf32>
    %384 = arith.addf %365, %383 : vector<8x32xf32>
    %cst_189 = arith.constant dense<0.000000e+00> : vector<8x32xf32>
    %385 = tpu.matmul %4, %384, %cst_189 {dimension_numbers = #tpu.dot_dimension_numbers<[1], [0], [0], [1], [0, 0, 1, 1], [], []>} : vector<8x8xf32>, vector<8x32xf32>, vector<8x32xf32> -> vector<8x32xf32>
    %cst_190 = arith.constant dense<0.000000e+00> : vector<8xf32>
    %386 = vector.multi_reduction <add>, %385, %cst_190 [1] : vector<8x32xf32> to vector<8xf32>
    %387 = vector.shape_cast %386 : vector<8xf32> to vector<8x1xf32>
    %cst_191 = arith.constant 1.562500e-02 : f32
    %388 = vector.broadcast %cst_191 : f32 to vector<8x1xf32>
    %389 = arith.mulf %387, %388 : vector<8x1xf32>
    %390 = vector.broadcast %389 : vector<8x1xf32> to vector<8x32xf32>
    %391 = arith.subf %384, %390 : vector<8x32xf32>
    %392 = arith.mulf %391, %391 : vector<8x32xf32>
    %cst_192 = arith.constant dense<0.000000e+00> : vector<8x32xf32>
    %393 = tpu.matmul %4, %392, %cst_192 {dimension_numbers = #tpu.dot_dimension_numbers<[1], [0], [0], [1], [0, 0, 1, 1], [], []>} : vector<8x8xf32>, vector<8x32xf32>, vector<8x32xf32> -> vector<8x32xf32>
    %cst_193 = arith.constant dense<0.000000e+00> : vector<8xf32>
    %394 = vector.multi_reduction <add>, %393, %cst_193 [1] : vector<8x32xf32> to vector<8xf32>
    %395 = vector.shape_cast %394 : vector<8xf32> to vector<8x1xf32>
    %cst_194 = arith.constant 1.562500e-02 : f32
    %396 = vector.broadcast %cst_194 : f32 to vector<8x1xf32>
    %397 = arith.mulf %395, %396 : vector<8x1xf32>
    %cst_195 = arith.constant 9.99999974E-6 : f32
    %398 = vector.broadcast %cst_195 : f32 to vector<8x1xf32>
    %399 = arith.addf %397, %398 : vector<8x1xf32>
    %400 = math.rsqrt %399 : vector<8x1xf32>
    %401 = vector.broadcast %400 : vector<8x1xf32> to vector<8x32xf32>
    %402 = arith.mulf %391, %401 : vector<8x32xf32>
    %c0_196 = arith.constant 0 : index
    %c0_197 = arith.constant 0 : index
    %403 = vector.load %arg35[%c0_196, %c0_197] : memref<32x32xf32, #tpu.memory_space<vmem>>, vector<32x32xf32>
    %c0_198 = arith.constant 0 : index
    %c0_199 = arith.constant 0 : index
    %404 = vector.load %arg36[%c0_198, %c0_199] : memref<1x32xf32, #tpu.memory_space<vmem>>, vector<1x32xf32>
    %cst_200 = arith.constant dense<0.000000e+00> : vector<8x32xf32>
    %405 = tpu.matmul %367, %402, %cst_200 {dimension_numbers = #tpu.dot_dimension_numbers<[1], [0], [0], [1], [0, 0, 1, 1], [], []>} : vector<8x8xf32>, vector<8x32xf32>, vector<8x32xf32> -> vector<8x32xf32>
    %cst_201 = arith.constant dense<0.000000e+00> : vector<8x32xf32>
    %406 = tpu.matmul %405, %403, %cst_201 {dimension_numbers = #tpu.dot_dimension_numbers<[1], [0], [0], [1], [0, 0, 1, 1], [], []>} : vector<8x32xf32>, vector<32x32xf32>, vector<8x32xf32> -> vector<8x32xf32>
    %407 = vector.broadcast %404 : vector<1x32xf32> to vector<8x32xf32>
    %408 = arith.addf %406, %407 : vector<8x32xf32>
    %409 = arith.mulf %408, %408 : vector<8x32xf32>
    %cst_202 = arith.constant dense<0.000000e+00> : vector<8xf32>
    %410 = vector.multi_reduction <add>, %409, %cst_202 [1] : vector<8x32xf32> to vector<8xf32>
    %411 = vector.shape_cast %410 : vector<8xf32> to vector<8x1xf32>
    %cst_203 = arith.constant 1.000000e-24 : f32
    %412 = vector.broadcast %cst_203 : f32 to vector<8x1xf32>
    %413 = arith.maximumf %411, %412 : vector<8x1xf32>
    %414 = math.rsqrt %413 : vector<8x1xf32>
    %415 = vector.broadcast %414 : vector<8x1xf32> to vector<8x32xf32>
    %416 = arith.mulf %408, %415 : vector<8x32xf32>
    %cst_204 = arith.constant 0.000000e+00 : f32
    %417 = vector.broadcast %cst_204 : f32 to vector<8x32xf32>
    %418 = arith.maximumf %416, %417 : vector<8x32xf32>
    %419 = arith.addf %402, %418 : vector<8x32xf32>
    %cst_205 = arith.constant dense<0.000000e+00> : vector<8x32xf32>
    %420 = tpu.matmul %4, %419, %cst_205 {dimension_numbers = #tpu.dot_dimension_numbers<[1], [0], [0], [1], [0, 0, 1, 1], [], []>} : vector<8x8xf32>, vector<8x32xf32>, vector<8x32xf32> -> vector<8x32xf32>
    %cst_206 = arith.constant dense<0.000000e+00> : vector<8xf32>
    %421 = vector.multi_reduction <add>, %420, %cst_206 [1] : vector<8x32xf32> to vector<8xf32>
    %422 = vector.shape_cast %421 : vector<8xf32> to vector<8x1xf32>
    %cst_207 = arith.constant 1.562500e-02 : f32
    %423 = vector.broadcast %cst_207 : f32 to vector<8x1xf32>
    %424 = arith.mulf %422, %423 : vector<8x1xf32>
    %425 = vector.broadcast %424 : vector<8x1xf32> to vector<8x32xf32>
    %426 = arith.subf %419, %425 : vector<8x32xf32>
    %427 = arith.mulf %426, %426 : vector<8x32xf32>
    %cst_208 = arith.constant dense<0.000000e+00> : vector<8x32xf32>
    %428 = tpu.matmul %4, %427, %cst_208 {dimension_numbers = #tpu.dot_dimension_numbers<[1], [0], [0], [1], [0, 0, 1, 1], [], []>} : vector<8x8xf32>, vector<8x32xf32>, vector<8x32xf32> -> vector<8x32xf32>
    %cst_209 = arith.constant dense<0.000000e+00> : vector<8xf32>
    %429 = vector.multi_reduction <add>, %428, %cst_209 [1] : vector<8x32xf32> to vector<8xf32>
    %430 = vector.shape_cast %429 : vector<8xf32> to vector<8x1xf32>
    %cst_210 = arith.constant 1.562500e-02 : f32
    %431 = vector.broadcast %cst_210 : f32 to vector<8x1xf32>
    %432 = arith.mulf %430, %431 : vector<8x1xf32>
    %cst_211 = arith.constant 9.99999974E-6 : f32
    %433 = vector.broadcast %cst_211 : f32 to vector<8x1xf32>
    %434 = arith.addf %432, %433 : vector<8x1xf32>
    %435 = math.rsqrt %434 : vector<8x1xf32>
    %436 = vector.broadcast %435 : vector<8x1xf32> to vector<8x32xf32>
    %437 = arith.mulf %426, %436 : vector<8x32xf32>
    %c0_212 = arith.constant 0 : index
    %c0_213 = arith.constant 0 : index
    %438 = vector.load %arg37[%c0_212, %c0_213] : memref<32x32xf32, #tpu.memory_space<vmem>>, vector<32x32xf32>
    %c0_214 = arith.constant 0 : index
    %c0_215 = arith.constant 0 : index
    %439 = vector.load %arg38[%c0_214, %c0_215] : memref<1x32xf32, #tpu.memory_space<vmem>>, vector<1x32xf32>
    %cst_216 = arith.constant dense<0.000000e+00> : vector<8x32xf32>
    %440 = tpu.matmul %367, %437, %cst_216 {dimension_numbers = #tpu.dot_dimension_numbers<[1], [0], [0], [1], [0, 0, 1, 1], [], []>} : vector<8x8xf32>, vector<8x32xf32>, vector<8x32xf32> -> vector<8x32xf32>
    %cst_217 = arith.constant dense<0.000000e+00> : vector<8x32xf32>
    %441 = tpu.matmul %440, %438, %cst_217 {dimension_numbers = #tpu.dot_dimension_numbers<[1], [0], [0], [1], [0, 0, 1, 1], [], []>} : vector<8x32xf32>, vector<32x32xf32>, vector<8x32xf32> -> vector<8x32xf32>
    %442 = vector.broadcast %439 : vector<1x32xf32> to vector<8x32xf32>
    %443 = arith.addf %441, %442 : vector<8x32xf32>
    %444 = arith.mulf %443, %443 : vector<8x32xf32>
    %cst_218 = arith.constant dense<0.000000e+00> : vector<8xf32>
    %445 = vector.multi_reduction <add>, %444, %cst_218 [1] : vector<8x32xf32> to vector<8xf32>
    %446 = vector.shape_cast %445 : vector<8xf32> to vector<8x1xf32>
    %cst_219 = arith.constant 1.000000e-24 : f32
    %447 = vector.broadcast %cst_219 : f32 to vector<8x1xf32>
    %448 = arith.maximumf %446, %447 : vector<8x1xf32>
    %449 = math.rsqrt %448 : vector<8x1xf32>
    %450 = vector.broadcast %449 : vector<8x1xf32> to vector<8x32xf32>
    %451 = arith.mulf %443, %450 : vector<8x32xf32>
    %cst_220 = arith.constant 0.000000e+00 : f32
    %452 = vector.broadcast %cst_220 : f32 to vector<8x32xf32>
    %453 = arith.maximumf %451, %452 : vector<8x32xf32>
    %454 = arith.addf %437, %453 : vector<8x32xf32>
    %cst_221 = arith.constant dense<0.000000e+00> : vector<8x32xf32>
    %455 = tpu.matmul %4, %454, %cst_221 {dimension_numbers = #tpu.dot_dimension_numbers<[1], [0], [0], [1], [0, 0, 1, 1], [], []>} : vector<8x8xf32>, vector<8x32xf32>, vector<8x32xf32> -> vector<8x32xf32>
    %cst_222 = arith.constant dense<0.000000e+00> : vector<8xf32>
    %456 = vector.multi_reduction <add>, %455, %cst_222 [1] : vector<8x32xf32> to vector<8xf32>
    %457 = vector.shape_cast %456 : vector<8xf32> to vector<8x1xf32>
    %cst_223 = arith.constant 1.562500e-02 : f32
    %458 = vector.broadcast %cst_223 : f32 to vector<8x1xf32>
    %459 = arith.mulf %457, %458 : vector<8x1xf32>
    %460 = vector.broadcast %459 : vector<8x1xf32> to vector<8x32xf32>
    %461 = arith.subf %454, %460 : vector<8x32xf32>
    %462 = arith.mulf %461, %461 : vector<8x32xf32>
    %cst_224 = arith.constant dense<0.000000e+00> : vector<8x32xf32>
    %463 = tpu.matmul %4, %462, %cst_224 {dimension_numbers = #tpu.dot_dimension_numbers<[1], [0], [0], [1], [0, 0, 1, 1], [], []>} : vector<8x8xf32>, vector<8x32xf32>, vector<8x32xf32> -> vector<8x32xf32>
    %cst_225 = arith.constant dense<0.000000e+00> : vector<8xf32>
    %464 = vector.multi_reduction <add>, %463, %cst_225 [1] : vector<8x32xf32> to vector<8xf32>
    %465 = vector.shape_cast %464 : vector<8xf32> to vector<8x1xf32>
    %cst_226 = arith.constant 1.562500e-02 : f32
    %466 = vector.broadcast %cst_226 : f32 to vector<8x1xf32>
    %467 = arith.mulf %465, %466 : vector<8x1xf32>
    %cst_227 = arith.constant 9.99999974E-6 : f32
    %468 = vector.broadcast %cst_227 : f32 to vector<8x1xf32>
    %469 = arith.addf %467, %468 : vector<8x1xf32>
    %470 = math.rsqrt %469 : vector<8x1xf32>
    %471 = vector.broadcast %470 : vector<8x1xf32> to vector<8x32xf32>
    %472 = arith.mulf %461, %471 : vector<8x32xf32>
    %cst_228 = arith.constant dense<0.000000e+00> : vector<2x32xf32>
    %473 = tpu.matmul %5, %472, %cst_228 {dimension_numbers = #tpu.dot_dimension_numbers<[1], [0], [0], [1], [0, 0, 1, 1], [], []>} : vector<2x8xf32>, vector<8x32xf32>, vector<2x32xf32> -> vector<2x32xf32>
    %c0_229 = arith.constant 0 : index
    %c0_230 = arith.constant 0 : index
    %474 = vector.load %arg39[%c0_229, %c0_230] : memref<32x6xf32, #tpu.memory_space<vmem>>, vector<32x6xf32>
    %c0_231 = arith.constant 0 : index
    %c0_232 = arith.constant 0 : index
    %475 = vector.load %arg40[%c0_231, %c0_232] : memref<1x6xf32, #tpu.memory_space<vmem>>, vector<1x6xf32>
    %cst_233 = arith.constant dense<0.000000e+00> : vector<2x6xf32>
    %476 = tpu.matmul %473, %474, %cst_233 {dimension_numbers = #tpu.dot_dimension_numbers<[1], [0], [0], [1], [0, 0, 1, 1], [], []>} : vector<2x32xf32>, vector<32x6xf32>, vector<2x6xf32> -> vector<2x6xf32>
    %477 = vector.broadcast %475 : vector<1x6xf32> to vector<2x6xf32>
    %478 = arith.addf %476, %477 : vector<2x6xf32>
    %c0_234 = arith.constant 0 : index
    %c0_235 = arith.constant 0 : index
    %479 = vector.load %arg41[%c0_234, %c0_235] : memref<2x6xf32, #tpu.memory_space<vmem>>, vector<2x6xf32>
    tpu.vector_store %arg41[%c0_234, %c0_235], %478 {strides = array<i32>} : memref<2x6xf32, #tpu.memory_space<vmem>>, vector<2x6xf32>,
    return
  }
}

</mosaic_0001>

<llo_original>
// kernel: diffpool_forward.1
$region0: #{diffpool_forward.1}
  #allocation0 [shape = 'u32[]', space=smem, size = 0x4, offset = 0x4, fixed_abs, tag = 'smem constant byte address 0x4 - core index']
  #allocation1 [shape = 'u32[72,128]{1,0:T(1,128)}', space=vmem, size = 0x9000, scoped, tag = 'internal scratch']
  %s0 = inlined_call_operand.smem [shape: u32[42], index: -1, kind: input, shape index: {}]
  %s1 = sld [smem:[%s0]]
  %s2 = scalar_lea.smem %s0, 1
  %s3 = sld [smem:[%s2]]
  %s4 = scalar_lea.smem %s0, 2
  %s5 = sld [smem:[%s4]]
  %s6 = scalar_lea.smem %s0, 3
  %s7 = sld [smem:[%s6]]
  %s8 = scalar_lea.smem %s0, 4
  %s9 = sld [smem:[%s8]]
  %s10 = scalar_lea.smem %s0, 5
  %s11 = sld [smem:[%s10]]
  %s12 = scalar_lea.smem %s0, 6
  %s13 = sld [smem:[%s12]]
  %s14 = scalar_lea.smem %s0, 7
  %s15 = sld [smem:[%s14]]
  %s16 = scalar_lea.smem %s0, 8
  %s17 = sld [smem:[%s16]]
  %s18 = scalar_lea.smem %s0, 9
  %s19 = sld [smem:[%s18]]
  %s20 = scalar_lea.smem %s0, 10
  %s21 = sld [smem:[%s20]]
  %s22 = scalar_lea.smem %s0, 11
  %s23 = sld [smem:[%s22]]
  %s24 = scalar_lea.smem %s0, 12
  %s25 = sld [smem:[%s24]]
  %s26 = scalar_lea.smem %s0, 13
  %s27 = sld [smem:[%s26]]
  %s28 = scalar_lea.smem %s0, 14
  %s29 = sld [smem:[%s28]]
  %s30 = scalar_lea.smem %s0, 15
  %s31 = sld [smem:[%s30]]
  %s32 = scalar_lea.smem %s0, 16
  %s33 = sld [smem:[%s32]]
  %s34 = scalar_lea.smem %s0, 17
  %s35 = sld [smem:[%s34]]
  %s36 = scalar_lea.smem %s0, 18
  %s37 = sld [smem:[%s36]]
  %s38 = scalar_lea.smem %s0, 19
  %s39 = sld [smem:[%s38]]
  %s40 = scalar_lea.smem %s0, 20
  %s41 = sld [smem:[%s40]]
  %s42 = scalar_lea.smem %s0, 21
  %s43 = sld [smem:[%s42]]
  %s44 = scalar_lea.smem %s0, 22
  %s45 = sld [smem:[%s44]]
  %s46 = scalar_lea.smem %s0, 23
  %s47 = sld [smem:[%s46]]
  %s48 = scalar_lea.smem %s0, 24
  %s49 = sld [smem:[%s48]]
  %s50 = scalar_lea.smem %s0, 25
  %s51 = sld [smem:[%s50]]
  %s52 = scalar_lea.smem %s0, 26
  %s53 = sld [smem:[%s52]]
  %s54 = scalar_lea.smem %s0, 27
  %s55 = sld [smem:[%s54]]
  %s56 = scalar_lea.smem %s0, 28
  %s57 = sld [smem:[%s56]]
  %s58 = scalar_lea.smem %s0, 29
  %s59 = sld [smem:[%s58]]
  %s60 = scalar_lea.smem %s0, 30
  %s61 = sld [smem:[%s60]]
  %s62 = scalar_lea.smem %s0, 31
  %s63 = sld [smem:[%s62]]
  %s64 = scalar_lea.smem %s0, 32
  %s65 = sld [smem:[%s64]]
  %s66 = scalar_lea.smem %s0, 33
  %s67 = sld [smem:[%s66]]
  %s68 = scalar_lea.smem %s0, 34
  %s69 = sld [smem:[%s68]]
  %s70 = scalar_lea.smem %s0, 35
  %s71 = sld [smem:[%s70]]
  %s72 = scalar_lea.smem %s0, 36
  %s73 = sld [smem:[%s72]]
  %s74 = scalar_lea.smem %s0, 37
  %s75 = sld [smem:[%s74]]
  %s76 = scalar_lea.smem %s0, 38
  %s77 = sld [smem:[%s76]]
  %s78 = scalar_lea.smem %s0, 39
  %s79 = sld [smem:[%s78]]
  %s80 = scalar_lea.smem %s0, 40
  %s81 = sld [smem:[%s80]]
  %s82 = scalar_lea.smem %s0, 41
  %s83 = sld [smem:[%s82]]
  %s84 = sld [smem:[#allocation0]]
  $region278: #{diffpool_forward.1} parent=0
    _
  %s86 = ssub.s32 1, %s84
  %s87 = scalar_select 0, %s86, %s84
  $region1: #{diffpool_forward.1} parent=0
    #allocation2 [shape = 'u8[8192]{0}', space=vmem, size = 0x2000, scoped, tag = 'input window, operand 0, single buffered']
    #allocation3 [shape = 's32[1]{0}', space=sflag, size = 0x4, scoped, tag = 'scoped memory for diffpool_forward.1']
    #allocation4 [shape = 's32[1]{0}', space=sflag, size = 0x4, scoped, tag = 'scoped memory for diffpool_forward.1']
    #allocation5 [shape = 'u8[4096]{0}', space=vmem, size = 0x1000, scoped, tag = 'input window, operand 4, single buffered']
    #allocation6 [shape = 's32[1]{0}', space=sflag, size = 0x4, scoped, tag = 'scoped memory for diffpool_forward.1']
    #allocation7 [shape = 'u8[4096]{0}', space=vmem, size = 0x1000, scoped, tag = 'input window, operand 6, single buffered']
    #allocation8 [shape = 'u8[512]{0}', space=vmem, size = 0x400, scoped, tag = 'input window, operand 7, single buffered']
    #allocation9 [shape = 's32[1]{0}', space=sflag, size = 0x4, scoped, tag = 'scoped memory for diffpool_forward.1']
    #allocation10 [shape = 'u8[512]{0}', space=vmem, size = 0x400, scoped, tag = 'input window, operand 10, single buffered']
    #allocation11 [shape = 'u8[512]{0}', space=vmem, size = 0x400, scoped, tag = 'input window, operand 13, single buffered']
    #allocation12 [shape = 's32[1]{0}', space=sflag, size = 0x4, scoped, tag = 'scoped memory for diffpool_forward.1']
    #allocation13 [shape = 'u8[16384]{0}', space=vmem, size = 0x4000, scoped, tag = 'input window, operand 15, single buffered']
    #allocation14 [shape = 'u8[512]{0}', space=vmem, size = 0x400, scoped, tag = 'input window, operand 16, single buffered']
    #allocation15 [shape = 's32[1]{0}', space=sflag, size = 0x4, scoped, tag = 'scoped memory for diffpool_forward.1']
    #allocation16 [shape = 'u8[16384]{0}', space=vmem, size = 0x4000, scoped, tag = 'input window, operand 17, single buffered']
    #allocation17 [shape = 'u8[16384]{0}', space=vmem, size = 0x4000, scoped, tag = 'input window, operand 18, single buffered']
    #allocation18 [shape = 's32[1]{0}', space=sflag, size = 0x4, scoped, tag = 'scoped memory for diffpool_forward.1']
    #allocation19 [shape = 'u8[512]{0}', space=vmem, size = 0x400, scoped, tag = 'input window, operand 19, single buffered']
    #allocation20 [shape = 'u8[512]{0}', space=vmem, size = 0x400, scoped, tag = 'input window, operand 22, single buffered']
    #allocation21 [shape = 's32[1]{0}', space=sflag, size = 0x4, scoped, tag = 'scoped memory for diffpool_forward.1']
    #allocation22 [shape = 'u8[16384]{0}', space=vmem, size = 0x4000, scoped, tag = 'input window, operand 23, single buffered']
    #allocation23 [shape = 'u8[512]{0}', space=vmem, size = 0x400, scoped, tag = 'input window, operand 24, single buffered']
    #allocation24 [shape = 's32[1]{0}', space=sflag, size = 0x4, scoped, tag = 'scoped memory for diffpool_forward.1']
    #allocation25 [shape = 'u8[16384]{0}', space=vmem, size = 0x4000, scoped, tag = 'input window, operand 25, single buffered']
    #allocation26 [shape = 'u8[512]{0}', space=vmem, size = 0x400, scoped, tag = 'input window, operand 26, single buffered']
    #allocation27 [shape = 's32[1]{0}', space=sflag, size = 0x4, scoped, tag = 'scoped memory for diffpool_forward.1']
    #allocation28 [shape = 'u8[16384]{0}', space=vmem, size = 0x4000, scoped, tag = 'input window, operand 27, single buffered']
    #allocation29 [shape = 'u8[512]{0}', space=vmem, size = 0x400, scoped, tag = 'input window, operand 28, single buffered']
    #allocation30 [shape = 's32[1]{0}', space=sflag, size = 0x4, scoped, tag = 'scoped memory for diffpool_forward.1']
    #allocation31 [shape = 'u8[16384]{0}', space=vmem, size = 0x4000, scoped, tag = 'input window, operand 29, single buffered']
    #allocation32 [shape = 'u8[512]{0}', space=vmem, size = 0x400, scoped, tag = 'input window, operand 30, single buffered']
    #allocation33 [shape = 's32[1]{0}', space=sflag, size = 0x4, scoped, tag = 'scoped memory for diffpool_forward.1']
    #allocation34 [shape = 'u8[512]{0}', space=vmem, size = 0x400, scoped, tag = 'input window, operand 32, single buffered']
    #allocation35 [shape = 'u8[16384]{0}', space=vmem, size = 0x4000, scoped, tag = 'input window, operand 33, single buffered']
    #allocation36 [shape = 's32[1]{0}', space=sflag, size = 0x4, scoped, tag = 'scoped memory for diffpool_forward.1']
    #allocation37 [shape = 'u8[512]{0}', space=vmem, size = 0x400, scoped, tag = 'input window, operand 34, single buffered']
    #allocation38 [shape = 'u8[16384]{0}', space=vmem, size = 0x4000, scoped, tag = 'input window, operand 35, single buffered']
    #allocation39 [shape = 's32[1]{0}', space=sflag, size = 0x4, scoped, tag = 'scoped memory for diffpool_forward.1']
    #allocation40 [shape = 'u8[512]{0}', space=vmem, size = 0x400, scoped, tag = 'input window, operand 36, single buffered']
    #allocation41 [shape = 'u8[512]{0}', space=vmem, size = 0x400, scoped, tag = 'input window, operand 38, single buffered']
    #allocation42 [shape = 's32[1]{0}', space=sflag, size = 0x4, scoped, tag = 'scoped memory for diffpool_forward.1']
    #allocation43 [shape = 'u8[1024]{0}', space=vmem, size = 0x400, scoped, tag = 'output window, operand 0, single buffered']
    %88 = vsyncpa [#allocation3], 0
    %89 = vsyncpa [#allocation6], 0
    %90 = vsyncpa [#allocation9], 0
    %91 = vsyncpa [#allocation12], 0
    %92 = vsyncpa [#allocation15], 0
    %93 = vsyncpa [#allocation18], 0
    %94 = vsyncpa [#allocation21], 0
    %95 = vsyncpa [#allocation24], 0
    %96 = vsyncpa [#allocation27], 0
    %97 = vsyncpa [#allocation30], 0
    %98 = vsyncpa [#allocation33], 0
    %99 = vsyncpa [#allocation36], 0
    %100 = vsyncpa [#allocation39], 0
    %101 = vsyncpa [#allocation42], 0
    %102 = vsyncpa [#allocation4], 0
    // Predicated region
    $region2: #{diffpool_forward.1} parent=1 // pred_check
      _
    $region3: #{diffpool_forward.1} parent=1 // pred_check_branch
      %104 = sbr.rel (0) target = $region5
    $region4: #{diffpool_forward.1} parent=1 // pred_region
      %106 = vsyncadd [#allocation3], 0
      %s107 = sshll.u32 %s1, 4
      %s108 = int_to_ptr.hbm [resolvable:$true] %s107
      %s109 = sshll.u32 [#allocation2], 4
      %s110 = int_to_ptr.vmem [resolvable:$true] %s109
      %115 = dma.hbm_to_vmem [thread:$0]  %s108, 256, %s110, [#allocation3], 128, 128, 8
    $region5: #{diffpool_forward.1} parent=1 // pred_fallthru
      _
    // Predicated region
    $region6: #{diffpool_forward.1} parent=1 // pred_check
      _
    $region7: #{diffpool_forward.1} parent=1 // pred_check_branch
      %117 = sbr.rel (0) target = $region9
    $region8: #{diffpool_forward.1} parent=1 // pred_region
      _
    $region9: #{diffpool_forward.1} parent=1 // pred_fallthru
      _
    // Predicated region
    $region10: #{diffpool_forward.1} parent=1 // pred_check
      _
    $region11: #{diffpool_forward.1} parent=1 // pred_check_branch
      %119 = sbr.rel (0) target = $region13
    $region12: #{diffpool_forward.1} parent=1 // pred_region
      _
    $region13: #{diffpool_forward.1} parent=1 // pred_fallthru
      _
    // Predicated region
    $region14: #{diffpool_forward.1} parent=1 // pred_check
      _
    $region15: #{diffpool_forward.1} parent=1 // pred_check_branch
      %121 = sbr.rel (0) target = $region17
    $region16: #{diffpool_forward.1} parent=1 // pred_region
      _
    $region17: #{diffpool_forward.1} parent=1 // pred_fallthru
      _
    // Predicated region
    $region18: #{diffpool_forward.1} parent=1 // pred_check
      _
    $region19: #{diffpool_forward.1} parent=1 // pred_check_branch
      %123 = sbr.rel (0) target = $region21
    $region20: #{diffpool_forward.1} parent=1 // pred_region
      %125 = vsyncadd [#allocation6], 0
      %s127 = sshll.u32 %s9, 4
      %s128 = int_to_ptr.hbm [resolvable:$true] %s127
      %s129 = sshll.u32 [#allocation5], 4
      %s130 = int_to_ptr.vmem [resolvable:$true] %s129
      %132 = dma.hbm_to_vmem [thread:$0]  %s128, 128, %s130, [#allocation6]
    $region21: #{diffpool_forward.1} parent=1 // pred_fallthru
      _
    // Predicated region
    $region22: #{diffpool_forward.1} parent=1 // pred_check
      _
    $region23: #{diffpool_forward.1} parent=1 // pred_check_branch
      %134 = sbr.rel (0) target = $region25
    $region24: #{diffpool_forward.1} parent=1 // pred_region
      _
    $region25: #{diffpool_forward.1} parent=1 // pred_fallthru
      _
    // Predicated region
    $region26: #{diffpool_forward.1} parent=1 // pred_check
      _
    $region27: #{diffpool_forward.1} parent=1 // pred_check_branch
      %136 = sbr.rel (0) target = $region29
    $region28: #{diffpool_forward.1} parent=1 // pred_region
      %138 = vsyncadd [#allocation6], 0
      %s140 = sshll.u32 %s13, 4
      %s141 = int_to_ptr.hbm [resolvable:$true] %s140
      %s142 = sshll.u32 [#allocation7], 4
      %s143 = int_to_ptr.vmem [resolvable:$true] %s142
      %145 = dma.hbm_to_vmem [thread:$0]  %s141, 128, %s143, [#allocation6]
    $region29: #{diffpool_forward.1} parent=1 // pred_fallthru
      _
    // Predicated region
    $region30: #{diffpool_forward.1} parent=1 // pred_check
      _
    $region31: #{diffpool_forward.1} parent=1 // pred_check_branch
      %147 = sbr.rel (0) target = $region33
    $region32: #{diffpool_forward.1} parent=1 // pred_region
      %149 = vsyncadd [#allocation9], 0
      %s151 = sshll.u32 %s15, 4
      %s152 = int_to_ptr.hbm [resolvable:$true] %s151
      %s153 = sshll.u32 [#allocation8], 4
      %s154 = int_to_ptr.vmem [resolvable:$true] %s153
      %156 = dma.hbm_to_vmem [thread:$0]  %s152, 16, %s154, [#allocation9]
    $region33: #{diffpool_forward.1} parent=1 // pred_fallthru
      _
    // Predicated region
    $region34: #{diffpool_forward.1} parent=1 // pred_check
      _
    $region35: #{diffpool_forward.1} parent=1 // pred_check_branch
      %158 = sbr.rel (0) target = $region37
    $region36: #{diffpool_forward.1} parent=1 // pred_region
      _
    $region37: #{diffpool_forward.1} parent=1 // pred_fallthru
      _
    // Predicated region
    $region38: #{diffpool_forward.1} parent=1 // pred_check
      _
    $region39: #{diffpool_forward.1} parent=1 // pred_check_branch
      %160 = sbr.rel (0) target = $region41
    $region40: #{diffpool_forward.1} parent=1 // pred_region
      _
    $region41: #{diffpool_forward.1} parent=1 // pred_fallthru
      _
    // Predicated region
    $region42: #{diffpool_forward.1} parent=1 // pred_check
      _
    $region43: #{diffpool_forward.1} parent=1 // pred_check_branch
      %162 = sbr.rel (0) target = $region45
    $region44: #{diffpool_forward.1} parent=1 // pred_region
      %164 = vsyncadd [#allocation9], 0
      %s166 = sshll.u32 %s21, 4
      %s167 = int_to_ptr.hbm [resolvable:$true] %s166
      %s168 = sshll.u32 [#allocation10], 4
      %s169 = int_to_ptr.vmem [resolvable:$true] %s168
      %171 = dma.hbm_to_vmem [thread:$0]  %s167, 16, %s169, [#allocation9]
    $region45: #{diffpool_forward.1} parent=1 // pred_fallthru
      _
    // Predicated region
    $region46: #{diffpool_forward.1} parent=1 // pred_check
      _
    $region47: #{diffpool_forward.1} parent=1 // pred_check_branch
      %173 = sbr.rel (0) target = $region49
    $region48: #{diffpool_forward.1} parent=1 // pred_region
      _
    $region49: #{diffpool_forward.1} parent=1 // pred_fallthru
      _
    // Predicated region
    $region50: #{diffpool_forward.1} parent=1 // pred_check
      _
    $region51: #{diffpool_forward.1} parent=1 // pred_check_branch
      %175 = sbr.rel (0) target = $region53
    $region52: #{diffpool_forward.1} parent=1 // pred_region
      _
    $region53: #{diffpool_forward.1} parent=1 // pred_fallthru
      _
    // Predicated region
    $region54: #{diffpool_forward.1} parent=1 // pred_check
      _
    $region55: #{diffpool_forward.1} parent=1 // pred_check_branch
      %177 = sbr.rel (0) target = $region57
    $region56: #{diffpool_forward.1} parent=1 // pred_region
      %179 = vsyncadd [#allocation12], 0
      %s181 = sshll.u32 %s27, 4
      %s182 = int_to_ptr.hbm [resolvable:$true] %s181
      %s183 = sshll.u32 [#allocation11], 4
      %s184 = int_to_ptr.vmem [resolvable:$true] %s183
      %186 = dma.hbm_to_vmem [thread:$0]  %s182, 16, %s184, [#allocation12]
    $region57: #{diffpool_forward.1} parent=1 // pred_fallthru
      _
    // Predicated region
    $region58: #{diffpool_forward.1} parent=1 // pred_check
      _
    $region59: #{diffpool_forward.1} parent=1 // pred_check_branch
      %188 = sbr.rel (0) target = $region61
    $region60: #{diffpool_forward.1} parent=1 // pred_region
      _
    $region61: #{diffpool_forward.1} parent=1 // pred_fallthru
      _
    // Predicated region
    $region62: #{diffpool_forward.1} parent=1 // pred_check
      _
    $region63: #{diffpool_forward.1} parent=1 // pred_check_branch
      %190 = sbr.rel (0) target = $region65
    $region64: #{diffpool_forward.1} parent=1 // pred_region
      %192 = vsyncadd [#allocation12], 0
      %s193 = sshll.u32 %s31, 4
      %s194 = int_to_ptr.hbm [resolvable:$true] %s193
      %s195 = sshll.u32 [#allocation13], 4
      %s196 = int_to_ptr.vmem [resolvable:$true] %s195
      %201 = dma.hbm_to_vmem [thread:$0]  %s194, 512, %s196, [#allocation12], 128, 128, 8
    $region65: #{diffpool_forward.1} parent=1 // pred_fallthru
      _
    // Predicated region
    $region66: #{diffpool_forward.1} parent=1 // pred_check
      _
    $region67: #{diffpool_forward.1} parent=1 // pred_check_branch
      %203 = sbr.rel (0) target = $region69
    $region68: #{diffpool_forward.1} parent=1 // pred_region
      %205 = vsyncadd [#allocation15], 0
      %s207 = sshll.u32 %s33, 4
      %s208 = int_to_ptr.hbm [resolvable:$true] %s207
      %s209 = sshll.u32 [#allocation14], 4
      %s210 = int_to_ptr.vmem [resolvable:$true] %s209
      %212 = dma.hbm_to_vmem [thread:$0]  %s208, 16, %s210, [#allocation15]
    $region69: #{diffpool_forward.1} parent=1 // pred_fallthru
      _
    // Predicated region
    $region70: #{diffpool_forward.1} parent=1 // pred_check
      _
    $region71: #{diffpool_forward.1} parent=1 // pred_check_branch
      %214 = sbr.rel (0) target = $region73
    $region72: #{diffpool_forward.1} parent=1 // pred_region
      %216 = vsyncadd [#allocation15], 0
      %s217 = sshll.u32 %s35, 4
      %s218 = int_to_ptr.hbm [resolvable:$true] %s217
      %s219 = sshll.u32 [#allocation16], 4
      %s220 = int_to_ptr.vmem [resolvable:$true] %s219
      %225 = dma.hbm_to_vmem [thread:$0]  %s218, 512, %s220, [#allocation15], 128, 128, 8
    $region73: #{diffpool_forward.1} parent=1 // pred_fallthru
      _
    // Predicated region
    $region74: #{diffpool_forward.1} parent=1 // pred_check
      _
    $region75: #{diffpool_forward.1} parent=1 // pred_check_branch
      %227 = sbr.rel (0) target = $region77
    $region76: #{diffpool_forward.1} parent=1 // pred_region
      %229 = vsyncadd [#allocation18], 0
      %s230 = sshll.u32 %s37, 4
      %s231 = int_to_ptr.hbm [resolvable:$true] %s230
      %s232 = sshll.u32 [#allocation17], 4
      %s233 = int_to_ptr.vmem [resolvable:$true] %s232
      %238 = dma.hbm_to_vmem [thread:$0]  %s231, 512, %s233, [#allocation18], 128, 128, 8
    $region77: #{diffpool_forward.1} parent=1 // pred_fallthru
      _
    // Predicated region
    $region78: #{diffpool_forward.1} parent=1 // pred_check
      _
    $region79: #{diffpool_forward.1} parent=1 // pred_check_branch
      %240 = sbr.rel (0) target = $region81
    $region80: #{diffpool_forward.1} parent=1 // pred_region
      %242 = vsyncadd [#allocation18], 0
      %s244 = sshll.u32 %s39, 4
      %s245 = int_to_ptr.hbm [resolvable:$true] %s244
      %s246 = sshll.u32 [#allocation19], 4
      %s247 = int_to_ptr.vmem [resolvable:$true] %s246
      %249 = dma.hbm_to_vmem [thread:$0]  %s245, 16, %s247, [#allocation18]
    $region81: #{diffpool_forward.1} parent=1 // pred_fallthru
      _
    // Predicated region
    $region82: #{diffpool_forward.1} parent=1 // pred_check
      _
    $region83: #{diffpool_forward.1} parent=1 // pred_check_branch
      %251 = sbr.rel (0) target = $region85
    $region84: #{diffpool_forward.1} parent=1 // pred_region
      _
    $region85: #{diffpool_forward.1} parent=1 // pred_fallthru
      _
    // Predicated region
    $region86: #{diffpool_forward.1} parent=1 // pred_check
      _
    $region87: #{diffpool_forward.1} parent=1 // pred_check_branch
      %253 = sbr.rel (0) target = $region89
    $region88: #{diffpool_forward.1} parent=1 // pred_region
      _
    $region89: #{diffpool_forward.1} parent=1 // pred_fallthru
      _
    // Predicated region
    $region90: #{diffpool_forward.1} parent=1 // pred_check
      _
    $region91: #{diffpool_forward.1} parent=1 // pred_check_branch
      %255 = sbr.rel (0) target = $region93
    $region92: #{diffpool_forward.1} parent=1 // pred_region
      %257 = vsyncadd [#allocation21], 0
      %s259 = sshll.u32 %s45, 4
      %s260 = int_to_ptr.hbm [resolvable:$true] %s259
      %s261 = sshll.u32 [#allocation20], 4
      %s262 = int_to_ptr.vmem [resolvable:$true] %s261
      %264 = dma.hbm_to_vmem [thread:$0]  %s260, 16, %s262, [#allocation21]
    $region93: #{diffpool_forward.1} parent=1 // pred_fallthru
      _
    // Predicated region
    $region94: #{diffpool_forward.1} parent=1 // pred_check
      _
    $region95: #{diffpool_forward.1} parent=1 // pred_check_branch
      %266 = sbr.rel (0) target = $region97
    $region96: #{diffpool_forward.1} parent=1 // pred_region
      %268 = vsyncadd [#allocation21], 0
      %s269 = sshll.u32 %s47, 4
      %s270 = int_to_ptr.hbm [resolvable:$true] %s269
      %s271 = sshll.u32 [#allocation22], 4
      %s272 = int_to_ptr.vmem [resolvable:$true] %s271
      %277 = dma.hbm_to_vmem [thread:$0]  %s270, 512, %s272, [#allocation21], 128, 128, 8
    $region97: #{diffpool_forward.1} parent=1 // pred_fallthru
      _
    // Predicated region
    $region98: #{diffpool_forward.1} parent=1 // pred_check
      _
    $region99: #{diffpool_forward.1} parent=1 // pred_check_branch
      %279 = sbr.rel (0) target = $region101
    $region100: #{diffpool_forward.1} parent=1 // pred_region
      %281 = vsyncadd [#allocation24], 0
      %s283 = sshll.u32 %s49, 4
      %s284 = int_to_ptr.hbm [resolvable:$true] %s283
      %s285 = sshll.u32 [#allocation23], 4
      %s286 = int_to_ptr.vmem [resolvable:$true] %s285
      %288 = dma.hbm_to_vmem [thread:$0]  %s284, 16, %s286, [#allocation24]
    $region101: #{diffpool_forward.1} parent=1 // pred_fallthru
      _
    // Predicated region
    $region102: #{diffpool_forward.1} parent=1 // pred_check
      _
    $region103: #{diffpool_forward.1} parent=1 // pred_check_branch
      %290 = sbr.rel (0) target = $region105
    $region104: #{diffpool_forward.1} parent=1 // pred_region
      %292 = vsyncadd [#allocation24], 0
      %s293 = sshll.u32 %s51, 4
      %s294 = int_to_ptr.hbm [resolvable:$true] %s293
      %s295 = sshll.u32 [#allocation25], 4
      %s296 = int_to_ptr.vmem [resolvable:$true] %s295
      %301 = dma.hbm_to_vmem [thread:$0]  %s294, 512, %s296, [#allocation24], 128, 128, 8
    $region105: #{diffpool_forward.1} parent=1 // pred_fallthru
      _
    // Predicated region
    $region106: #{diffpool_forward.1} parent=1 // pred_check
      _
    $region107: #{diffpool_forward.1} parent=1 // pred_check_branch
      %303 = sbr.rel (0) target = $region109
    $region108: #{diffpool_forward.1} parent=1 // pred_region
      %305 = vsyncadd [#allocation27], 0
      %s307 = sshll.u32 %s53, 4
      %s308 = int_to_ptr.hbm [resolvable:$true] %s307
      %s309 = sshll.u32 [#allocation26], 4
      %s310 = int_to_ptr.vmem [resolvable:$true] %s309
      %312 = dma.hbm_to_vmem [thread:$0]  %s308, 16, %s310, [#allocation27]
    $region109: #{diffpool_forward.1} parent=1 // pred_fallthru
      _
    // Predicated region
    $region110: #{diffpool_forward.1} parent=1 // pred_check
      _
    $region111: #{diffpool_forward.1} parent=1 // pred_check_branch
      %314 = sbr.rel (0) target = $region113
    $region112: #{diffpool_forward.1} parent=1 // pred_region
      %316 = vsyncadd [#allocation27], 0
      %s317 = sshll.u32 %s55, 4
      %s318 = int_to_ptr.hbm [resolvable:$true] %s317
      %s319 = sshll.u32 [#allocation28], 4
      %s320 = int_to_ptr.vmem [resolvable:$true] %s319
      %325 = dma.hbm_to_vmem [thread:$0]  %s318, 512, %s320, [#allocation27], 128, 128, 8
    $region113: #{diffpool_forward.1} parent=1 // pred_fallthru
      _
    // Predicated region
    $region114: #{diffpool_forward.1} parent=1 // pred_check
      _
    $region115: #{diffpool_forward.1} parent=1 // pred_check_branch
      %327 = sbr.rel (0) target = $region117
    $region116: #{diffpool_forward.1} parent=1 // pred_region
      %329 = vsyncadd [#allocation30], 0
      %s331 = sshll.u32 %s57, 4
      %s332 = int_to_ptr.hbm [resolvable:$true] %s331
      %s333 = sshll.u32 [#allocation29], 4
      %s334 = int_to_ptr.vmem [resolvable:$true] %s333
      %336 = dma.hbm_to_vmem [thread:$0]  %s332, 16, %s334, [#allocation30]
    $region117: #{diffpool_forward.1} parent=1 // pred_fallthru
      _
    // Predicated region
    $region118: #{diffpool_forward.1} parent=1 // pred_check
      _
    $region119: #{diffpool_forward.1} parent=1 // pred_check_branch
      %338 = sbr.rel (0) target = $region121
    $region120: #{diffpool_forward.1} parent=1 // pred_region
      %340 = vsyncadd [#allocation30], 0
      %s341 = sshll.u32 %s59, 4
      %s342 = int_to_ptr.hbm [resolvable:$true] %s341
      %s343 = sshll.u32 [#allocation31], 4
      %s344 = int_to_ptr.vmem [resolvable:$true] %s343
      %349 = dma.hbm_to_vmem [thread:$0]  %s342, 512, %s344, [#allocation30], 128, 128, 8
    $region121: #{diffpool_forward.1} parent=1 // pred_fallthru
      _
    // Predicated region
    $region122: #{diffpool_forward.1} parent=1 // pred_check
      _
    $region123: #{diffpool_forward.1} parent=1 // pred_check_branch
      %351 = sbr.rel (0) target = $region125
    $region124: #{diffpool_forward.1} parent=1 // pred_region
      %353 = vsyncadd [#allocation33], 0
      %s355 = sshll.u32 %s61, 4
      %s356 = int_to_ptr.hbm [resolvable:$true] %s355
      %s357 = sshll.u32 [#allocation32], 4
      %s358 = int_to_ptr.vmem [resolvable:$true] %s357
      %360 = dma.hbm_to_vmem [thread:$0]  %s356, 16, %s358, [#allocation33]
    $region125: #{diffpool_forward.1} parent=1 // pred_fallthru
      _
    // Predicated region
    $region126: #{diffpool_forward.1} parent=1 // pred_check
      _
    $region127: #{diffpool_forward.1} parent=1 // pred_check_branch
      %362 = sbr.rel (0) target = $region129
    $region128: #{diffpool_forward.1} parent=1 // pred_region
      _
    $region129: #{diffpool_forward.1} parent=1 // pred_fallthru
      _
    // Predicated region
    $region130: #{diffpool_forward.1} parent=1 // pred_check
      _
    $region131: #{diffpool_forward.1} parent=1 // pred_check_branch
      %364 = sbr.rel (0) target = $region133
    $region132: #{diffpool_forward.1} parent=1 // pred_region
      %366 = vsyncadd [#allocation33], 0
      %s368 = sshll.u32 %s65, 4
      %s369 = int_to_ptr.hbm [resolvable:$true] %s368
      %s370 = sshll.u32 [#allocation34], 4
      %s371 = int_to_ptr.vmem [resolvable:$true] %s370
      %373 = dma.hbm_to_vmem [thread:$0]  %s369, 16, %s371, [#allocation33]
    $region133: #{diffpool_forward.1} parent=1 // pred_fallthru
      _
    // Predicated region
    $region134: #{diffpool_forward.1} parent=1 // pred_check
      _
    $region135: #{diffpool_forward.1} parent=1 // pred_check_branch
      %375 = sbr.rel (0) target = $region137
    $region136: #{diffpool_forward.1} parent=1 // pred_region
      %377 = vsyncadd [#allocation36], 0
      %s378 = sshll.u32 %s67, 4
      %s379 = int_to_ptr.hbm [resolvable:$true] %s378
      %s380 = sshll.u32 [#allocation35], 4
      %s381 = int_to_ptr.vmem [resolvable:$true] %s380
      %386 = dma.hbm_to_vmem [thread:$0]  %s379, 512, %s381, [#allocation36], 128, 128, 8
    $region137: #{diffpool_forward.1} parent=1 // pred_fallthru
      _
    // Predicated region
    $region138: #{diffpool_forward.1} parent=1 // pred_check
      _
    $region139: #{diffpool_forward.1} parent=1 // pred_check_branch
      %388 = sbr.rel (0) target = $region141
    $region140: #{diffpool_forward.1} parent=1 // pred_region
      %390 = vsyncadd [#allocation36], 0
      %s392 = sshll.u32 %s69, 4
      %s393 = int_to_ptr.hbm [resolvable:$true] %s392
      %s394 = sshll.u32 [#allocation37], 4
      %s395 = int_to_ptr.vmem [resolvable:$true] %s394
      %397 = dma.hbm_to_vmem [thread:$0]  %s393, 16, %s395, [#allocation36]
    $region141: #{diffpool_forward.1} parent=1 // pred_fallthru
      _
    // Predicated region
    $region142: #{diffpool_forward.1} parent=1 // pred_check
      _
    $region143: #{diffpool_forward.1} parent=1 // pred_check_branch
      %399 = sbr.rel (0) target = $region145
    $region144: #{diffpool_forward.1} parent=1 // pred_region
      %401 = vsyncadd [#allocation39], 0
      %s402 = sshll.u32 %s71, 4
      %s403 = int_to_ptr.hbm [resolvable:$true] %s402
      %s404 = sshll.u32 [#allocation38], 4
      %s405 = int_to_ptr.vmem [resolvable:$true] %s404
      %410 = dma.hbm_to_vmem [thread:$0]  %s403, 512, %s405, [#allocation39], 128, 128, 8
    $region145: #{diffpool_forward.1} parent=1 // pred_fallthru
      _
    // Predicated region
    $region146: #{diffpool_forward.1} parent=1 // pred_check
      _
    $region147: #{diffpool_forward.1} parent=1 // pred_check_branch
      %412 = sbr.rel (0) target = $region149
    $region148: #{diffpool_forward.1} parent=1 // pred_region
      %414 = vsyncadd [#allocation39], 0
      %s416 = sshll.u32 %s73, 4
      %s417 = int_to_ptr.hbm [resolvable:$true] %s416
      %s418 = sshll.u32 [#allocation40], 4
      %s419 = int_to_ptr.vmem [resolvable:$true] %s418
      %421 = dma.hbm_to_vmem [thread:$0]  %s417, 16, %s419, [#allocation39]
    $region149: #{diffpool_forward.1} parent=1 // pred_fallthru
      _
    // Predicated region
    $region150: #{diffpool_forward.1} parent=1 // pred_check
      _
    $region151: #{diffpool_forward.1} parent=1 // pred_check_branch
      %423 = sbr.rel (0) target = $region153
    $region152: #{diffpool_forward.1} parent=1 // pred_region
      _
    $region153: #{diffpool_forward.1} parent=1 // pred_fallthru
      _
    // Predicated region
    $region154: #{diffpool_forward.1} parent=1 // pred_check
      _
    $region155: #{diffpool_forward.1} parent=1 // pred_check_branch
      %425 = sbr.rel (0) target = $region157
    $region156: #{diffpool_forward.1} parent=1 // pred_region
      %427 = vsyncadd [#allocation42], 0
      %s429 = sshll.u32 %s77, 4
      %s430 = int_to_ptr.hbm [resolvable:$true] %s429
      %s431 = sshll.u32 [#allocation41], 4
      %s432 = int_to_ptr.vmem [resolvable:$true] %s431
      %434 = dma.hbm_to_vmem [thread:$0]  %s430, 16, %s432, [#allocation42]
    $region157: #{diffpool_forward.1} parent=1 // pred_fallthru
      _
    // Predicated region
    $region158: #{diffpool_forward.1} parent=1 // pred_check
      _
    $region159: #{diffpool_forward.1} parent=1 // pred_check_branch
      %436 = sbr.rel (0) target = $region161
    $region160: #{diffpool_forward.1} parent=1 // pred_region
      _
    $region161: #{diffpool_forward.1} parent=1 // pred_fallthru
      _
    // Predicated region
    $region162: #{diffpool_forward.1} parent=1 // pred_check
      _
    $region163: #{diffpool_forward.1} parent=1 // pred_check_branch
      %438 = sbr.rel (0) target = $region165
    $region164: #{diffpool_forward.1} parent=1 // pred_region
      _
    $region165: #{diffpool_forward.1} parent=1 // pred_fallthru
      _
    // Predicated region
    $region166: #{diffpool_forward.1} parent=1 // pred_check
      _
    $region167: #{diffpool_forward.1} parent=1 // pred_check_branch
      %440 = sbr.rel (0) target = $region169
    $region168: #{diffpool_forward.1} parent=1 // pred_region
      %442 = dma.done [#allocation3], 256
    $region169: #{diffpool_forward.1} parent=1 // pred_fallthru
      _
    // Predicated region
    $region170: #{diffpool_forward.1} parent=1 // pred_check
      _
    $region171: #{diffpool_forward.1} parent=1 // pred_check_branch
      %444 = sbr.rel (0) target = $region173
    $region172: #{diffpool_forward.1} parent=1 // pred_region
      %446 = dma.done [#allocation6], 128
    $region173: #{diffpool_forward.1} parent=1 // pred_fallthru
      _
    // Predicated region
    $region174: #{diffpool_forward.1} parent=1 // pred_check
      _
    $region175: #{diffpool_forward.1} parent=1 // pred_check_branch
      %448 = sbr.rel (0) target = $region177
    $region176: #{diffpool_forward.1} parent=1 // pred_region
      %450 = dma.done [#allocation6], 128
    $region177: #{diffpool_forward.1} parent=1 // pred_fallthru
      _
    // Predicated region
    $region178: #{diffpool_forward.1} parent=1 // pred_check
      _
    $region179: #{diffpool_forward.1} parent=1 // pred_check_branch
      %452 = sbr.rel (0) target = $region181
    $region180: #{diffpool_forward.1} parent=1 // pred_region
      %454 = dma.done [#allocation9], 16
    $region181: #{diffpool_forward.1} parent=1 // pred_fallthru
      _
    // Predicated region
    $region182: #{diffpool_forward.1} parent=1 // pred_check
      _
    $region183: #{diffpool_forward.1} parent=1 // pred_check_branch
      %456 = sbr.rel (0) target = $region185
    $region184: #{diffpool_forward.1} parent=1 // pred_region
      %458 = dma.done [#allocation9], 16
    $region185: #{diffpool_forward.1} parent=1 // pred_fallthru
      _
    // Predicated region
    $region186: #{diffpool_forward.1} parent=1 // pred_check
      _
    $region187: #{diffpool_forward.1} parent=1 // pred_check_branch
      %460 = sbr.rel (0) target = $region189
    $region188: #{diffpool_forward.1} parent=1 // pred_region
      %462 = dma.done [#allocation12], 16
    $region189: #{diffpool_forward.1} parent=1 // pred_fallthru
      _
    // Predicated region
    $region190: #{diffpool_forward.1} parent=1 // pred_check
      _
    $region191: #{diffpool_forward.1} parent=1 // pred_check_branch
      %464 = sbr.rel (0) target = $region193
    $region192: #{diffpool_forward.1} parent=1 // pred_region
      %466 = dma.done [#allocation12], 512
    $region193: #{diffpool_forward.1} parent=1 // pred_fallthru
      _
    // Predicated region
    $region194: #{diffpool_forward.1} parent=1 // pred_check
      _
    $region195: #{diffpool_forward.1} parent=1 // pred_check_branch
      %468 = sbr.rel (0) target = $region197
    $region196: #{diffpool_forward.1} parent=1 // pred_region
      %470 = dma.done [#allocation15], 16
    $region197: #{diffpool_forward.1} parent=1 // pred_fallthru
      _
    // Predicated region
    $region198: #{diffpool_forward.1} parent=1 // pred_check
      _
    $region199: #{diffpool_forward.1} parent=1 // pred_check_branch
      %472 = sbr.rel (0) target = $region201
    $region200: #{diffpool_forward.1} parent=1 // pred_region
      %474 = dma.done [#allocation15], 512
    $region201: #{diffpool_forward.1} parent=1 // pred_fallthru
      _
    // Predicated region
    $region202: #{diffpool_forward.1} parent=1 // pred_check
      _
    $region203: #{diffpool_forward.1} parent=1 // pred_check_branch
      %476 = sbr.rel (0) target = $region205
    $region204: #{diffpool_forward.1} parent=1 // pred_region
      %478 = dma.done [#allocation18], 512
    $region205: #{diffpool_forward.1} parent=1 // pred_fallthru
      _
    // Predicated region
    $region206: #{diffpool_forward.1} parent=1 // pred_check
      _
    $region207: #{diffpool_forward.1} parent=1 // pred_check_branch
      %480 = sbr.rel (0) target = $region209
    $region208: #{diffpool_forward.1} parent=1 // pred_region
      %482 = dma.done [#allocation18], 16
    $region209: #{diffpool_forward.1} parent=1 // pred_fallthru
      _
    // Predicated region
    $region210: #{diffpool_forward.1} parent=1 // pred_check
      _
    $region211: #{diffpool_forward.1} parent=1 // pred_check_branch
      %484 = sbr.rel (0) target = $region213
    $region212: #{diffpool_forward.1} parent=1 // pred_region
      %486 = dma.done [#allocation21], 16
    $region213: #{diffpool_forward.1} parent=1 // pred_fallthru
      _
    // Predicated region
    $region214: #{diffpool_forward.1} parent=1 // pred_check
      _
    $region215: #{diffpool_forward.1} parent=1 // pred_check_branch
      %488 = sbr.rel (0) target = $region217
    $region216: #{diffpool_forward.1} parent=1 // pred_region
      %490 = dma.done [#allocation21], 512
    $region217: #{diffpool_forward.1} parent=1 // pred_fallthru
      _
    // Predicated region
    $region218: #{diffpool_forward.1} parent=1 // pred_check
      _
    $region219: #{diffpool_forward.1} parent=1 // pred_check_branch
      %492 = sbr.rel (0) target = $region221
    $region220: #{diffpool_forward.1} parent=1 // pred_region
      %494 = dma.done [#allocation24], 16
    $region221: #{diffpool_forward.1} parent=1 // pred_fallthru
      _
    // Predicated region
    $region222: #{diffpool_forward.1} parent=1 // pred_check
      _
    $region223: #{diffpool_forward.1} parent=1 // pred_check_branch
      %496 = sbr.rel (0) target = $region225
    $region224: #{diffpool_forward.1} parent=1 // pred_region
      %498 = dma.done [#allocation24], 512
    $region225: #{diffpool_forward.1} parent=1 // pred_fallthru
      _
    // Predicated region
    $region226: #{diffpool_forward.1} parent=1 // pred_check
      _
    $region227: #{diffpool_forward.1} parent=1 // pred_check_branch
      %500 = sbr.rel (0) target = $region229
    $region228: #{diffpool_forward.1} parent=1 // pred_region
      %502 = dma.done [#allocation27], 16
    $region229: #{diffpool_forward.1} parent=1 // pred_fallthru
      _
    // Predicated region
    $region230: #{diffpool_forward.1} parent=1 // pred_check
      _
    $region231: #{diffpool_forward.1} parent=1 // pred_check_branch
      %504 = sbr.rel (0) target = $region233
    $region232: #{diffpool_forward.1} parent=1 // pred_region
      %506 = dma.done [#allocation27], 512
    $region233: #{diffpool_forward.1} parent=1 // pred_fallthru
      _
    // Predicated region
    $region234: #{diffpool_forward.1} parent=1 // pred_check
      _
    $region235: #{diffpool_forward.1} parent=1 // pred_check_branch
      %508 = sbr.rel (0) target = $region237
    $region236: #{diffpool_forward.1} parent=1 // pred_region
      %510 = dma.done [#allocation30], 16
    $region237: #{diffpool_forward.1} parent=1 // pred_fallthru
      _
    // Predicated region
    $region238: #{diffpool_forward.1} parent=1 // pred_check
      _
    $region239: #{diffpool_forward.1} parent=1 // pred_check_branch
      %512 = sbr.rel (0) target = $region241
    $region240: #{diffpool_forward.1} parent=1 // pred_region
      %514 = dma.done [#allocation30], 512
    $region241: #{diffpool_forward.1} parent=1 // pred_fallthru
      _
    // Predicated region
    $region242: #{diffpool_forward.1} parent=1 // pred_check
      _
    $region243: #{diffpool_forward.1} parent=1 // pred_check_branch
      %516 = sbr.rel (0) target = $region245
    $region244: #{diffpool_forward.1} parent=1 // pred_region
      %518 = dma.done [#allocation33], 16
    $region245: #{diffpool_forward.1} parent=1 // pred_fallthru
      _
    // Predicated region
    $region246: #{diffpool_forward.1} parent=1 // pred_check
      _
    $region247: #{diffpool_forward.1} parent=1 // pred_check_branch
      %520 = sbr.rel (0) target = $region249
    $region248: #{diffpool_forward.1} parent=1 // pred_region
      %522 = dma.done [#allocation33], 16
    $region249: #{diffpool_forward.1} parent=1 // pred_fallthru
      _
    // Predicated region
    $region250: #{diffpool_forward.1} parent=1 // pred_check
      _
    $region251: #{diffpool_forward.1} parent=1 // pred_check_branch
      %524 = sbr.rel (0) target = $region253
    $region252: #{diffpool_forward.1} parent=1 // pred_region
      %526 = dma.done [#allocation36], 512
    $region253: #{diffpool_forward.1} parent=1 // pred_fallthru
      _
    // Predicated region
    $region254: #{diffpool_forward.1} parent=1 // pred_check
      _
    $region255: #{diffpool_forward.1} parent=1 // pred_check_branch
      %528 = sbr.rel (0) target = $region257
    $region256: #{diffpool_forward.1} parent=1 // pred_region
      %530 = dma.done [#allocation36], 16
    $region257: #{diffpool_forward.1} parent=1 // pred_fallthru
      _
    // Predicated region
    $region258: #{diffpool_forward.1} parent=1 // pred_check
      _
    $region259: #{diffpool_forward.1} parent=1 // pred_check_branch
      %532 = sbr.rel (0) target = $region261
    $region260: #{diffpool_forward.1} parent=1 // pred_region
      %534 = dma.done [#allocation39], 512
    $region261: #{diffpool_forward.1} parent=1 // pred_fallthru
      _
    // Predicated region
    $region262: #{diffpool_forward.1} parent=1 // pred_check
      _
    $region263: #{diffpool_forward.1} parent=1 // pred_check_branch
      %536 = sbr.rel (0) target = $region265
    $region264: #{diffpool_forward.1} parent=1 // pred_region
      %538 = dma.done [#allocation39], 16
    $region265: #{diffpool_forward.1} parent=1 // pred_fallthru
      _
    // Predicated region
    $region266: #{diffpool_forward.1} parent=1 // pred_check
      _
    $region267: #{diffpool_forward.1} parent=1 // pred_check_branch
      %540 = sbr.rel (0) target = $region269
    $region268: #{diffpool_forward.1} parent=1 // pred_region
      %542 = dma.done [#allocation42], 16
    $region269: #{diffpool_forward.1} parent=1 // pred_fallthru
      _
    %v543 = vld [vmem:[#allocation2] sm:$0xff]
    %v544 = vld [vmem:[#allocation2 + $0x8] sm:$0xff]
    %v545 = vld [vmem:[%s3] sm:$0xff]
    %v546 = vld [vmem:[%s3 + $0x8] sm:$0xff]
    %v547 = vld [vmem:[%s5] sm:$0xff]
    %v548 = vld [vmem:[%s5 + $0x8] sm:$0xff]
    %v549 = vld [vmem:[%s7] sm:$0xff]
    %v550 = vld [vmem:[#allocation5] sm:$0xff]
    %v551 = vld [vmem:[%s11] sm:$0x3]
    %vm552 = vcmask 130048
    %v553 = vsel %vm552, %v543, 0.0
    %554 = vadd.xlane.f32.xlu0 %v553
    %v555 = vpop.xlane.xlu0 %554
    %v556 = vsel %vm552, %v544, 0.0
    %557 = vadd.xlane.f32.xlu0 %v556
    %v558 = vpop.xlane.xlu0 %557
    %v559 = vmax.f32 %v555, 1.0
    %v560 = vmax.f32 %v558, 1.0
    %v561 = vrcp.pop %v559
    %v562 = vmul.f32 %v559, %v561
    %v563 = vsub.f32 1.0, %v562
    %v564 = vmul.f32 %v561, %v563
    %v565 = vadd.f32 %v561, %v564
    %vm566 = vweird.f32 %v559
    %vm567 = vweird.f32 %v561
    %vm568 = vmor %vm566, %vm567
    %v569 = vsel %vm568, %v561, %v565
    %v570 = vand.u32 2147483647, %v559
    %vm571 = vcmp.eq.f32.partialorder %v570, 8.507059e+37
    %v572 = vand.u32 %v559, 2147483648
    %v573 = vor.u32 1.1754944e-38, %v572
    %v574 = vsel %vm571, %v573, %v569
    %v575 = vmul.f32 1.0, %v574
    %v576 = vrcp.pop %v560
    %v577 = vmul.f32 %v560, %v576
    %v578 = vsub.f32 1.0, %v577
    %v579 = vmul.f32 %v576, %v578
    %v580 = vadd.f32 %v576, %v579
    %vm581 = vweird.f32 %v560
    %vm582 = vweird.f32 %v576
    %vm583 = vmor %vm581, %vm582
    %v584 = vsel %vm583, %v576, %v580
    %v585 = vand.u32 2147483647, %v560
    %vm586 = vcmp.eq.f32.partialorder %v585, 8.507059e+37
    %v587 = vand.u32 %v560, 2147483648
    %v588 = vor.u32 1.1754944e-38, %v587
    %v589 = vsel %vm586, %v588, %v584
    %v590 = vmul.f32 1.0, %v589
    %v591 = vld [vmem:[#allocation7] sm:$0xff]
    %v592 = vld [vmem:[#allocation8] sm:$0x1]
    %v594 = vperm.slane %v592, 0
    %vm596 = vcmask 64512
    %v598 = vsel %vm596, %v545, 0
    %v601 = vsel %vm596, %v546, 0
    %603 = vmatpush.msra.mxu0 0.0
    %604 = vmatpush.msra.mxu0 0.0
    %605 = vmatpush.msra.mxu0 0.0
    %606 = vmatpush.msra.mxu0 0.0
    %607 = vmatpush.msra.mxu0 0.0
    %608 = vmatpush.msra.mxu0 0.0
    %609 = vmatpush.msra.mxu0 0.0
    %610 = vmatpush.msra.mxu0 0.0
    %611 = vmatpush.msra.mxu0 0.0
    %612 = vmatpush.msra.mxu0 0.0
    %613 = vmatpush.msra.mxu0 0.0
    %614 = vmatpush.msra.mxu0 0.0
    %615 = vmatpush.msra.mxu0 0.0
    %616 = vmatpush.msra.mxu0 0.0
    %617 = vmatpush.msra.mxu0 0.0
    %618 = vmatpush.msra.mxu0 %v591
    %619 = vmatmul.f32.gmra.mxu0 %v598
    %v620 = vpop.f32.mrf.mxu0
    %v621 = vadd.f32 %v594, %v620
    %622 = vmatmul.f32.gmra.mxu0 %v601
    %v623 = vpop.f32.mrf.mxu0
    %v624 = vadd.f32 %v594, %v623
    %625 = vdwg.mxu0
    %v626 = vld [vmem:[%s17] sm:$0xff]
    %v627 = vld [vmem:[%s17 + $0x8] sm:$0xff]
    %v628 = vld [vmem:[%s17 + $0x10] sm:$0xff]
    %v629 = vld [vmem:[%s17 + $0x18] sm:$0xff]
    %v630 = vld [vmem:[%s19] sm:$0xff]
    %v631 = vld [vmem:[%s19 + $0x8] sm:$0xff]
    %v632 = vld [vmem:[%s19 + $0x10] sm:$0xff]
    %v633 = vld [vmem:[%s19 + $0x18] sm:$0xff]
    %v634 = vld [vmem:[#allocation10] sm:$0x1]
    %v636 = vsel %vm552, %v543, 0
    %v639 = vsel %vm552, %v544, 0
    %641 = vmatpush.msra.mxu0 0.0
    %642 = vmatpush.msra.mxu0 0.0
    %643 = vmatpush.msra.mxu0 0.0
    %644 = vmatpush.msra.mxu0 0.0
    %645 = vmatpush.msra.mxu0 0.0
    %646 = vmatpush.msra.mxu0 0.0
    %647 = vmatpush.msra.mxu0 0.0
    %648 = vmatpush.msra.mxu0 0.0
    %649 = vmatpush.msra.mxu0 0.0
    %650 = vmatpush.msra.mxu0 0.0
    %651 = vmatpush.msra.mxu0 0.0
    %652 = vmatpush.msra.mxu0 0.0
    %653 = vmatpush.msra.mxu0 0.0
    %654 = vmatpush.msra.mxu0 0.0
    %655 = vmatpush.msra.mxu0 %v624
    %656 = vmatpush.msra.mxu0 %v621
    %657 = vmatmul.f32.gmra.mxu0 %v636
    %v658 = vpop.f32.mrf.mxu0
    %v659 = vadd.f32 0.0, %v658
    %660 = vmatmul.f32.gmra.mxu0 %v639
    %v661 = vpop.f32.mrf.mxu0
    %v662 = vadd.f32 0.0, %v661
    %663 = vdwg.mxu0
    %v664 = vmul.f32 %v659, %v575
    %v665 = vmul.f32 %v662, %v590
    %vm666 = vcmask 261120
    %v668 = vsel %vm666, %v664, 0
    %v671 = vsel %vm666, %v665, 0
    %673 = vmatpush.msra.mxu0 0.0
    %674 = vmatpush.msra.mxu0 0.0
    %675 = vmatpush.msra.mxu0 0.0
    %676 = vmatpush.msra.mxu0 0.0
    %677 = vmatpush.msra.mxu0 0.0
    %678 = vmatpush.msra.mxu0 0.0
    %679 = vmatpush.msra.mxu0 0.0
    %680 = vmatpush.msra.mxu0 0.0
    %681 = vmatpush.msra.mxu0 0.0
    %682 = vmatpush.msra.mxu0 0.0
    %683 = vmatpush.msra.mxu0 0.0
    %684 = vmatpush.msra.mxu0 0.0
    %685 = vmatpush.msra.mxu0 %v633
    %686 = vmatpush.msra.mxu0 %v632
    %687 = vmatpush.msra.mxu0 %v631
    %688 = vmatpush.msra.mxu0 %v630
    %689 = vmatmul.f32.gmra.mxu0 %v668
    %v690 = vpop.f32.mrf.mxu0
    %v691 = vadd.f32 0.0, %v690
    %692 = vmatmul.f32.gmra.mxu0 %v671
    %v693 = vpop.f32.mrf.mxu0
    %v694 = vadd.f32 0.0, %v693
    %695 = vdwg.mxu0
    %v697 = vsel %vm666, %v621, 0
    %v700 = vsel %vm666, %v624, 0
    %702 = vmatpush.msra.mxu0 0.0
    %703 = vmatpush.msra.mxu0 0.0
    %704 = vmatpush.msra.mxu0 0.0
    %705 = vmatpush.msra.mxu0 0.0
    %706 = vmatpush.msra.mxu0 0.0
    %707 = vmatpush.msra.mxu0 0.0
    %708 = vmatpush.msra.mxu0 0.0
    %709 = vmatpush.msra.mxu0 0.0
    %710 = vmatpush.msra.mxu0 0.0
    %711 = vmatpush.msra.mxu0 0.0
    %712 = vmatpush.msra.mxu0 0.0
    %713 = vmatpush.msra.mxu0 0.0
    %714 = vmatpush.msra.mxu0 %v629
    %715 = vmatpush.msra.mxu0 %v628
    %716 = vmatpush.msra.mxu0 %v627
    %717 = vmatpush.msra.mxu0 %v626
    %718 = vmatmul.f32.gmra.mxu0 %v697
    %v719 = vpop.f32.mrf.mxu0
    %v720 = vadd.f32 %v691, %v719
    %721 = vmatmul.f32.gmra.mxu0 %v700
    %v722 = vpop.f32.mrf.mxu0
    %v723 = vadd.f32 %v694, %v722
    %724 = vdwg.mxu0
    %v726 = vperm.slane %v634, 0
    %v728 = vadd.f32 %v720, %v726
    %v729 = vadd.f32 %v723, %v726
    %v730 = vmul.f32 %v728, %v728
    %v731 = vmul.f32 %v729, %v729
    %v732 = vsel %vm666, %v730, 0.0
    %733 = vadd.xlane.f32.xlu0 %v732
    %v734 = vpop.xlane.xlu0 %733
    %v735 = vsel %vm666, %v731, 0.0
    %736 = vadd.xlane.f32.xlu0 %v735
    %v737 = vpop.xlane.xlu0 %736
    %v738 = vmax.f32 %v734, 1e-24
    %v739 = vmax.f32 %v737, 1e-24
    %v740 = vrsqrt.pop %v738
    %v741 = vmul.f32 %v740, %v738
    %v742 = vmul.f32 %v741, %v740
    %v743 = vmul.f32 0.5, %v742
    %v744 = vsub.f32 1.5, %v743
    %v745 = vmul.f32 %v740, %v744
    %vm746 = vweird.f32 %v738
    %vm747 = vweird.f32 %v740
    %vm748 = vmor %vm746, %vm747
    %v749 = vsel %vm748, %v740, %v745
    %v750 = vrsqrt.pop %v739
    %v751 = vmul.f32 %v750, %v739
    %v752 = vmul.f32 %v751, %v750
    %v753 = vmul.f32 0.5, %v752
    %v754 = vsub.f32 1.5, %v753
    %v755 = vmul.f32 %v750, %v754
    %vm756 = vweird.f32 %v739
    %vm757 = vweird.f32 %v750
    %vm758 = vmor %vm756, %vm757
    %v759 = vsel %vm758, %v750, %v755
    %v760 = vmul.f32 %v728, %v749
    %v761 = vmul.f32 %v729, %v759
    %v762 = vmax.f32 %v760, 0.0
    %v763 = vmax.f32 %v761, 0.0
    %v764 = vsel %vm666, %v762, 0.0
    %v765 = vsel %vm666, %v763, 0.0
    %v766 = vadd.f32 %v764, %v765
    %v767 = vrot.slane %v766, 4
    %v768 = vadd.f32 %v766, %v767
    %v769 = vrot.slane %v768, 2
    %v770 = vadd.f32 %v768, %v769
    %v771 = vrot.slane %v770, 1
    %v772 = vadd.f32 %v770, %v771
    %v773 = vrcp.pop 16.0
    %v774 = vmul.f32 16.0, %v773
    %v775 = vsub.f32 1.0, %v774
    %v776 = vmul.f32 %v773, %v775
    %v777 = vadd.f32 %v773, %v776
    %vm778 = vweird.f32 %v773
    %v779 = vsel %vm778, %v773, %v777
    %v780 = vmul.f32 %v772, %v779
    %v781 = vsub.f32 %v762, %v780
    %v782 = vsub.f32 %v763, %v780
    %v783 = vmul.f32 %v781, %v781
    %v784 = vmul.f32 %v782, %v782
    %v785 = vsel %vm666, %v783, 0.0
    %v786 = vsel %vm666, %v784, 0.0
    %v787 = vadd.f32 %v785, %v786
    %v788 = vrot.slane %v787, 4
    %v789 = vadd.f32 %v787, %v788
    %v790 = vrot.slane %v789, 2
    %v791 = vadd.f32 %v789, %v790
    %v792 = vrot.slane %v791, 1
    %v793 = vadd.f32 %v791, %v792
    %v794 = vmul.f32 %v793, %v779
    %v795 = vadd.f32 %v794, 1e-05
    %v796 = vrsqrt.pop %v795
    %v797 = vmul.f32 %v796, %v795
    %v798 = vmul.f32 %v797, %v796
    %v799 = vmul.f32 0.5, %v798
    %v800 = vsub.f32 1.5, %v799
    %v801 = vmul.f32 %v796, %v800
    %vm802 = vweird.f32 %v795
    %vm803 = vweird.f32 %v796
    %vm804 = vmor %vm802, %vm803
    %v805 = vsel %vm804, %v796, %v801
    %v806 = vmul.f32 %v781, %v805
    %v807 = vmul.f32 %v782, %v805
    %v808 = vadd.f32 %v621, %v806
    %v809 = vadd.f32 %v624, %v807
    %v810 = vld [vmem:[%s23] sm:$0xff]
    %v811 = vld [vmem:[%s23 + $0x8] sm:$0xff]
    %v812 = vld [vmem:[%s23 + $0x10] sm:$0xff]
    %v813 = vld [vmem:[%s23 + $0x18] sm:$0xff]
    %v814 = vld [vmem:[%s25] sm:$0xff]
    %v815 = vld [vmem:[%s25 + $0x8] sm:$0xff]
    %v816 = vld [vmem:[%s25 + $0x10] sm:$0xff]
    %v817 = vld [vmem:[%s25 + $0x18] sm:$0xff]
    %v818 = vld [vmem:[#allocation11] sm:$0x1]
    %819 = vmatpush.msra.mxu0 0.0
    %820 = vmatpush.msra.mxu0 0.0
    %821 = vmatpush.msra.mxu0 0.0
    %822 = vmatpush.msra.mxu0 0.0
    %823 = vmatpush.msra.mxu0 0.0
    %824 = vmatpush.msra.mxu0 0.0
    %825 = vmatpush.msra.mxu0 0.0
    %826 = vmatpush.msra.mxu0 0.0
    %827 = vmatpush.msra.mxu0 0.0
    %828 = vmatpush.msra.mxu0 0.0
    %829 = vmatpush.msra.mxu0 0.0
    %830 = vmatpush.msra.mxu0 0.0
    %831 = vmatpush.msra.mxu0 0.0
    %832 = vmatpush.msra.mxu0 0.0
    %833 = vmatpush.msra.mxu0 %v809
    %834 = vmatpush.msra.mxu0 %v808
    %835 = vmatmul.f32.gmra.mxu0 %v636
    %v836 = vpop.f32.mrf.mxu0
    %v837 = vadd.f32 0.0, %v836
    %838 = vmatmul.f32.gmra.mxu0 %v639
    %v839 = vpop.f32.mrf.mxu0
    %v840 = vadd.f32 0.0, %v839
    %841 = vdwg.mxu0
    %v842 = vmul.f32 %v837, %v575
    %v843 = vmul.f32 %v840, %v590
    %v845 = vsel %vm666, %v842, 0
    %v848 = vsel %vm666, %v843, 0
    %850 = vmatpush.msra.mxu0 0.0
    %851 = vmatpush.msra.mxu0 0.0
    %852 = vmatpush.msra.mxu0 0.0
    %853 = vmatpush.msra.mxu0 0.0
    %854 = vmatpush.msra.mxu0 0.0
    %855 = vmatpush.msra.mxu0 0.0
    %856 = vmatpush.msra.mxu0 0.0
    %857 = vmatpush.msra.mxu0 0.0
    %858 = vmatpush.msra.mxu0 0.0
    %859 = vmatpush.msra.mxu0 0.0
    %860 = vmatpush.msra.mxu0 0.0
    %861 = vmatpush.msra.mxu0 0.0
    %862 = vmatpush.msra.mxu0 %v817
    %863 = vmatpush.msra.mxu0 %v816
    %864 = vmatpush.msra.mxu0 %v815
    %865 = vmatpush.msra.mxu0 %v814
    %866 = vmatmul.f32.gmra.mxu0 %v845
    %v867 = vpop.f32.mrf.mxu0
    %v868 = vadd.f32 0.0, %v867
    %869 = vmatmul.f32.gmra.mxu0 %v848
    %v870 = vpop.f32.mrf.mxu0
    %v871 = vadd.f32 0.0, %v870
    %872 = vdwg.mxu0
    %v874 = vsel %vm666, %v808, 0
    %v877 = vsel %vm666, %v809, 0
    %879 = vmatpush.msra.mxu0 0.0
    %880 = vmatpush.msra.mxu0 0.0
    %881 = vmatpush.msra.mxu0 0.0
    %882 = vmatpush.msra.mxu0 0.0
    %883 = vmatpush.msra.mxu0 0.0
    %884 = vmatpush.msra.mxu0 0.0
    %885 = vmatpush.msra.mxu0 0.0
    %886 = vmatpush.msra.mxu0 0.0
    %887 = vmatpush.msra.mxu0 0.0
    %888 = vmatpush.msra.mxu0 0.0
    %889 = vmatpush.msra.mxu0 0.0
    %890 = vmatpush.msra.mxu0 0.0
    %891 = vmatpush.msra.mxu0 %v813
    %892 = vmatpush.msra.mxu0 %v812
    %893 = vmatpush.msra.mxu0 %v811
    %894 = vmatpush.msra.mxu0 %v810
    %895 = vmatmul.f32.gmra.mxu0 %v874
    %v896 = vpop.f32.mrf.mxu0
    %v897 = vadd.f32 %v868, %v896
    %898 = vmatmul.f32.gmra.mxu0 %v877
    %v899 = vpop.f32.mrf.mxu0
    %v900 = vadd.f32 %v871, %v899
    %901 = vdwg.mxu0
    %v903 = vperm.slane %v818, 0
    %v905 = vadd.f32 %v897, %v903
    %v906 = vadd.f32 %v900, %v903
    %v907 = vmul.f32 %v905, %v905
    %v908 = vmul.f32 %v906, %v906
    %v909 = vsel %vm666, %v907, 0.0
    %910 = vadd.xlane.f32.xlu0 %v909
    %v911 = vpop.xlane.xlu0 %910
    %v912 = vsel %vm666, %v908, 0.0
    %913 = vadd.xlane.f32.xlu0 %v912
    %v914 = vpop.xlane.xlu0 %913
    %v915 = vmax.f32 %v911, 1e-24
    %v916 = vmax.f32 %v914, 1e-24
    %v917 = vrsqrt.pop %v915
    %v918 = vmul.f32 %v917, %v915
    %v919 = vmul.f32 %v918, %v917
    %v920 = vmul.f32 0.5, %v919
    %v921 = vsub.f32 1.5, %v920
    %v922 = vmul.f32 %v917, %v921
    %vm923 = vweird.f32 %v915
    %vm924 = vweird.f32 %v917
    %vm925 = vmor %vm923, %vm924
    %v926 = vsel %vm925, %v917, %v922
    %v927 = vrsqrt.pop %v916
    %v928 = vmul.f32 %v927, %v916
    %v929 = vmul.f32 %v928, %v927
    %v930 = vmul.f32 0.5, %v929
    %v931 = vsub.f32 1.5, %v930
    %v932 = vmul.f32 %v927, %v931
    %vm933 = vweird.f32 %v916
    %vm934 = vweird.f32 %v927
    %vm935 = vmor %vm933, %vm934
    %v936 = vsel %vm935, %v927, %v932
    %v937 = vmul.f32 %v905, %v926
    %v938 = vmul.f32 %v906, %v936
    %v939 = vmax.f32 %v937, 0.0
    %v940 = vmax.f32 %v938, 0.0
    %v941 = vsel %vm666, %v939, 0.0
    %v942 = vsel %vm666, %v940, 0.0
    %v943 = vadd.f32 %v941, %v942
    %v944 = vrot.slane %v943, 4
    %v945 = vadd.f32 %v943, %v944
    %v946 = vrot.slane %v945, 2
    %v947 = vadd.f32 %v945, %v946
    %v948 = vrot.slane %v947, 1
    %v949 = vadd.f32 %v947, %v948
    %v950 = vmul.f32 %v949, %v779
    %v951 = vsub.f32 %v939, %v950
    %v952 = vsub.f32 %v940, %v950
    %v953 = vmul.f32 %v951, %v951
    %v954 = vmul.f32 %v952, %v952
    %v955 = vsel %vm666, %v953, 0.0
    %v956 = vsel %vm666, %v954, 0.0
    %v957 = vadd.f32 %v955, %v956
    %v958 = vrot.slane %v957, 4
    %v959 = vadd.f32 %v957, %v958
    %v960 = vrot.slane %v959, 2
    %v961 = vadd.f32 %v959, %v960
    %v962 = vrot.slane %v961, 1
    %v963 = vadd.f32 %v961, %v962
    %v964 = vmul.f32 %v963, %v779
    %v965 = vadd.f32 %v964, 1e-05
    %v966 = vrsqrt.pop %v965
    %v967 = vmul.f32 %v966, %v965
    %v968 = vmul.f32 %v967, %v966
    %v969 = vmul.f32 0.5, %v968
    %v970 = vsub.f32 1.5, %v969
    %v971 = vmul.f32 %v966, %v970
    %vm972 = vweird.f32 %v965
    %vm973 = vweird.f32 %v966
    %vm974 = vmor %vm972, %vm973
    %v975 = vsel %vm974, %v966, %v971
    %v976 = vmul.f32 %v951, %v975
    %v977 = vmul.f32 %v952, %v975
    %v978 = vadd.f32 %v808, %v976
    %v979 = vadd.f32 %v809, %v977
    %v980 = vld [vmem:[%s29] sm:$0xff]
    %v981 = vld [vmem:[%s29 + $0x8] sm:$0xff]
    %v982 = vld [vmem:[%s29 + $0x10] sm:$0xff]
    %v983 = vld [vmem:[%s29 + $0x18] sm:$0xff]
    %v984 = vld [vmem:[#allocation13] sm:$0xff]
    %v985 = vld [vmem:[#allocation13 + $0x8] sm:$0xff]
    %v986 = vld [vmem:[#allocation13 + $0x10] sm:$0xff]
    %v987 = vld [vmem:[#allocation13 + $0x18] sm:$0xff]
    %v988 = vld [vmem:[#allocation14] sm:$0x1]
    %989 = vmatpush.msra.mxu0 0.0
    %990 = vmatpush.msra.mxu0 0.0
    %991 = vmatpush.msra.mxu0 0.0
    %992 = vmatpush.msra.mxu0 0.0
    %993 = vmatpush.msra.mxu0 0.0
    %994 = vmatpush.msra.mxu0 0.0
    %995 = vmatpush.msra.mxu0 0.0
    %996 = vmatpush.msra.mxu0 0.0
    %997 = vmatpush.msra.mxu0 0.0
    %998 = vmatpush.msra.mxu0 0.0
    %999 = vmatpush.msra.mxu0 0.0
    %1000 = vmatpush.msra.mxu0 0.0
    %1001 = vmatpush.msra.mxu0 0.0
    %1002 = vmatpush.msra.mxu0 0.0
    %1003 = vmatpush.msra.mxu0 %v979
    %1004 = vmatpush.msra.mxu0 %v978
    %1005 = vmatmul.f32.gmra.mxu0 %v636
    %v1006 = vpop.f32.mrf.mxu0
    %v1007 = vadd.f32 0.0, %v1006
    %1008 = vmatmul.f32.gmra.mxu0 %v639
    %v1009 = vpop.f32.mrf.mxu0
    %v1010 = vadd.f32 0.0, %v1009
    %1011 = vdwg.mxu0
    %v1012 = vmul.f32 %v1007, %v575
    %v1013 = vmul.f32 %v1010, %v590
    %v1015 = vsel %vm666, %v1012, 0
    %v1018 = vsel %vm666, %v1013, 0
    %1020 = vmatpush.msra.mxu0 0.0
    %1021 = vmatpush.msra.mxu0 0.0
    %1022 = vmatpush.msra.mxu0 0.0
    %1023 = vmatpush.msra.mxu0 0.0
    %1024 = vmatpush.msra.mxu0 0.0
    %1025 = vmatpush.msra.mxu0 0.0
    %1026 = vmatpush.msra.mxu0 0.0
    %1027 = vmatpush.msra.mxu0 0.0
    %1028 = vmatpush.msra.mxu0 0.0
    %1029 = vmatpush.msra.mxu0 0.0
    %1030 = vmatpush.msra.mxu0 0.0
    %1031 = vmatpush.msra.mxu0 0.0
    %1032 = vmatpush.msra.mxu0 %v987
    %1033 = vmatpush.msra.mxu0 %v986
    %1034 = vmatpush.msra.mxu0 %v985
    %1035 = vmatpush.msra.mxu0 %v984
    %1036 = vmatmul.f32.gmra.mxu0 %v1015
    %v1037 = vpop.f32.mrf.mxu0
    %v1038 = vadd.f32 0.0, %v1037
    %1039 = vmatmul.f32.gmra.mxu0 %v1018
    %v1040 = vpop.f32.mrf.mxu0
    %v1041 = vadd.f32 0.0, %v1040
    %1042 = vdwg.mxu0
    %v1044 = vsel %vm666, %v978, 0
    %v1047 = vsel %vm666, %v979, 0
    %1049 = vmatpush.msra.mxu0 0.0
    %1050 = vmatpush.msra.mxu0 0.0
    %1051 = vmatpush.msra.mxu0 0.0
    %1052 = vmatpush.msra.mxu0 0.0
    %1053 = vmatpush.msra.mxu0 0.0
    %1054 = vmatpush.msra.mxu0 0.0
    %1055 = vmatpush.msra.mxu0 0.0
    %1056 = vmatpush.msra.mxu0 0.0
    %1057 = vmatpush.msra.mxu0 0.0
    %1058 = vmatpush.msra.mxu0 0.0
    %1059 = vmatpush.msra.mxu0 0.0
    %1060 = vmatpush.msra.mxu0 0.0
    %1061 = vmatpush.msra.mxu0 %v983
    %1062 = vmatpush.msra.mxu0 %v982
    %1063 = vmatpush.msra.mxu0 %v981
    %1064 = vmatpush.msra.mxu0 %v980
    %1065 = vmatmul.f32.gmra.mxu0 %v1044
    %v1066 = vpop.f32.mrf.mxu0
    %v1067 = vadd.f32 %v1038, %v1066
    %1068 = vmatmul.f32.gmra.mxu0 %v1047
    %v1069 = vpop.f32.mrf.mxu0
    %v1070 = vadd.f32 %v1041, %v1069
    %1071 = vdwg.mxu0
    %v1073 = vperm.slane %v988, 0
    %v1075 = vadd.f32 %v1067, %v1073
    %v1076 = vadd.f32 %v1070, %v1073
    %v1077 = vmul.f32 %v1075, %v1075
    %v1078 = vmul.f32 %v1076, %v1076
    %v1079 = vsel %vm666, %v1077, 0.0
    %1080 = vadd.xlane.f32.xlu0 %v1079
    %v1081 = vpop.xlane.xlu0 %1080
    %v1082 = vsel %vm666, %v1078, 0.0
    %1083 = vadd.xlane.f32.xlu0 %v1082
    %v1084 = vpop.xlane.xlu0 %1083
    %v1085 = vmax.f32 %v1081, 1e-24
    %v1086 = vmax.f32 %v1084, 1e-24
    %v1087 = vrsqrt.pop %v1085
    %v1088 = vmul.f32 %v1087, %v1085
    %v1089 = vmul.f32 %v1088, %v1087
    %v1090 = vmul.f32 0.5, %v1089
    %v1091 = vsub.f32 1.5, %v1090
    %v1092 = vmul.f32 %v1087, %v1091
    %vm1093 = vweird.f32 %v1085
    %vm1094 = vweird.f32 %v1087
    %vm1095 = vmor %vm1093, %vm1094
    %v1096 = vsel %vm1095, %v1087, %v1092
    %v1097 = vrsqrt.pop %v1086
    %v1098 = vmul.f32 %v1097, %v1086
    %v1099 = vmul.f32 %v1098, %v1097
    %v1100 = vmul.f32 0.5, %v1099
    %v1101 = vsub.f32 1.5, %v1100
    %v1102 = vmul.f32 %v1097, %v1101
    %vm1103 = vweird.f32 %v1086
    %vm1104 = vweird.f32 %v1097
    %vm1105 = vmor %vm1103, %vm1104
    %v1106 = vsel %vm1105, %v1097, %v1102
    %v1107 = vmul.f32 %v1075, %v1096
    %v1108 = vmul.f32 %v1076, %v1106
    %v1109 = vadd.f32 %v978, %v1107
    %v1110 = vadd.f32 %v979, %v1108
    %v1111 = vld [vmem:[#allocation16] sm:$0xff]
    %v1112 = vld [vmem:[#allocation16 + $0x8] sm:$0xff]
    %v1113 = vld [vmem:[#allocation16 + $0x10] sm:$0xff]
    %v1114 = vld [vmem:[#allocation16 + $0x18] sm:$0xff]
    %v1115 = vld [vmem:[#allocation17] sm:$0xff]
    %v1116 = vld [vmem:[#allocation17 + $0x8] sm:$0xff]
    %v1117 = vld [vmem:[#allocation17 + $0x10] sm:$0xff]
    %v1118 = vld [vmem:[#allocation17 + $0x18] sm:$0xff]
    %v1119 = vld [vmem:[#allocation19] sm:$0x1]
    %1120 = vmatpush.msra.mxu0 0.0
    %1121 = vmatpush.msra.mxu0 0.0
    %1122 = vmatpush.msra.mxu0 0.0
    %1123 = vmatpush.msra.mxu0 0.0
    %1124 = vmatpush.msra.mxu0 0.0
    %1125 = vmatpush.msra.mxu0 0.0
    %1126 = vmatpush.msra.mxu0 0.0
    %1127 = vmatpush.msra.mxu0 0.0
    %1128 = vmatpush.msra.mxu0 0.0
    %1129 = vmatpush.msra.mxu0 0.0
    %1130 = vmatpush.msra.mxu0 0.0
    %1131 = vmatpush.msra.mxu0 0.0
    %1132 = vmatpush.msra.mxu0 0.0
    %1133 = vmatpush.msra.mxu0 0.0
    %1134 = vmatpush.msra.mxu0 %v1110
    %1135 = vmatpush.msra.mxu0 %v1109
    %1136 = vmatmul.f32.gmra.mxu0 %v636
    %v1137 = vpop.f32.mrf.mxu0
    %v1138 = vadd.f32 0.0, %v1137
    %1139 = vmatmul.f32.gmra.mxu0 %v639
    %v1140 = vpop.f32.mrf.mxu0
    %v1141 = vadd.f32 0.0, %v1140
    %1142 = vdwg.mxu0
    %v1143 = vmul.f32 %v1138, %v575
    %v1144 = vmul.f32 %v1141, %v590
    %v1146 = vsel %vm666, %v1143, 0
    %v1149 = vsel %vm666, %v1144, 0
    %1151 = vmatpush.msra.mxu0 0.0
    %1152 = vmatpush.msra.mxu0 0.0
    %1153 = vmatpush.msra.mxu0 0.0
    %1154 = vmatpush.msra.mxu0 0.0
    %1155 = vmatpush.msra.mxu0 0.0
    %1156 = vmatpush.msra.mxu0 0.0
    %1157 = vmatpush.msra.mxu0 0.0
    %1158 = vmatpush.msra.mxu0 0.0
    %1159 = vmatpush.msra.mxu0 0.0
    %1160 = vmatpush.msra.mxu0 0.0
    %1161 = vmatpush.msra.mxu0 0.0
    %1162 = vmatpush.msra.mxu0 0.0
    %1163 = vmatpush.msra.mxu0 %v1118
    %1164 = vmatpush.msra.mxu0 %v1117
    %1165 = vmatpush.msra.mxu0 %v1116
    %1166 = vmatpush.msra.mxu0 %v1115
    %1167 = vmatmul.f32.gmra.mxu0 %v1146
    %v1168 = vpop.f32.mrf.mxu0
    %v1169 = vadd.f32 0.0, %v1168
    %1170 = vmatmul.f32.gmra.mxu0 %v1149
    %v1171 = vpop.f32.mrf.mxu0
    %v1172 = vadd.f32 0.0, %v1171
    %1173 = vdwg.mxu0
    %v1175 = vsel %vm666, %v1109, 0
    %v1178 = vsel %vm666, %v1110, 0
    %1180 = vmatpush.msra.mxu0 0.0
    %1181 = vmatpush.msra.mxu0 0.0
    %1182 = vmatpush.msra.mxu0 0.0
    %1183 = vmatpush.msra.mxu0 0.0
    %1184 = vmatpush.msra.mxu0 0.0
    %1185 = vmatpush.msra.mxu0 0.0
    %1186 = vmatpush.msra.mxu0 0.0
    %1187 = vmatpush.msra.mxu0 0.0
    %1188 = vmatpush.msra.mxu0 0.0
    %1189 = vmatpush.msra.mxu0 0.0
    %1190 = vmatpush.msra.mxu0 0.0
    %1191 = vmatpush.msra.mxu0 0.0
    %1192 = vmatpush.msra.mxu0 %v1114
    %1193 = vmatpush.msra.mxu0 %v1113
    %1194 = vmatpush.msra.mxu0 %v1112
    %1195 = vmatpush.msra.mxu0 %v1111
    %1196 = vmatmul.f32.gmra.mxu0 %v1175
    %v1197 = vpop.f32.mrf.mxu0
    %v1198 = vadd.f32 %v1169, %v1197
    %1199 = vmatmul.f32.gmra.mxu0 %v1178
    %v1200 = vpop.f32.mrf.mxu0
    %v1201 = vadd.f32 %v1172, %v1200
    %1202 = vdwg.mxu0
    %v1204 = vperm.slane %v1119, 0
    %v1206 = vadd.f32 %v1198, %v1204
    %v1207 = vadd.f32 %v1201, %v1204
    %v1208 = vmul.f32 %v1206, %v1206
    %v1209 = vmul.f32 %v1207, %v1207
    %v1210 = vsel %vm666, %v1208, 0.0
    %1211 = vadd.xlane.f32.xlu0 %v1210
    %v1212 = vpop.xlane.xlu0 %1211
    %v1213 = vsel %vm666, %v1209, 0.0
    %1214 = vadd.xlane.f32.xlu0 %v1213
    %v1215 = vpop.xlane.xlu0 %1214
    %v1216 = vmax.f32 %v1212, 1e-24
    %v1217 = vmax.f32 %v1215, 1e-24
    %v1218 = vrsqrt.pop %v1216
    %v1219 = vmul.f32 %v1218, %v1216
    %v1220 = vmul.f32 %v1219, %v1218
    %v1221 = vmul.f32 0.5, %v1220
    %v1222 = vsub.f32 1.5, %v1221
    %v1223 = vmul.f32 %v1218, %v1222
    %vm1224 = vweird.f32 %v1216
    %vm1225 = vweird.f32 %v1218
    %vm1226 = vmor %vm1224, %vm1225
    %v1227 = vsel %vm1226, %v1218, %v1223
    %v1228 = vrsqrt.pop %v1217
    %v1229 = vmul.f32 %v1228, %v1217
    %v1230 = vmul.f32 %v1229, %v1228
    %v1231 = vmul.f32 0.5, %v1230
    %v1232 = vsub.f32 1.5, %v1231
    %v1233 = vmul.f32 %v1228, %v1232
    %vm1234 = vweird.f32 %v1217
    %vm1235 = vweird.f32 %v1228
    %vm1236 = vmor %vm1234, %vm1235
    %v1237 = vsel %vm1236, %v1228, %v1233
    %v1238 = vmul.f32 %v1206, %v1227
    %v1239 = vmul.f32 %v1207, %v1237
    %v1240 = vmax.f32 %v1238, 0.0
    %v1241 = vmax.f32 %v1239, 0.0
    %v1242 = vld [vmem:[%s41] sm:$0xff]
    %v1243 = vld [vmem:[%s41 + $0x8] sm:$0xff]
    %v1244 = vld [vmem:[%s41 + $0x10] sm:$0xff]
    %v1245 = vld [vmem:[%s41 + $0x18] sm:$0xff]
    %v1246 = vld [vmem:[%s43] sm:$0xff]
    %v1247 = vld [vmem:[%s43 + $0x8] sm:$0xff]
    %v1248 = vld [vmem:[%s43 + $0x10] sm:$0xff]
    %v1249 = vld [vmem:[%s43 + $0x18] sm:$0xff]
    %v1250 = vld [vmem:[#allocation20] sm:$0x1]
    %1251 = vmatpush.msra.mxu0 0.0
    %1252 = vmatpush.msra.mxu0 0.0
    %1253 = vmatpush.msra.mxu0 0.0
    %1254 = vmatpush.msra.mxu0 0.0
    %1255 = vmatpush.msra.mxu0 0.0
    %1256 = vmatpush.msra.mxu0 0.0
    %1257 = vmatpush.msra.mxu0 0.0
    %1258 = vmatpush.msra.mxu0 0.0
    %1259 = vmatpush.msra.mxu0 0.0
    %1260 = vmatpush.msra.mxu0 0.0
    %1261 = vmatpush.msra.mxu0 0.0
    %1262 = vmatpush.msra.mxu0 0.0
    %1263 = vmatpush.msra.mxu0 %v1249
    %1264 = vmatpush.msra.mxu0 %v1248
    %1265 = vmatpush.msra.mxu0 %v1247
    %1266 = vmatpush.msra.mxu0 %v1246
    %1267 = vmatmul.f32.gmra.mxu0 %v1146
    %v1268 = vpop.f32.mrf.mxu0
    %v1269 = vadd.f32 0.0, %v1268
    %1270 = vmatmul.f32.gmra.mxu0 %v1149
    %v1271 = vpop.f32.mrf.mxu0
    %v1272 = vadd.f32 0.0, %v1271
    %1273 = vdwg.mxu0
    %1274 = vmatpush.msra.mxu0 0.0
    %1275 = vmatpush.msra.mxu0 0.0
    %1276 = vmatpush.msra.mxu0 0.0
    %1277 = vmatpush.msra.mxu0 0.0
    %1278 = vmatpush.msra.mxu0 0.0
    %1279 = vmatpush.msra.mxu0 0.0
    %1280 = vmatpush.msra.mxu0 0.0
    %1281 = vmatpush.msra.mxu0 0.0
    %1282 = vmatpush.msra.mxu0 0.0
    %1283 = vmatpush.msra.mxu0 0.0
    %1284 = vmatpush.msra.mxu0 0.0
    %1285 = vmatpush.msra.mxu0 0.0
    %1286 = vmatpush.msra.mxu0 %v1245
    %1287 = vmatpush.msra.mxu0 %v1244
    %1288 = vmatpush.msra.mxu0 %v1243
    %1289 = vmatpush.msra.mxu0 %v1242
    %1290 = vmatmul.f32.gmra.mxu0 %v1175
    %v1291 = vpop.f32.mrf.mxu0
    %v1292 = vadd.f32 %v1269, %v1291
    %1293 = vmatmul.f32.gmra.mxu0 %v1178
    %v1294 = vpop.f32.mrf.mxu0
    %v1295 = vadd.f32 %v1272, %v1294
    %1296 = vdwg.mxu0
    %v1298 = vperm.slane %v1250, 0
    %v1300 = vadd.f32 %v1292, %v1298
    %v1301 = vadd.f32 %v1295, %v1298
    %v1302 = vmul.f32 %v1300, %v1300
    %v1303 = vmul.f32 %v1301, %v1301
    %v1304 = vsel %vm596, %v1302, 0.0
    %1305 = vadd.xlane.f32.xlu0 %v1304
    %v1306 = vpop.xlane.xlu0 %1305
    %v1307 = vsel %vm596, %v1303, 0.0
    %1308 = vadd.xlane.f32.xlu0 %v1307
    %v1309 = vpop.xlane.xlu0 %1308
    %v1310 = vmax.f32 %v1306, 1e-24
    %v1311 = vmax.f32 %v1309, 1e-24
    %v1312 = vrsqrt.pop %v1310
    %v1313 = vmul.f32 %v1312, %v1310
    %v1314 = vmul.f32 %v1313, %v1312
    %v1315 = vmul.f32 0.5, %v1314
    %v1316 = vsub.f32 1.5, %v1315
    %v1317 = vmul.f32 %v1312, %v1316
    %vm1318 = vweird.f32 %v1310
    %vm1319 = vweird.f32 %v1312
    %vm1320 = vmor %vm1318, %vm1319
    %v1321 = vsel %vm1320, %v1312, %v1317
    %v1322 = vrsqrt.pop %v1311
    %v1323 = vmul.f32 %v1322, %v1311
    %v1324 = vmul.f32 %v1323, %v1322
    %v1325 = vmul.f32 0.5, %v1324
    %v1326 = vsub.f32 1.5, %v1325
    %v1327 = vmul.f32 %v1322, %v1326
    %vm1328 = vweird.f32 %v1311
    %vm1329 = vweird.f32 %v1322
    %vm1330 = vmor %vm1328, %vm1329
    %v1331 = vsel %vm1330, %v1322, %v1327
    %v1332 = vmul.f32 %v1300, %v1321
    %v1333 = vmul.f32 %v1301, %v1331
    %v1334 = vmax.f32 %v1332, 0.0
    %v1335 = vmax.f32 %v1333, 0.0
    %v1336 = vmul.f32 %v1334, %v547
    %v1337 = vmul.f32 %v1335, %v548
    %v1338 = vsel %vm596, %v1336, -inf
    %1339 = vmax.xlane.f32.xlu0 %v1338
    %v1340 = vpop.xlane.xlu0 %1339
    %v1341 = vsel %vm596, %v1337, -inf
    %1342 = vmax.xlane.f32.xlu0 %v1341
    %v1343 = vpop.xlane.xlu0 %1342
    %v1344 = vsub.f32 %v1336, %v1340
    %v1345 = vsub.f32 %v1337, %v1343
    %v1346 = vmul.f32 %v1344, 1.442695
    %v1347 = vpow.pop %v1346
    %v1348 = vmul.f32 %v1345, 1.442695
    %v1349 = vpow.pop %v1348
    %v1350 = vsel %vm596, %v1347, 0.0
    %1351 = vadd.xlane.f32.xlu0 %v1350
    %v1352 = vpop.xlane.xlu0 %1351
    %v1353 = vsel %vm596, %v1349, 0.0
    %1354 = vadd.xlane.f32.xlu0 %v1353
    %v1355 = vpop.xlane.xlu0 %1354
    %v1356 = vrcp.pop %v1352
    %v1357 = vmul.f32 %v1352, %v1356
    %v1358 = vsub.f32 1.0, %v1357
    %v1359 = vmul.f32 %v1356, %v1358
    %v1360 = vadd.f32 %v1356, %v1359
    %vm1361 = vweird.f32 %v1352
    %vm1362 = vweird.f32 %v1356
    %vm1363 = vmor %vm1361, %vm1362
    %v1364 = vsel %vm1363, %v1356, %v1360
    %v1365 = vand.u32 2147483647, %v1352
    %vm1366 = vcmp.eq.f32.partialorder %v1365, 8.507059e+37
    %v1367 = vand.u32 %v1352, 2147483648
    %v1368 = vor.u32 1.1754944e-38, %v1367
    %v1369 = vsel %vm1366, %v1368, %v1364
    %v1370 = vmul.f32 %v1347, %v1369
    %v1371 = vrcp.pop %v1355
    %v1372 = vmul.f32 %v1355, %v1371
    %v1373 = vsub.f32 1.0, %v1372
    %v1374 = vmul.f32 %v1371, %v1373
    %v1375 = vadd.f32 %v1371, %v1374
    %vm1376 = vweird.f32 %v1355
    %vm1377 = vweird.f32 %v1371
    %vm1378 = vmor %vm1376, %vm1377
    %v1379 = vsel %vm1378, %v1371, %v1375
    %v1380 = vand.u32 2147483647, %v1355
    %vm1381 = vcmp.eq.f32.partialorder %v1380, 8.507059e+37
    %v1382 = vand.u32 %v1355, 2147483648
    %v1383 = vor.u32 1.1754944e-38, %v1382
    %v1384 = vsel %vm1381, %v1383, %v1379
    %v1385 = vmul.f32 %v1349, %v1384
    %v1386 = vmul.f32 %v1370, %v547
    %v1387 = vmul.f32 %v1385, %v548
    %v1388 = vsel %vm596, %v1386, 0.0
    %1389 = vadd.xlane.f32.xlu0 %v1388
    %v1390 = vpop.xlane.xlu0 %1389
    %v1391 = vsel %vm596, %v1387, 0.0
    %1392 = vadd.xlane.f32.xlu0 %v1391
    %v1393 = vpop.xlane.xlu0 %1392
    %v1394 = vadd.f32 %v1390, 1e-13
    %v1395 = vadd.f32 %v1393, 1e-13
    %v1396 = vrcp.pop %v1394
    %v1397 = vmul.f32 %v1394, %v1396
    %v1398 = vsub.f32 1.0, %v1397
    %v1399 = vmul.f32 %v1396, %v1398
    %v1400 = vadd.f32 %v1396, %v1399
    %vm1401 = vweird.f32 %v1394
    %vm1402 = vweird.f32 %v1396
    %vm1403 = vmor %vm1401, %vm1402
    %v1404 = vsel %vm1403, %v1396, %v1400
    %v1405 = vand.u32 2147483647, %v1394
    %vm1406 = vcmp.eq.f32.partialorder %v1405, 8.507059e+37
    %v1407 = vand.u32 %v1394, 2147483648
    %v1408 = vor.u32 1.1754944e-38, %v1407
    %v1409 = vsel %vm1406, %v1408, %v1404
    %v1410 = vmul.f32 %v1386, %v1409
    %v1411 = vrcp.pop %v1395
    %v1412 = vmul.f32 %v1395, %v1411
    %v1413 = vsub.f32 1.0, %v1412
    %v1414 = vmul.f32 %v1411, %v1413
    %v1415 = vadd.f32 %v1411, %v1414
    %vm1416 = vweird.f32 %v1395
    %vm1417 = vweird.f32 %v1411
    %vm1418 = vmor %vm1416, %vm1417
    %v1419 = vsel %vm1418, %v1411, %v1415
    %v1420 = vand.u32 2147483647, %v1395
    %vm1421 = vcmp.eq.f32.partialorder %v1420, 8.507059e+37
    %v1422 = vand.u32 %v1395, 2147483648
    %v1423 = vor.u32 1.1754944e-38, %v1422
    %v1424 = vsel %vm1421, %v1423, %v1419
    %v1425 = vmul.f32 %v1387, %v1424
    %1426 = vxpose.xlu0.b32.start [1/16] %v1410, 128
    %1427 = vxpose.xlu0.b32.cont [2/16] %v1425, 128
    %1428 = vxpose.xlu0.b32.cont [3/16] 0.0, 128
    %1429 = vxpose.xlu0.b32.cont [4/16] 0.0, 128
    %1430 = vxpose.xlu0.b32.cont [5/16] 0.0, 128
    %1431 = vxpose.xlu0.b32.cont [6/16] 0.0, 128
    %1432 = vxpose.xlu0.b32.cont [7/16] 0.0, 128
    %1433 = vxpose.xlu0.b32.cont [8/16] 0.0, 128
    %1434 = vxpose.xlu0.b32.cont [9/16] 0.0, 128
    %1435 = vxpose.xlu0.b32.cont [10/16] 0.0, 128
    %1436 = vxpose.xlu0.b32.cont [11/16] 0.0, 128
    %1437 = vxpose.xlu0.b32.cont [12/16] 0.0, 128
    %1438 = vxpose.xlu0.b32.cont [13/16] 0.0, 128
    %1439 = vxpose.xlu0.b32.cont [14/16] 0.0, 128
    %1440 = vxpose.xlu0.b32.cont [15/16] 0.0, 128
    %1441 = vxpose.xlu0.b32.end [16/16] 0.0, 128
    %v1442 = vpop.trf.xlu0
    %v1443 = vpop.trf.xlu0
    %v1444 = vpop.trf.xlu0
    %v1445 = vpop.trf.xlu0
    %v1446 = vpop.trf.xlu0
    %v1447 = vpop.trf.xlu0
    %v1448 = vpop.trf.xlu0
    %v1449 = vpop.trf.xlu0
    %v1450 = vpop.trf.xlu0
    %v1451 = vpop.trf.xlu0
    %v1452 = vpop.trf.xlu0
    %v1453 = vpop.trf.xlu0
    %v1454 = vpop.trf.xlu0
    %v1455 = vpop.trf.xlu0
    %v1456 = vpop.trf.xlu0
    %v1457 = vpop.trf.xlu0
    %v1459 = vsel %vm552, %v1442, 0
    %1461 = vmatpush.msra.mxu0 0.0
    %1462 = vmatpush.msra.mxu0 0.0
    %1463 = vmatpush.msra.mxu0 0.0
    %1464 = vmatpush.msra.mxu0 0.0
    %1465 = vmatpush.msra.mxu0 0.0
    %1466 = vmatpush.msra.mxu0 0.0
    %1467 = vmatpush.msra.mxu0 0.0
    %1468 = vmatpush.msra.mxu0 0.0
    %1469 = vmatpush.msra.mxu0 0.0
    %1470 = vmatpush.msra.mxu0 0.0
    %1471 = vmatpush.msra.mxu0 0.0
    %1472 = vmatpush.msra.mxu0 0.0
    %1473 = vmatpush.msra.mxu0 0.0
    %1474 = vmatpush.msra.mxu0 0.0
    %1475 = vmatpush.msra.mxu0 %v1241
    %1476 = vmatpush.msra.mxu0 %v1240
    %1477 = vmatmul.f32.gmra.mxu0 %v1459
    %v1478 = vpop.f32.mrf.mxu0
    %v1479 = vadd.f32 0.0, %v1478
    %1480 = vdwg.mxu0
    %v1481 = vmul.f32 %v1479, 0.5
    %1482 = vmatpush.msra.mxu0 0.0
    %1483 = vmatpush.msra.mxu0 0.0
    %1484 = vmatpush.msra.mxu0 0.0
    %1485 = vmatpush.msra.mxu0 0.0
    %1486 = vmatpush.msra.mxu0 0.0
    %1487 = vmatpush.msra.mxu0 0.0
    %1488 = vmatpush.msra.mxu0 0.0
    %1489 = vmatpush.msra.mxu0 0.0
    %1490 = vmatpush.msra.mxu0 0.0
    %1491 = vmatpush.msra.mxu0 0.0
    %1492 = vmatpush.msra.mxu0 0.0
    %1493 = vmatpush.msra.mxu0 0.0
    %1494 = vmatpush.msra.mxu0 0.0
    %1495 = vmatpush.msra.mxu0 0.0
    %1496 = vmatpush.msra.mxu0 %v1425
    %1497 = vmatpush.msra.mxu0 %v1410
    %1498 = vmatmul.f32.gmra.mxu0 %v636
    %v1499 = vpop.f32.mrf.mxu0
    %v1500 = vadd.f32 0.0, %v1499
    %1501 = vmatmul.f32.gmra.mxu0 %v639
    %v1502 = vpop.f32.mrf.mxu0
    %v1503 = vadd.f32 0.0, %v1502
    %1504 = vdwg.mxu0
    %1505 = vmatpush.msra.mxu0 0.0
    %1506 = vmatpush.msra.mxu0 0.0
    %1507 = vmatpush.msra.mxu0 0.0
    %1508 = vmatpush.msra.mxu0 0.0
    %1509 = vmatpush.msra.mxu0 0.0
    %1510 = vmatpush.msra.mxu0 0.0
    %1511 = vmatpush.msra.mxu0 0.0
    %1512 = vmatpush.msra.mxu0 0.0
    %1513 = vmatpush.msra.mxu0 0.0
    %1514 = vmatpush.msra.mxu0 0.0
    %1515 = vmatpush.msra.mxu0 0.0
    %1516 = vmatpush.msra.mxu0 0.0
    %1517 = vmatpush.msra.mxu0 0.0
    %1518 = vmatpush.msra.mxu0 0.0
    %1519 = vmatpush.msra.mxu0 %v1503
    %1520 = vmatpush.msra.mxu0 %v1500
    %1521 = vmatmul.f32.gmra.mxu0 %v1459
    %v1522 = vpop.f32.mrf.mxu0
    %v1523 = vadd.f32 0.0, %v1522
    %1524 = vdwg.mxu0
    %v1525 = vld [vmem:[#allocation22] sm:$0xff]
    %v1526 = vld [vmem:[#allocation22 + $0x8] sm:$0xff]
    %v1527 = vld [vmem:[#allocation22 + $0x10] sm:$0xff]
    %v1528 = vld [vmem:[#allocation22 + $0x18] sm:$0xff]
    %v1529 = vld [vmem:[#allocation23] sm:$0x1]
    %v1531 = vsel %vm596, %v1523, 0
    %1533 = vmatpush.msra.mxu0 0.0
    %1534 = vmatpush.msra.mxu0 0.0
    %1535 = vmatpush.msra.mxu0 0.0
    %1536 = vmatpush.msra.mxu0 0.0
    %1537 = vmatpush.msra.mxu0 0.0
    %1538 = vmatpush.msra.mxu0 0.0
    %1539 = vmatpush.msra.mxu0 0.0
    %1540 = vmatpush.msra.mxu0 0.0
    %1541 = vmatpush.msra.mxu0 0.0
    %1542 = vmatpush.msra.mxu0 0.0
    %1543 = vmatpush.msra.mxu0 0.0
    %1544 = vmatpush.msra.mxu0 0.0
    %1545 = vmatpush.msra.mxu0 0.0
    %1546 = vmatpush.msra.mxu0 0.0
    %1547 = vmatpush.msra.mxu0 0.0
    %1548 = vmatpush.msra.mxu0 %v1481
    %1549 = vmatmul.f32.gmra.mxu0 %v1531
    %v1550 = vpop.f32.mrf.mxu0
    %v1551 = vadd.f32 0.0, %v1550
    %1552 = vdwg.mxu0
    %v1554 = vperm.slane %v1529, 0
    %v1557 = vsel %vm666, %v1551, 0
    %1559 = vmatpush.msra.mxu0 0.0
    %1560 = vmatpush.msra.mxu0 0.0
    %1561 = vmatpush.msra.mxu0 0.0
    %1562 = vmatpush.msra.mxu0 0.0
    %1563 = vmatpush.msra.mxu0 0.0
    %1564 = vmatpush.msra.mxu0 0.0
    %1565 = vmatpush.msra.mxu0 0.0
    %1566 = vmatpush.msra.mxu0 0.0
    %1567 = vmatpush.msra.mxu0 0.0
    %1568 = vmatpush.msra.mxu0 0.0
    %1569 = vmatpush.msra.mxu0 0.0
    %1570 = vmatpush.msra.mxu0 0.0
    %1571 = vmatpush.msra.mxu0 %v1528
    %1572 = vmatpush.msra.mxu0 %v1527
    %1573 = vmatpush.msra.mxu0 %v1526
    %1574 = vmatpush.msra.mxu0 %v1525
    %1575 = vmatmul.f32.gmra.mxu0 %v1557
    %v1576 = vpop.f32.mrf.mxu0
    %v1577 = vadd.f32 %v1554, %v1576
    %1578 = vdwg.mxu0
    %v1579 = vmul.f32 %v1577, %v1577
    %v1580 = vsel %vm666, %v1579, 0.0
    %1581 = vadd.xlane.f32.xlu0 %v1580
    %v1582 = vpop.xlane.xlu0 %1581
    %v1583 = vmax.f32 %v1582, 1e-24
    %v1584 = vrsqrt.pop %v1583
    %v1585 = vmul.f32 %v1584, %v1583
    %v1586 = vmul.f32 %v1585, %v1584
    %v1587 = vmul.f32 0.5, %v1586
    %v1588 = vsub.f32 1.5, %v1587
    %v1589 = vmul.f32 %v1584, %v1588
    %vm1590 = vweird.f32 %v1583
    %vm1591 = vweird.f32 %v1584
    %vm1592 = vmor %vm1590, %vm1591
    %v1593 = vsel %vm1592, %v1584, %v1589
    %v1594 = vmul.f32 %v1577, %v1593
    %v1595 = vmax.f32 %v1594, 0.0
    %v1596 = vadd.f32 %v1481, %v1595
    %v1598 = vsel %vm596, %v550, 0
    %1600 = vmatpush.msra.mxu0 0.0
    %1601 = vmatpush.msra.mxu0 0.0
    %1602 = vmatpush.msra.mxu0 0.0
    %1603 = vmatpush.msra.mxu0 0.0
    %1604 = vmatpush.msra.mxu0 0.0
    %1605 = vmatpush.msra.mxu0 0.0
    %1606 = vmatpush.msra.mxu0 0.0
    %1607 = vmatpush.msra.mxu0 0.0
    %1608 = vmatpush.msra.mxu0 0.0
    %1609 = vmatpush.msra.mxu0 0.0
    %1610 = vmatpush.msra.mxu0 0.0
    %1611 = vmatpush.msra.mxu0 0.0
    %1612 = vmatpush.msra.mxu0 0.0
    %1613 = vmatpush.msra.mxu0 0.0
    %1614 = vmatpush.msra.mxu0 0.0
    %1615 = vmatpush.msra.mxu0 %v1596
    %1616 = vmatmul.f32.gmra.mxu0 %v1598
    %v1617 = vpop.f32.mrf.mxu0
    %v1618 = vadd.f32 0.0, %v1617
    %1619 = vdwg.mxu0
    %v1620 = vsel %vm666, %v1618, 0.0
    %1621 = vadd.xlane.f32.xlu0 %v1620
    %v1622 = vpop.xlane.xlu0 %1621
    %v1623 = vmul.f32 %v1622, 0.015625
    %v1624 = vsub.f32 %v1596, %v1623
    %v1625 = vmul.f32 %v1624, %v1624
    %1626 = vmatpush.msra.mxu0 0.0
    %1627 = vmatpush.msra.mxu0 0.0
    %1628 = vmatpush.msra.mxu0 0.0
    %1629 = vmatpush.msra.mxu0 0.0
    %1630 = vmatpush.msra.mxu0 0.0
    %1631 = vmatpush.msra.mxu0 0.0
    %1632 = vmatpush.msra.mxu0 0.0
    %1633 = vmatpush.msra.mxu0 0.0
    %1634 = vmatpush.msra.mxu0 0.0
    %1635 = vmatpush.msra.mxu0 0.0
    %1636 = vmatpush.msra.mxu0 0.0
    %1637 = vmatpush.msra.mxu0 0.0
    %1638 = vmatpush.msra.mxu0 0.0
    %1639 = vmatpush.msra.mxu0 0.0
    %1640 = vmatpush.msra.mxu0 0.0
    %1641 = vmatpush.msra.mxu0 %v1625
    %1642 = vmatmul.f32.gmra.mxu0 %v1598
    %v1643 = vpop.f32.mrf.mxu0
    %v1644 = vadd.f32 0.0, %v1643
    %1645 = vdwg.mxu0
    %v1646 = vsel %vm666, %v1644, 0.0
    %1647 = vadd.xlane.f32.xlu0 %v1646
    %v1648 = vpop.xlane.xlu0 %1647
    %v1649 = vmul.f32 %v1648, 0.015625
    %v1650 = vadd.f32 %v1649, 1e-05
    %v1651 = vrsqrt.pop %v1650
    %v1652 = vmul.f32 %v1651, %v1650
    %v1653 = vmul.f32 %v1652, %v1651
    %v1654 = vmul.f32 0.5, %v1653
    %v1655 = vsub.f32 1.5, %v1654
    %v1656 = vmul.f32 %v1651, %v1655
    %vm1657 = vweird.f32 %v1650
    %vm1658 = vweird.f32 %v1651
    %vm1659 = vmor %vm1657, %vm1658
    %v1660 = vsel %vm1659, %v1651, %v1656
    %v1661 = vmul.f32 %v1624, %v1660
    %v1662 = vld [vmem:[#allocation25] sm:$0xff]
    %v1663 = vld [vmem:[#allocation25 + $0x8] sm:$0xff]
    %v1664 = vld [vmem:[#allocation25 + $0x10] sm:$0xff]
    %v1665 = vld [vmem:[#allocation25 + $0x18] sm:$0xff]
    %v1666 = vld [vmem:[#allocation26] sm:$0x1]
    %1667 = vmatpush.msra.mxu0 0.0
    %1668 = vmatpush.msra.mxu0 0.0
    %1669 = vmatpush.msra.mxu0 0.0
    %1670 = vmatpush.msra.mxu0 0.0
    %1671 = vmatpush.msra.mxu0 0.0
    %1672 = vmatpush.msra.mxu0 0.0
    %1673 = vmatpush.msra.mxu0 0.0
    %1674 = vmatpush.msra.mxu0 0.0
    %1675 = vmatpush.msra.mxu0 0.0
    %1676 = vmatpush.msra.mxu0 0.0
    %1677 = vmatpush.msra.mxu0 0.0
    %1678 = vmatpush.msra.mxu0 0.0
    %1679 = vmatpush.msra.mxu0 0.0
    %1680 = vmatpush.msra.mxu0 0.0
    %1681 = vmatpush.msra.mxu0 0.0
    %1682 = vmatpush.msra.mxu0 %v1661
    %1683 = vmatmul.f32.gmra.mxu0 %v1531
    %v1684 = vpop.f32.mrf.mxu0
    %v1685 = vadd.f32 0.0, %v1684
    %1686 = vdwg.mxu0
    %v1688 = vperm.slane %v1666, 0
    %v1691 = vsel %vm666, %v1685, 0
    %1693 = vmatpush.msra.mxu0 0.0
    %1694 = vmatpush.msra.mxu0 0.0
    %1695 = vmatpush.msra.mxu0 0.0
    %1696 = vmatpush.msra.mxu0 0.0
    %1697 = vmatpush.msra.mxu0 0.0
    %1698 = vmatpush.msra.mxu0 0.0
    %1699 = vmatpush.msra.mxu0 0.0
    %1700 = vmatpush.msra.mxu0 0.0
    %1701 = vmatpush.msra.mxu0 0.0
    %1702 = vmatpush.msra.mxu0 0.0
    %1703 = vmatpush.msra.mxu0 0.0
    %1704 = vmatpush.msra.mxu0 0.0
    %1705 = vmatpush.msra.mxu0 %v1665
    %1706 = vmatpush.msra.mxu0 %v1664
    %1707 = vmatpush.msra.mxu0 %v1663
    %1708 = vmatpush.msra.mxu0 %v1662
    %1709 = vmatmul.f32.gmra.mxu0 %v1691
    %v1710 = vpop.f32.mrf.mxu0
    %v1711 = vadd.f32 %v1688, %v1710
    %1712 = vdwg.mxu0
    %v1713 = vmul.f32 %v1711, %v1711
    %v1714 = vsel %vm666, %v1713, 0.0
    %1715 = vadd.xlane.f32.xlu0 %v1714
    %v1716 = vpop.xlane.xlu0 %1715
    %v1717 = vmax.f32 %v1716, 1e-24
    %v1718 = vrsqrt.pop %v1717
    %v1719 = vmul.f32 %v1718, %v1717
    %v1720 = vmul.f32 %v1719, %v1718
    %v1721 = vmul.f32 0.5, %v1720
    %v1722 = vsub.f32 1.5, %v1721
    %v1723 = vmul.f32 %v1718, %v1722
    %vm1724 = vweird.f32 %v1717
    %vm1725 = vweird.f32 %v1718
    %vm1726 = vmor %vm1724, %vm1725
    %v1727 = vsel %vm1726, %v1718, %v1723
    %v1728 = vmul.f32 %v1711, %v1727
    %v1729 = vmax.f32 %v1728, 0.0
    %v1730 = vadd.f32 %v1661, %v1729
    %1731 = vmatpush.msra.mxu0 0.0
    %1732 = vmatpush.msra.mxu0 0.0
    %1733 = vmatpush.msra.mxu0 0.0
    %1734 = vmatpush.msra.mxu0 0.0
    %1735 = vmatpush.msra.mxu0 0.0
    %1736 = vmatpush.msra.mxu0 0.0
    %1737 = vmatpush.msra.mxu0 0.0
    %1738 = vmatpush.msra.mxu0 0.0
    %1739 = vmatpush.msra.mxu0 0.0
    %1740 = vmatpush.msra.mxu0 0.0
    %1741 = vmatpush.msra.mxu0 0.0
    %1742 = vmatpush.msra.mxu0 0.0
    %1743 = vmatpush.msra.mxu0 0.0
    %1744 = vmatpush.msra.mxu0 0.0
    %1745 = vmatpush.msra.mxu0 0.0
    %1746 = vmatpush.msra.mxu0 %v1730
    %1747 = vmatmul.f32.gmra.mxu0 %v1598
    %v1748 = vpop.f32.mrf.mxu0
    %v1749 = vadd.f32 0.0, %v1748
    %1750 = vdwg.mxu0
    %v1751 = vsel %vm666, %v1749, 0.0
    %1752 = vadd.xlane.f32.xlu0 %v1751
    %v1753 = vpop.xlane.xlu0 %1752
    %v1754 = vmul.f32 %v1753, 0.015625
    %v1755 = vsub.f32 %v1730, %v1754
    %v1756 = vmul.f32 %v1755, %v1755
    %1757 = vmatpush.msra.mxu0 0.0
    %1758 = vmatpush.msra.mxu0 0.0
    %1759 = vmatpush.msra.mxu0 0.0
    %1760 = vmatpush.msra.mxu0 0.0
    %1761 = vmatpush.msra.mxu0 0.0
    %1762 = vmatpush.msra.mxu0 0.0
    %1763 = vmatpush.msra.mxu0 0.0
    %1764 = vmatpush.msra.mxu0 0.0
    %1765 = vmatpush.msra.mxu0 0.0
    %1766 = vmatpush.msra.mxu0 0.0
    %1767 = vmatpush.msra.mxu0 0.0
    %1768 = vmatpush.msra.mxu0 0.0
    %1769 = vmatpush.msra.mxu0 0.0
    %1770 = vmatpush.msra.mxu0 0.0
    %1771 = vmatpush.msra.mxu0 0.0
    %1772 = vmatpush.msra.mxu0 %v1756
    %1773 = vmatmul.f32.gmra.mxu0 %v1598
    %v1774 = vpop.f32.mrf.mxu0
    %v1775 = vadd.f32 0.0, %v1774
    %1776 = vdwg.mxu0
    %v1777 = vsel %vm666, %v1775, 0.0
    %1778 = vadd.xlane.f32.xlu0 %v1777
    %v1779 = vpop.xlane.xlu0 %1778
    %v1780 = vmul.f32 %v1779, 0.015625
    %v1781 = vadd.f32 %v1780, 1e-05
    %v1782 = vrsqrt.pop %v1781
    %v1783 = vmul.f32 %v1782, %v1781
    %v1784 = vmul.f32 %v1783, %v1782
    %v1785 = vmul.f32 0.5, %v1784
    %v1786 = vsub.f32 1.5, %v1785
    %v1787 = vmul.f32 %v1782, %v1786
    %vm1788 = vweird.f32 %v1781
    %vm1789 = vweird.f32 %v1782
    %vm1790 = vmor %vm1788, %vm1789
    %v1791 = vsel %vm1790, %v1782, %v1787
    %v1792 = vmul.f32 %v1755, %v1791
    %v1793 = vld [vmem:[#allocation28] sm:$0xff]
    %v1794 = vld [vmem:[#allocation28 + $0x8] sm:$0xff]
    %v1795 = vld [vmem:[#allocation28 + $0x10] sm:$0xff]
    %v1796 = vld [vmem:[#allocation28 + $0x18] sm:$0xff]
    %v1797 = vld [vmem:[#allocation29] sm:$0x1]
    %1798 = vmatpush.msra.mxu0 0.0
    %1799 = vmatpush.msra.mxu0 0.0
    %1800 = vmatpush.msra.mxu0 0.0
    %1801 = vmatpush.msra.mxu0 0.0
    %1802 = vmatpush.msra.mxu0 0.0
    %1803 = vmatpush.msra.mxu0 0.0
    %1804 = vmatpush.msra.mxu0 0.0
    %1805 = vmatpush.msra.mxu0 0.0
    %1806 = vmatpush.msra.mxu0 0.0
    %1807 = vmatpush.msra.mxu0 0.0
    %1808 = vmatpush.msra.mxu0 0.0
    %1809 = vmatpush.msra.mxu0 0.0
    %1810 = vmatpush.msra.mxu0 0.0
    %1811 = vmatpush.msra.mxu0 0.0
    %1812 = vmatpush.msra.mxu0 0.0
    %1813 = vmatpush.msra.mxu0 %v1792
    %1814 = vmatmul.f32.gmra.mxu0 %v1531
    %v1815 = vpop.f32.mrf.mxu0
    %v1816 = vadd.f32 0.0, %v1815
    %1817 = vdwg.mxu0
    %v1819 = vperm.slane %v1797, 0
    %v1822 = vsel %vm666, %v1816, 0
    %1824 = vmatpush.msra.mxu0 0.0
    %1825 = vmatpush.msra.mxu0 0.0
    %1826 = vmatpush.msra.mxu0 0.0
    %1827 = vmatpush.msra.mxu0 0.0
    %1828 = vmatpush.msra.mxu0 0.0
    %1829 = vmatpush.msra.mxu0 0.0
    %1830 = vmatpush.msra.mxu0 0.0
    %1831 = vmatpush.msra.mxu0 0.0
    %1832 = vmatpush.msra.mxu0 0.0
    %1833 = vmatpush.msra.mxu0 0.0
    %1834 = vmatpush.msra.mxu0 0.0
    %1835 = vmatpush.msra.mxu0 0.0
    %1836 = vmatpush.msra.mxu0 %v1796
    %1837 = vmatpush.msra.mxu0 %v1795
    %1838 = vmatpush.msra.mxu0 %v1794
    %1839 = vmatpush.msra.mxu0 %v1793
    %1840 = vmatmul.f32.gmra.mxu0 %v1822
    %v1841 = vpop.f32.mrf.mxu0
    %v1842 = vadd.f32 %v1819, %v1841
    %1843 = vdwg.mxu0
    %v1844 = vmul.f32 %v1842, %v1842
    %v1845 = vsel %vm666, %v1844, 0.0
    %1846 = vadd.xlane.f32.xlu0 %v1845
    %v1847 = vpop.xlane.xlu0 %1846
    %v1848 = vmax.f32 %v1847, 1e-24
    %v1849 = vrsqrt.pop %v1848
    %v1850 = vmul.f32 %v1849, %v1848
    %v1851 = vmul.f32 %v1850, %v1849
    %v1852 = vmul.f32 0.5, %v1851
    %v1853 = vsub.f32 1.5, %v1852
    %v1854 = vmul.f32 %v1849, %v1853
    %vm1855 = vweird.f32 %v1848
    %vm1856 = vweird.f32 %v1849
    %vm1857 = vmor %vm1855, %vm1856
    %v1858 = vsel %vm1857, %v1849, %v1854
    %v1859 = vmul.f32 %v1842, %v1858
    %v1860 = vmax.f32 %v1859, 0.0
    %v1861 = vadd.f32 %v1792, %v1860
    %1862 = vmatpush.msra.mxu0 0.0
    %1863 = vmatpush.msra.mxu0 0.0
    %1864 = vmatpush.msra.mxu0 0.0
    %1865 = vmatpush.msra.mxu0 0.0
    %1866 = vmatpush.msra.mxu0 0.0
    %1867 = vmatpush.msra.mxu0 0.0
    %1868 = vmatpush.msra.mxu0 0.0
    %1869 = vmatpush.msra.mxu0 0.0
    %1870 = vmatpush.msra.mxu0 0.0
    %1871 = vmatpush.msra.mxu0 0.0
    %1872 = vmatpush.msra.mxu0 0.0
    %1873 = vmatpush.msra.mxu0 0.0
    %1874 = vmatpush.msra.mxu0 0.0
    %1875 = vmatpush.msra.mxu0 0.0
    %1876 = vmatpush.msra.mxu0 0.0
    %1877 = vmatpush.msra.mxu0 %v1861
    %1878 = vmatmul.f32.gmra.mxu0 %v1598
    %v1879 = vpop.f32.mrf.mxu0
    %v1880 = vadd.f32 0.0, %v1879
    %1881 = vdwg.mxu0
    %v1882 = vsel %vm666, %v1880, 0.0
    %1883 = vadd.xlane.f32.xlu0 %v1882
    %v1884 = vpop.xlane.xlu0 %1883
    %v1885 = vmul.f32 %v1884, 0.015625
    %v1886 = vsub.f32 %v1861, %v1885
    %v1887 = vmul.f32 %v1886, %v1886
    %1888 = vmatpush.msra.mxu0 0.0
    %1889 = vmatpush.msra.mxu0 0.0
    %1890 = vmatpush.msra.mxu0 0.0
    %1891 = vmatpush.msra.mxu0 0.0
    %1892 = vmatpush.msra.mxu0 0.0
    %1893 = vmatpush.msra.mxu0 0.0
    %1894 = vmatpush.msra.mxu0 0.0
    %1895 = vmatpush.msra.mxu0 0.0
    %1896 = vmatpush.msra.mxu0 0.0
    %1897 = vmatpush.msra.mxu0 0.0
    %1898 = vmatpush.msra.mxu0 0.0
    %1899 = vmatpush.msra.mxu0 0.0
    %1900 = vmatpush.msra.mxu0 0.0
    %1901 = vmatpush.msra.mxu0 0.0
    %1902 = vmatpush.msra.mxu0 0.0
    %1903 = vmatpush.msra.mxu0 %v1887
    %1904 = vmatmul.f32.gmra.mxu0 %v1598
    %v1905 = vpop.f32.mrf.mxu0
    %v1906 = vadd.f32 0.0, %v1905
    %1907 = vdwg.mxu0
    %v1908 = vsel %vm666, %v1906, 0.0
    %1909 = vadd.xlane.f32.xlu0 %v1908
    %v1910 = vpop.xlane.xlu0 %1909
    %v1911 = vmul.f32 %v1910, 0.015625
    %v1912 = vadd.f32 %v1911, 1e-05
    %v1913 = vrsqrt.pop %v1912
    %v1914 = vmul.f32 %v1913, %v1912
    %v1915 = vmul.f32 %v1914, %v1913
    %v1916 = vmul.f32 0.5, %v1915
    %v1917 = vsub.f32 1.5, %v1916
    %v1918 = vmul.f32 %v1913, %v1917
    %vm1919 = vweird.f32 %v1912
    %vm1920 = vweird.f32 %v1913
    %vm1921 = vmor %vm1919, %vm1920
    %v1922 = vsel %vm1921, %v1913, %v1918
    %v1923 = vmul.f32 %v1886, %v1922
    %v1924 = vld [vmem:[#allocation31] sm:$0xff]
    %v1925 = vld [vmem:[#allocation31 + $0x8] sm:$0xff]
    %v1926 = vld [vmem:[#allocation31 + $0x10] sm:$0xff]
    %v1927 = vld [vmem:[#allocation31 + $0x18] sm:$0xff]
    %v1928 = vld [vmem:[#allocation32] sm:$0x1]
    %1929 = vmatpush.msra.mxu0 0.0
    %1930 = vmatpush.msra.mxu0 0.0
    %1931 = vmatpush.msra.mxu0 0.0
    %1932 = vmatpush.msra.mxu0 0.0
    %1933 = vmatpush.msra.mxu0 0.0
    %1934 = vmatpush.msra.mxu0 0.0
    %1935 = vmatpush.msra.mxu0 0.0
    %1936 = vmatpush.msra.mxu0 0.0
    %1937 = vmatpush.msra.mxu0 0.0
    %1938 = vmatpush.msra.mxu0 0.0
    %1939 = vmatpush.msra.mxu0 0.0
    %1940 = vmatpush.msra.mxu0 0.0
    %1941 = vmatpush.msra.mxu0 0.0
    %1942 = vmatpush.msra.mxu0 0.0
    %1943 = vmatpush.msra.mxu0 0.0
    %1944 = vmatpush.msra.mxu0 %v1923
    %1945 = vmatmul.f32.gmra.mxu0 %v1531
    %v1946 = vpop.f32.mrf.mxu0
    %v1947 = vadd.f32 0.0, %v1946
    %1948 = vdwg.mxu0
    %v1950 = vperm.slane %v1928, 0
    %v1953 = vsel %vm666, %v1947, 0
    %1955 = vmatpush.msra.mxu0 0.0
    %1956 = vmatpush.msra.mxu0 0.0
    %1957 = vmatpush.msra.mxu0 0.0
    %1958 = vmatpush.msra.mxu0 0.0
    %1959 = vmatpush.msra.mxu0 0.0
    %1960 = vmatpush.msra.mxu0 0.0
    %1961 = vmatpush.msra.mxu0 0.0
    %1962 = vmatpush.msra.mxu0 0.0
    %1963 = vmatpush.msra.mxu0 0.0
    %1964 = vmatpush.msra.mxu0 0.0
    %1965 = vmatpush.msra.mxu0 0.0
    %1966 = vmatpush.msra.mxu0 0.0
    %1967 = vmatpush.msra.mxu0 %v1927
    %1968 = vmatpush.msra.mxu0 %v1926
    %1969 = vmatpush.msra.mxu0 %v1925
    %1970 = vmatpush.msra.mxu0 %v1924
    %1971 = vmatmul.f32.gmra.mxu0 %v1953
    %v1972 = vpop.f32.mrf.mxu0
    %v1973 = vadd.f32 %v1950, %v1972
    %1974 = vdwg.mxu0
    %v1975 = vmul.f32 %v1973, %v1973
    %v1976 = vsel %vm666, %v1975, 0.0
    %1977 = vadd.xlane.f32.xlu0 %v1976
    %v1978 = vpop.xlane.xlu0 %1977
    %v1979 = vmax.f32 %v1978, 1e-24
    %v1980 = vrsqrt.pop %v1979
    %v1981 = vmul.f32 %v1980, %v1979
    %v1982 = vmul.f32 %v1981, %v1980
    %v1983 = vmul.f32 0.5, %v1982
    %v1984 = vsub.f32 1.5, %v1983
    %v1985 = vmul.f32 %v1980, %v1984
    %vm1986 = vweird.f32 %v1979
    %vm1987 = vweird.f32 %v1980
    %vm1988 = vmor %vm1986, %vm1987
    %v1989 = vsel %vm1988, %v1980, %v1985
    %v1990 = vmul.f32 %v1973, %v1989
    %v1991 = vmax.f32 %v1990, 0.0
    %1992 = vmatpush.msra.mxu0 0.0
    %1993 = vmatpush.msra.mxu0 0.0
    %1994 = vmatpush.msra.mxu0 0.0
    %1995 = vmatpush.msra.mxu0 0.0
    %1996 = vmatpush.msra.mxu0 0.0
    %1997 = vmatpush.msra.mxu0 0.0
    %1998 = vmatpush.msra.mxu0 0.0
    %1999 = vmatpush.msra.mxu0 0.0
    %2000 = vmatpush.msra.mxu0 0.0
    %2001 = vmatpush.msra.mxu0 0.0
    %2002 = vmatpush.msra.mxu0 0.0
    %2003 = vmatpush.msra.mxu0 0.0
    %2004 = vmatpush.msra.mxu0 0.0
    %2005 = vmatpush.msra.mxu0 0.0
    %2006 = vmatpush.msra.mxu0 0.0
    %2007 = vmatpush.msra.mxu0 %v1991
    %2008 = vmatmul.f32.gmra.mxu0 %v1598
    %v2009 = vpop.f32.mrf.mxu0
    %v2010 = vadd.f32 0.0, %v2009
    %2011 = vdwg.mxu0
    %v2012 = vsel %vm666, %v2010, 0.0
    %2013 = vadd.xlane.f32.xlu0 %v2012
    %v2014 = vpop.xlane.xlu0 %2013
    %v2015 = vmul.f32 %v2014, 0.015625
    %v2016 = vsub.f32 %v1991, %v2015
    %v2017 = vmul.f32 %v2016, %v2016
    %2018 = vmatpush.msra.mxu0 0.0
    %2019 = vmatpush.msra.mxu0 0.0
    %2020 = vmatpush.msra.mxu0 0.0
    %2021 = vmatpush.msra.mxu0 0.0
    %2022 = vmatpush.msra.mxu0 0.0
    %2023 = vmatpush.msra.mxu0 0.0
    %2024 = vmatpush.msra.mxu0 0.0
    %2025 = vmatpush.msra.mxu0 0.0
    %2026 = vmatpush.msra.mxu0 0.0
    %2027 = vmatpush.msra.mxu0 0.0
    %2028 = vmatpush.msra.mxu0 0.0
    %2029 = vmatpush.msra.mxu0 0.0
    %2030 = vmatpush.msra.mxu0 0.0
    %2031 = vmatpush.msra.mxu0 0.0
    %2032 = vmatpush.msra.mxu0 0.0
    %2033 = vmatpush.msra.mxu0 %v2017
    %2034 = vmatmul.f32.gmra.mxu0 %v1598
    %v2035 = vpop.f32.mrf.mxu0
    %v2036 = vadd.f32 0.0, %v2035
    %2037 = vdwg.mxu0
    %v2038 = vsel %vm666, %v2036, 0.0
    %2039 = vadd.xlane.f32.xlu0 %v2038
    %v2040 = vpop.xlane.xlu0 %2039
    %v2041 = vmul.f32 %v2040, 0.015625
    %v2042 = vadd.f32 %v2041, 1e-05
    %v2043 = vrsqrt.pop %v2042
    %v2044 = vmul.f32 %v2043, %v2042
    %v2045 = vmul.f32 %v2044, %v2043
    %v2046 = vmul.f32 0.5, %v2045
    %v2047 = vsub.f32 1.5, %v2046
    %v2048 = vmul.f32 %v2043, %v2047
    %vm2049 = vweird.f32 %v2042
    %vm2050 = vweird.f32 %v2043
    %vm2051 = vmor %vm2049, %vm2050
    %v2052 = vsel %vm2051, %v2043, %v2048
    %v2053 = vmul.f32 %v2016, %v2052
    %v2054 = vld [vmem:[%s63] sm:$0xff]
    %v2055 = vld [vmem:[%s63 + $0x8] sm:$0xff]
    %v2056 = vld [vmem:[%s63 + $0x10] sm:$0xff]
    %v2057 = vld [vmem:[%s63 + $0x18] sm:$0xff]
    %v2058 = vld [vmem:[#allocation34] sm:$0x1]
    %v2060 = vperm.slane %v2058, 0
    %2062 = vmatpush.msra.mxu0 0.0
    %2063 = vmatpush.msra.mxu0 0.0
    %2064 = vmatpush.msra.mxu0 0.0
    %2065 = vmatpush.msra.mxu0 0.0
    %2066 = vmatpush.msra.mxu0 0.0
    %2067 = vmatpush.msra.mxu0 0.0
    %2068 = vmatpush.msra.mxu0 0.0
    %2069 = vmatpush.msra.mxu0 0.0
    %2070 = vmatpush.msra.mxu0 0.0
    %2071 = vmatpush.msra.mxu0 0.0
    %2072 = vmatpush.msra.mxu0 0.0
    %2073 = vmatpush.msra.mxu0 0.0
    %2074 = vmatpush.msra.mxu0 %v2057
    %2075 = vmatpush.msra.mxu0 %v2056
    %2076 = vmatpush.msra.mxu0 %v2055
    %2077 = vmatpush.msra.mxu0 %v2054
    %2078 = vmatmul.f32.gmra.mxu0 %v1953
    %v2079 = vpop.f32.mrf.mxu0
    %v2080 = vadd.f32 %v2060, %v2079
    %2081 = vdwg.mxu0
    %v2082 = vmul.f32 %v2080, %v2080
    %vm2083 = vcmask 31744
    %v2084 = vsel %vm2083, %v2082, 0.0
    %2085 = vadd.xlane.f32.xlu0 %v2084
    %v2086 = vpop.xlane.xlu0 %2085
    %v2087 = vmax.f32 %v2086, 1e-24
    %v2088 = vrsqrt.pop %v2087
    %v2089 = vmul.f32 %v2088, %v2087
    %v2090 = vmul.f32 %v2089, %v2088
    %v2091 = vmul.f32 0.5, %v2090
    %v2092 = vsub.f32 1.5, %v2091
    %v2093 = vmul.f32 %v2088, %v2092
    %vm2094 = vweird.f32 %v2087
    %vm2095 = vweird.f32 %v2088
    %vm2096 = vmor %vm2094, %vm2095
    %v2097 = vsel %vm2096, %v2088, %v2093
    %v2098 = vmul.f32 %v2080, %v2097
    %v2099 = vmax.f32 %v2098, 0.0
    %2100 = vmatpush.msra.mxu0 0.0
    %2101 = vmatpush.msra.mxu0 0.0
    %2102 = vmatpush.msra.mxu0 0.0
    %2103 = vmatpush.msra.mxu0 0.0
    %2104 = vmatpush.msra.mxu0 0.0
    %2105 = vmatpush.msra.mxu0 0.0
    %2106 = vmatpush.msra.mxu0 0.0
    %2107 = vmatpush.msra.mxu0 0.0
    %2108 = vmatpush.msra.mxu0 0.0
    %2109 = vmatpush.msra.mxu0 0.0
    %2110 = vmatpush.msra.mxu0 0.0
    %2111 = vmatpush.msra.mxu0 0.0
    %2112 = vmatpush.msra.mxu0 0.0
    %2113 = vmatpush.msra.mxu0 0.0
    %2114 = vmatpush.msra.mxu0 0.0
    %2115 = vmatpush.msra.mxu0 %v2099
    %2116 = vmatmul.f32.gmra.mxu0 %v1598
    %v2117 = vpop.f32.mrf.mxu0
    %v2118 = vadd.f32 0.0, %v2117
    %2119 = vdwg.mxu0
    %v2120 = vsel %vm2083, %v2118, 0.0
    %2121 = vadd.xlane.f32.xlu0 %v2120
    %v2122 = vpop.xlane.xlu0 %2121
    %v2123 = vmul.f32 %v2122, 0.125
    %v2124 = vsub.f32 %v2099, %v2123
    %v2125 = vmul.f32 %v2124, %v2124
    %2126 = vmatpush.msra.mxu0 0.0
    %2127 = vmatpush.msra.mxu0 0.0
    %2128 = vmatpush.msra.mxu0 0.0
    %2129 = vmatpush.msra.mxu0 0.0
    %2130 = vmatpush.msra.mxu0 0.0
    %2131 = vmatpush.msra.mxu0 0.0
    %2132 = vmatpush.msra.mxu0 0.0
    %2133 = vmatpush.msra.mxu0 0.0
    %2134 = vmatpush.msra.mxu0 0.0
    %2135 = vmatpush.msra.mxu0 0.0
    %2136 = vmatpush.msra.mxu0 0.0
    %2137 = vmatpush.msra.mxu0 0.0
    %2138 = vmatpush.msra.mxu0 0.0
    %2139 = vmatpush.msra.mxu0 0.0
    %2140 = vmatpush.msra.mxu0 0.0
    %2141 = vmatpush.msra.mxu0 %v2125
    %2142 = vmatmul.f32.gmra.mxu0 %v1598
    %v2143 = vpop.f32.mrf.mxu0
    %v2144 = vadd.f32 0.0, %v2143
    %2145 = vdwg.mxu0
    %v2146 = vsel %vm2083, %v2144, 0.0
    %2147 = vadd.xlane.f32.xlu0 %v2146
    %v2148 = vpop.xlane.xlu0 %2147
    %v2149 = vmul.f32 %v2148, 0.125
    %v2150 = vadd.f32 %v2149, 1e-05
    %v2151 = vrsqrt.pop %v2150
    %v2152 = vmul.f32 %v2151, %v2150
    %v2153 = vmul.f32 %v2152, %v2151
    %v2154 = vmul.f32 0.5, %v2153
    %v2155 = vsub.f32 1.5, %v2154
    %v2156 = vmul.f32 %v2151, %v2155
    %vm2157 = vweird.f32 %v2150
    %vm2158 = vweird.f32 %v2151
    %vm2159 = vmor %vm2157, %vm2158
    %v2160 = vsel %vm2159, %v2151, %v2156
    %v2161 = vmul.f32 %v2124, %v2160
    %v2162 = vsel %vm2083, %v2161, -inf
    %2163 = vmax.xlane.f32.xlu0 %v2162
    %v2164 = vpop.xlane.xlu0 %2163
    %v2165 = vsub.f32 %v2161, %v2164
    %v2166 = vmul.f32 %v2165, 1.442695
    %v2167 = vpow.pop %v2166
    %v2168 = vsel %vm2083, %v2167, 0.0
    %2169 = vadd.xlane.f32.xlu0 %v2168
    %v2170 = vpop.xlane.xlu0 %2169
    %v2171 = vrcp.pop %v2170
    %v2172 = vmul.f32 %v2170, %v2171
    %v2173 = vsub.f32 1.0, %v2172
    %v2174 = vmul.f32 %v2171, %v2173
    %v2175 = vadd.f32 %v2171, %v2174
    %vm2176 = vweird.f32 %v2170
    %vm2177 = vweird.f32 %v2171
    %vm2178 = vmor %vm2176, %vm2177
    %v2179 = vsel %vm2178, %v2171, %v2175
    %v2180 = vand.u32 2147483647, %v2170
    %vm2181 = vcmp.eq.f32.partialorder %v2180, 8.507059e+37
    %v2182 = vand.u32 %v2170, 2147483648
    %v2183 = vor.u32 1.1754944e-38, %v2182
    %v2184 = vsel %vm2181, %v2183, %v2179
    %v2185 = vmul.f32 %v2167, %v2184
    %2187 = vrot.lane.b32.xlu0 %v2185, 4
    %v2188 = vpop.permute.xlu0 %2187
    %v2190 = vsel %vm2083, %v2185, %v2188
    %v2191 = vmul.f32 %v2190, %v549
    %2192 = vxpose.xlu0.b32.start [1/16] %v2191, 128
    %2193 = vxpose.xlu0.b32.cont [2/16] 0.0, 128
    %2194 = vxpose.xlu0.b32.cont [3/16] 0.0, 128
    %2195 = vxpose.xlu0.b32.cont [4/16] 0.0, 128
    %2196 = vxpose.xlu0.b32.cont [5/16] 0.0, 128
    %2197 = vxpose.xlu0.b32.cont [6/16] 0.0, 128
    %2198 = vxpose.xlu0.b32.cont [7/16] 0.0, 128
    %2199 = vxpose.xlu0.b32.cont [8/16] 0.0, 128
    %2200 = vxpose.xlu0.b32.cont [9/16] 0.0, 128
    %2201 = vxpose.xlu0.b32.cont [10/16] 0.0, 128
    %2202 = vxpose.xlu0.b32.cont [11/16] 0.0, 128
    %2203 = vxpose.xlu0.b32.cont [12/16] 0.0, 128
    %2204 = vxpose.xlu0.b32.cont [13/16] 0.0, 128
    %2205 = vxpose.xlu0.b32.cont [14/16] 0.0, 128
    %2206 = vxpose.xlu0.b32.cont [15/16] 0.0, 128
    %2207 = vxpose.xlu0.b32.end [16/16] 0.0, 128
    %v2208 = vpop.trf.xlu0
    %v2209 = vpop.trf.xlu0
    %v2210 = vpop.trf.xlu0
    %v2211 = vpop.trf.xlu0
    %v2212 = vpop.trf.xlu0
    %v2213 = vpop.trf.xlu0
    %v2214 = vpop.trf.xlu0
    %v2215 = vpop.trf.xlu0
    %v2216 = vpop.trf.xlu0
    %v2217 = vpop.trf.xlu0
    %v2218 = vpop.trf.xlu0
    %v2219 = vpop.trf.xlu0
    %v2220 = vpop.trf.xlu0
    %v2221 = vpop.trf.xlu0
    %v2222 = vpop.trf.xlu0
    %v2223 = vpop.trf.xlu0
    %v2225 = vsel %vm596, %v2208, 0
    %2227 = vmatpush.msra.mxu0 0.0
    %2228 = vmatpush.msra.mxu0 0.0
    %2229 = vmatpush.msra.mxu0 0.0
    %2230 = vmatpush.msra.mxu0 0.0
    %2231 = vmatpush.msra.mxu0 0.0
    %2232 = vmatpush.msra.mxu0 0.0
    %2233 = vmatpush.msra.mxu0 0.0
    %2234 = vmatpush.msra.mxu0 0.0
    %2235 = vmatpush.msra.mxu0 0.0
    %2236 = vmatpush.msra.mxu0 0.0
    %2237 = vmatpush.msra.mxu0 0.0
    %2238 = vmatpush.msra.mxu0 0.0
    %2239 = vmatpush.msra.mxu0 0.0
    %2240 = vmatpush.msra.mxu0 0.0
    %2241 = vmatpush.msra.mxu0 0.0
    %2242 = vmatpush.msra.mxu0 %v2053
    %2243 = vmatmul.f32.gmra.mxu0 %v2225
    %v2244 = vpop.f32.mrf.mxu0
    %v2245 = vadd.f32 0.0, %v2244
    %2246 = vdwg.mxu0
    %2247 = vmatpush.msra.mxu0 0.0
    %2248 = vmatpush.msra.mxu0 0.0
    %2249 = vmatpush.msra.mxu0 0.0
    %2250 = vmatpush.msra.mxu0 0.0
    %2251 = vmatpush.msra.mxu0 0.0
    %2252 = vmatpush.msra.mxu0 0.0
    %2253 = vmatpush.msra.mxu0 0.0
    %2254 = vmatpush.msra.mxu0 0.0
    %2255 = vmatpush.msra.mxu0 0.0
    %2256 = vmatpush.msra.mxu0 0.0
    %2257 = vmatpush.msra.mxu0 0.0
    %2258 = vmatpush.msra.mxu0 0.0
    %2259 = vmatpush.msra.mxu0 0.0
    %2260 = vmatpush.msra.mxu0 0.0
    %2261 = vmatpush.msra.mxu0 0.0
    %2262 = vmatpush.msra.mxu0 %v2191
    %2263 = vmatmul.f32.gmra.mxu0 %v1531
    %v2264 = vpop.f32.mrf.mxu0
    %v2265 = vadd.f32 0.0, %v2264
    %2266 = vdwg.mxu0
    %2267 = vmatpush.msra.mxu0 0.0
    %2268 = vmatpush.msra.mxu0 0.0
    %2269 = vmatpush.msra.mxu0 0.0
    %2270 = vmatpush.msra.mxu0 0.0
    %2271 = vmatpush.msra.mxu0 0.0
    %2272 = vmatpush.msra.mxu0 0.0
    %2273 = vmatpush.msra.mxu0 0.0
    %2274 = vmatpush.msra.mxu0 0.0
    %2275 = vmatpush.msra.mxu0 0.0
    %2276 = vmatpush.msra.mxu0 0.0
    %2277 = vmatpush.msra.mxu0 0.0
    %2278 = vmatpush.msra.mxu0 0.0
    %2279 = vmatpush.msra.mxu0 0.0
    %2280 = vmatpush.msra.mxu0 0.0
    %2281 = vmatpush.msra.mxu0 0.0
    %2282 = vmatpush.msra.mxu0 %v2265
    %2283 = vmatmul.f32.gmra.mxu0 %v2225
    %v2284 = vpop.f32.mrf.mxu0
    %v2285 = vadd.f32 0.0, %v2284
    %2286 = vdwg.mxu0
    %v2287 = vld [vmem:[#allocation35] sm:$0xff]
    %v2288 = vld [vmem:[#allocation35 + $0x8] sm:$0xff]
    %v2289 = vld [vmem:[#allocation35 + $0x10] sm:$0xff]
    %v2290 = vld [vmem:[#allocation35 + $0x18] sm:$0xff]
    %v2291 = vld [vmem:[#allocation37] sm:$0x1]
    %v2293 = vsel %vm596, %v2285, 0
    %2295 = vmatpush.msra.mxu0 0.0
    %2296 = vmatpush.msra.mxu0 0.0
    %2297 = vmatpush.msra.mxu0 0.0
    %2298 = vmatpush.msra.mxu0 0.0
    %2299 = vmatpush.msra.mxu0 0.0
    %2300 = vmatpush.msra.mxu0 0.0
    %2301 = vmatpush.msra.mxu0 0.0
    %2302 = vmatpush.msra.mxu0 0.0
    %2303 = vmatpush.msra.mxu0 0.0
    %2304 = vmatpush.msra.mxu0 0.0
    %2305 = vmatpush.msra.mxu0 0.0
    %2306 = vmatpush.msra.mxu0 0.0
    %2307 = vmatpush.msra.mxu0 0.0
    %2308 = vmatpush.msra.mxu0 0.0
    %2309 = vmatpush.msra.mxu0 0.0
    %2310 = vmatpush.msra.mxu0 %v2245
    %2311 = vmatmul.f32.gmra.mxu0 %v2293
    %v2312 = vpop.f32.mrf.mxu0
    %v2313 = vadd.f32 0.0, %v2312
    %2314 = vdwg.mxu0
    %v2316 = vperm.slane %v2291, 0
    %v2319 = vsel %vm666, %v2313, 0
    %2321 = vmatpush.msra.mxu0 0.0
    %2322 = vmatpush.msra.mxu0 0.0
    %2323 = vmatpush.msra.mxu0 0.0
    %2324 = vmatpush.msra.mxu0 0.0
    %2325 = vmatpush.msra.mxu0 0.0
    %2326 = vmatpush.msra.mxu0 0.0
    %2327 = vmatpush.msra.mxu0 0.0
    %2328 = vmatpush.msra.mxu0 0.0
    %2329 = vmatpush.msra.mxu0 0.0
    %2330 = vmatpush.msra.mxu0 0.0
    %2331 = vmatpush.msra.mxu0 0.0
    %2332 = vmatpush.msra.mxu0 0.0
    %2333 = vmatpush.msra.mxu0 %v2290
    %2334 = vmatpush.msra.mxu0 %v2289
    %2335 = vmatpush.msra.mxu0 %v2288
    %2336 = vmatpush.msra.mxu0 %v2287
    %2337 = vmatmul.f32.gmra.mxu0 %v2319
    %v2338 = vpop.f32.mrf.mxu0
    %v2339 = vadd.f32 %v2316, %v2338
    %2340 = vdwg.mxu0
    %v2341 = vmul.f32 %v2339, %v2339
    %v2342 = vsel %vm666, %v2341, 0.0
    %2343 = vadd.xlane.f32.xlu0 %v2342
    %v2344 = vpop.xlane.xlu0 %2343
    %v2345 = vmax.f32 %v2344, 1e-24
    %v2346 = vrsqrt.pop %v2345
    %v2347 = vmul.f32 %v2346, %v2345
    %v2348 = vmul.f32 %v2347, %v2346
    %v2349 = vmul.f32 0.5, %v2348
    %v2350 = vsub.f32 1.5, %v2349
    %v2351 = vmul.f32 %v2346, %v2350
    %vm2352 = vweird.f32 %v2345
    %vm2353 = vweird.f32 %v2346
    %vm2354 = vmor %vm2352, %vm2353
    %v2355 = vsel %vm2354, %v2346, %v2351
    %v2356 = vmul.f32 %v2339, %v2355
    %v2357 = vmax.f32 %v2356, 0.0
    %v2358 = vadd.f32 %v2245, %v2357
    %2359 = vmatpush.msra.mxu0 0.0
    %2360 = vmatpush.msra.mxu0 0.0
    %2361 = vmatpush.msra.mxu0 0.0
    %2362 = vmatpush.msra.mxu0 0.0
    %2363 = vmatpush.msra.mxu0 0.0
    %2364 = vmatpush.msra.mxu0 0.0
    %2365 = vmatpush.msra.mxu0 0.0
    %2366 = vmatpush.msra.mxu0 0.0
    %2367 = vmatpush.msra.mxu0 0.0
    %2368 = vmatpush.msra.mxu0 0.0
    %2369 = vmatpush.msra.mxu0 0.0
    %2370 = vmatpush.msra.mxu0 0.0
    %2371 = vmatpush.msra.mxu0 0.0
    %2372 = vmatpush.msra.mxu0 0.0
    %2373 = vmatpush.msra.mxu0 0.0
    %2374 = vmatpush.msra.mxu0 %v2358
    %2375 = vmatmul.f32.gmra.mxu0 %v1598
    %v2376 = vpop.f32.mrf.mxu0
    %v2377 = vadd.f32 0.0, %v2376
    %2378 = vdwg.mxu0
    %v2379 = vsel %vm666, %v2377, 0.0
    %2380 = vadd.xlane.f32.xlu0 %v2379
    %v2381 = vpop.xlane.xlu0 %2380
    %v2382 = vmul.f32 %v2381, 0.015625
    %v2383 = vsub.f32 %v2358, %v2382
    %v2384 = vmul.f32 %v2383, %v2383
    %2385 = vmatpush.msra.mxu0 0.0
    %2386 = vmatpush.msra.mxu0 0.0
    %2387 = vmatpush.msra.mxu0 0.0
    %2388 = vmatpush.msra.mxu0 0.0
    %2389 = vmatpush.msra.mxu0 0.0
    %2390 = vmatpush.msra.mxu0 0.0
    %2391 = vmatpush.msra.mxu0 0.0
    %2392 = vmatpush.msra.mxu0 0.0
    %2393 = vmatpush.msra.mxu0 0.0
    %2394 = vmatpush.msra.mxu0 0.0
    %2395 = vmatpush.msra.mxu0 0.0
    %2396 = vmatpush.msra.mxu0 0.0
    %2397 = vmatpush.msra.mxu0 0.0
    %2398 = vmatpush.msra.mxu0 0.0
    %2399 = vmatpush.msra.mxu0 0.0
    %2400 = vmatpush.msra.mxu0 %v2384
    %2401 = vmatmul.f32.gmra.mxu0 %v1598
    %v2402 = vpop.f32.mrf.mxu0
    %v2403 = vadd.f32 0.0, %v2402
    %2404 = vdwg.mxu0
    %v2405 = vsel %vm666, %v2403, 0.0
    %2406 = vadd.xlane.f32.xlu0 %v2405
    %v2407 = vpop.xlane.xlu0 %2406
    %v2408 = vmul.f32 %v2407, 0.015625
    %v2409 = vadd.f32 %v2408, 1e-05
    %v2410 = vrsqrt.pop %v2409
    %v2411 = vmul.f32 %v2410, %v2409
    %v2412 = vmul.f32 %v2411, %v2410
    %v2413 = vmul.f32 0.5, %v2412
    %v2414 = vsub.f32 1.5, %v2413
    %v2415 = vmul.f32 %v2410, %v2414
    %vm2416 = vweird.f32 %v2409
    %vm2417 = vweird.f32 %v2410
    %vm2418 = vmor %vm2416, %vm2417
    %v2419 = vsel %vm2418, %v2410, %v2415
    %v2420 = vmul.f32 %v2383, %v2419
    %v2421 = vld [vmem:[#allocation38] sm:$0xff]
    %v2422 = vld [vmem:[#allocation38 + $0x8] sm:$0xff]
    %v2423 = vld [vmem:[#allocation38 + $0x10] sm:$0xff]
    %v2424 = vld [vmem:[#allocation38 + $0x18] sm:$0xff]
    %v2425 = vld [vmem:[#allocation40] sm:$0x1]
    %2426 = vmatpush.msra.mxu0 0.0
    %2427 = vmatpush.msra.mxu0 0.0
    %2428 = vmatpush.msra.mxu0 0.0
    %2429 = vmatpush.msra.mxu0 0.0
    %2430 = vmatpush.msra.mxu0 0.0
    %2431 = vmatpush.msra.mxu0 0.0
    %2432 = vmatpush.msra.mxu0 0.0
    %2433 = vmatpush.msra.mxu0 0.0
    %2434 = vmatpush.msra.mxu0 0.0
    %2435 = vmatpush.msra.mxu0 0.0
    %2436 = vmatpush.msra.mxu0 0.0
    %2437 = vmatpush.msra.mxu0 0.0
    %2438 = vmatpush.msra.mxu0 0.0
    %2439 = vmatpush.msra.mxu0 0.0
    %2440 = vmatpush.msra.mxu0 0.0
    %2441 = vmatpush.msra.mxu0 %v2420
    %2442 = vmatmul.f32.gmra.mxu0 %v2293
    %v2443 = vpop.f32.mrf.mxu0
    %v2444 = vadd.f32 0.0, %v2443
    %2445 = vdwg.mxu0
    %v2447 = vperm.slane %v2425, 0
    %v2450 = vsel %vm666, %v2444, 0
    %2452 = vmatpush.msra.mxu0 0.0
    %2453 = vmatpush.msra.mxu0 0.0
    %2454 = vmatpush.msra.mxu0 0.0
    %2455 = vmatpush.msra.mxu0 0.0
    %2456 = vmatpush.msra.mxu0 0.0
    %2457 = vmatpush.msra.mxu0 0.0
    %2458 = vmatpush.msra.mxu0 0.0
    %2459 = vmatpush.msra.mxu0 0.0
    %2460 = vmatpush.msra.mxu0 0.0
    %2461 = vmatpush.msra.mxu0 0.0
    %2462 = vmatpush.msra.mxu0 0.0
    %2463 = vmatpush.msra.mxu0 0.0
    %2464 = vmatpush.msra.mxu0 %v2424
    %2465 = vmatpush.msra.mxu0 %v2423
    %2466 = vmatpush.msra.mxu0 %v2422
    %2467 = vmatpush.msra.mxu0 %v2421
    %2468 = vmatmul.f32.gmra.mxu0 %v2450
    %v2469 = vpop.f32.mrf.mxu0
    %v2470 = vadd.f32 %v2447, %v2469
    %2471 = vdwg.mxu0
    %v2472 = vmul.f32 %v2470, %v2470
    %v2473 = vsel %vm666, %v2472, 0.0
    %2474 = vadd.xlane.f32.xlu0 %v2473
    %v2475 = vpop.xlane.xlu0 %2474
    %v2476 = vmax.f32 %v2475, 1e-24
    %v2477 = vrsqrt.pop %v2476
    %v2478 = vmul.f32 %v2477, %v2476
    %v2479 = vmul.f32 %v2478, %v2477
    %v2480 = vmul.f32 0.5, %v2479
    %v2481 = vsub.f32 1.5, %v2480
    %v2482 = vmul.f32 %v2477, %v2481
    %vm2483 = vweird.f32 %v2476
    %vm2484 = vweird.f32 %v2477
    %vm2485 = vmor %vm2483, %vm2484
    %v2486 = vsel %vm2485, %v2477, %v2482
    %v2487 = vmul.f32 %v2470, %v2486
    %v2488 = vmax.f32 %v2487, 0.0
    %v2489 = vadd.f32 %v2420, %v2488
    %2490 = vmatpush.msra.mxu0 0.0
    %2491 = vmatpush.msra.mxu0 0.0
    %2492 = vmatpush.msra.mxu0 0.0
    %2493 = vmatpush.msra.mxu0 0.0
    %2494 = vmatpush.msra.mxu0 0.0
    %2495 = vmatpush.msra.mxu0 0.0
    %2496 = vmatpush.msra.mxu0 0.0
    %2497 = vmatpush.msra.mxu0 0.0
    %2498 = vmatpush.msra.mxu0 0.0
    %2499 = vmatpush.msra.mxu0 0.0
    %2500 = vmatpush.msra.mxu0 0.0
    %2501 = vmatpush.msra.mxu0 0.0
    %2502 = vmatpush.msra.mxu0 0.0
    %2503 = vmatpush.msra.mxu0 0.0
    %2504 = vmatpush.msra.mxu0 0.0
    %2505 = vmatpush.msra.mxu0 %v2489
    %2506 = vmatmul.f32.gmra.mxu0 %v1598
    %v2507 = vpop.f32.mrf.mxu0
    %v2508 = vadd.f32 0.0, %v2507
    %2509 = vdwg.mxu0
    %v2510 = vsel %vm666, %v2508, 0.0
    %2511 = vadd.xlane.f32.xlu0 %v2510
    %v2512 = vpop.xlane.xlu0 %2511
    %v2513 = vmul.f32 %v2512, 0.015625
    %v2514 = vsub.f32 %v2489, %v2513
    %v2515 = vmul.f32 %v2514, %v2514
    %2516 = vmatpush.msra.mxu0 0.0
    %2517 = vmatpush.msra.mxu0 0.0
    %2518 = vmatpush.msra.mxu0 0.0
    %2519 = vmatpush.msra.mxu0 0.0
    %2520 = vmatpush.msra.mxu0 0.0
    %2521 = vmatpush.msra.mxu0 0.0
    %2522 = vmatpush.msra.mxu0 0.0
    %2523 = vmatpush.msra.mxu0 0.0
    %2524 = vmatpush.msra.mxu0 0.0
    %2525 = vmatpush.msra.mxu0 0.0
    %2526 = vmatpush.msra.mxu0 0.0
    %2527 = vmatpush.msra.mxu0 0.0
    %2528 = vmatpush.msra.mxu0 0.0
    %2529 = vmatpush.msra.mxu0 0.0
    %2530 = vmatpush.msra.mxu0 0.0
    %2531 = vmatpush.msra.mxu0 %v2515
    %2532 = vmatmul.f32.gmra.mxu0 %v1598
    %v2533 = vpop.f32.mrf.mxu0
    %v2534 = vadd.f32 0.0, %v2533
    %2535 = vdwg.mxu0
    %v2536 = vsel %vm666, %v2534, 0.0
    %2537 = vadd.xlane.f32.xlu0 %v2536
    %v2538 = vpop.xlane.xlu0 %2537
    %v2539 = vmul.f32 %v2538, 0.015625
    %v2540 = vadd.f32 %v2539, 1e-05
    %v2541 = vrsqrt.pop %v2540
    %v2542 = vmul.f32 %v2541, %v2540
    %v2543 = vmul.f32 %v2542, %v2541
    %v2544 = vmul.f32 0.5, %v2543
    %v2545 = vsub.f32 1.5, %v2544
    %v2546 = vmul.f32 %v2541, %v2545
    %vm2547 = vweird.f32 %v2540
    %vm2548 = vweird.f32 %v2541
    %vm2549 = vmor %vm2547, %vm2548
    %v2550 = vsel %vm2549, %v2541, %v2546
    %v2551 = vmul.f32 %v2514, %v2550
    %v2552 = vld [vmem:[%s75] sm:$0xff]
    %v2553 = vld [vmem:[%s75 + $0x8] sm:$0xff]
    %v2554 = vld [vmem:[%s75 + $0x10] sm:$0xff]
    %v2555 = vld [vmem:[%s75 + $0x18] sm:$0xff]
    %v2556 = vld [vmem:[#allocation41] sm:$0x1]
    %2557 = vmatpush.msra.mxu0 0.0
    %2558 = vmatpush.msra.mxu0 0.0
    %2559 = vmatpush.msra.mxu0 0.0
    %2560 = vmatpush.msra.mxu0 0.0
    %2561 = vmatpush.msra.mxu0 0.0
    %2562 = vmatpush.msra.mxu0 0.0
    %2563 = vmatpush.msra.mxu0 0.0
    %2564 = vmatpush.msra.mxu0 0.0
    %2565 = vmatpush.msra.mxu0 0.0
    %2566 = vmatpush.msra.mxu0 0.0
    %2567 = vmatpush.msra.mxu0 0.0
    %2568 = vmatpush.msra.mxu0 0.0
    %2569 = vmatpush.msra.mxu0 0.0
    %2570 = vmatpush.msra.mxu0 0.0
    %2571 = vmatpush.msra.mxu0 0.0
    %2572 = vmatpush.msra.mxu0 %v2551
    %2573 = vmatmul.f32.gmra.mxu0 %v2293
    %v2574 = vpop.f32.mrf.mxu0
    %v2575 = vadd.f32 0.0, %v2574
    %2576 = vdwg.mxu0
    %v2578 = vperm.slane %v2556, 0
    %v2581 = vsel %vm666, %v2575, 0
    %2583 = vmatpush.msra.mxu0 0.0
    %2584 = vmatpush.msra.mxu0 0.0
    %2585 = vmatpush.msra.mxu0 0.0
    %2586 = vmatpush.msra.mxu0 0.0
    %2587 = vmatpush.msra.mxu0 0.0
    %2588 = vmatpush.msra.mxu0 0.0
    %2589 = vmatpush.msra.mxu0 0.0
    %2590 = vmatpush.msra.mxu0 0.0
    %2591 = vmatpush.msra.mxu0 0.0
    %2592 = vmatpush.msra.mxu0 0.0
    %2593 = vmatpush.msra.mxu0 0.0
    %2594 = vmatpush.msra.mxu0 0.0
    %2595 = vmatpush.msra.mxu0 %v2555
    %2596 = vmatpush.msra.mxu0 %v2554
    %2597 = vmatpush.msra.mxu0 %v2553
    %2598 = vmatpush.msra.mxu0 %v2552
    %2599 = vmatmul.f32.gmra.mxu0 %v2581
    %v2600 = vpop.f32.mrf.mxu0
    %v2601 = vadd.f32 %v2578, %v2600
    %2602 = vdwg.mxu0
    %v2603 = vmul.f32 %v2601, %v2601
    %v2604 = vsel %vm666, %v2603, 0.0
    %2605 = vadd.xlane.f32.xlu0 %v2604
    %v2606 = vpop.xlane.xlu0 %2605
    %v2607 = vmax.f32 %v2606, 1e-24
    %v2608 = vrsqrt.pop %v2607
    %v2609 = vmul.f32 %v2608, %v2607
    %v2610 = vmul.f32 %v2609, %v2608
    %v2611 = vmul.f32 0.5, %v2610
    %v2612 = vsub.f32 1.5, %v2611
    %v2613 = vmul.f32 %v2608, %v2612
    %vm2614 = vweird.f32 %v2607
    %vm2615 = vweird.f32 %v2608
    %vm2616 = vmor %vm2614, %vm2615
    %v2617 = vsel %vm2616, %v2608, %v2613
    %v2618 = vmul.f32 %v2601, %v2617
    %v2619 = vmax.f32 %v2618, 0.0
    %v2620 = vadd.f32 %v2551, %v2619
    %2621 = vmatpush.msra.mxu0 0.0
    %2622 = vmatpush.msra.mxu0 0.0
    %2623 = vmatpush.msra.mxu0 0.0
    %2624 = vmatpush.msra.mxu0 0.0
    %2625 = vmatpush.msra.mxu0 0.0
    %2626 = vmatpush.msra.mxu0 0.0
    %2627 = vmatpush.msra.mxu0 0.0
    %2628 = vmatpush.msra.mxu0 0.0
    %2629 = vmatpush.msra.mxu0 0.0
    %2630 = vmatpush.msra.mxu0 0.0
    %2631 = vmatpush.msra.mxu0 0.0
    %2632 = vmatpush.msra.mxu0 0.0
    %2633 = vmatpush.msra.mxu0 0.0
    %2634 = vmatpush.msra.mxu0 0.0
    %2635 = vmatpush.msra.mxu0 0.0
    %2636 = vmatpush.msra.mxu0 %v2620
    %2637 = vmatmul.f32.gmra.mxu0 %v1598
    %v2638 = vpop.f32.mrf.mxu0
    %v2639 = vadd.f32 0.0, %v2638
    %2640 = vdwg.mxu0
    %v2641 = vsel %vm666, %v2639, 0.0
    %2642 = vadd.xlane.f32.xlu0 %v2641
    %v2643 = vpop.xlane.xlu0 %2642
    %v2644 = vmul.f32 %v2643, 0.015625
    %v2645 = vsub.f32 %v2620, %v2644
    %v2646 = vmul.f32 %v2645, %v2645
    %2647 = vmatpush.msra.mxu0 0.0
    %2648 = vmatpush.msra.mxu0 0.0
    %2649 = vmatpush.msra.mxu0 0.0
    %2650 = vmatpush.msra.mxu0 0.0
    %2651 = vmatpush.msra.mxu0 0.0
    %2652 = vmatpush.msra.mxu0 0.0
    %2653 = vmatpush.msra.mxu0 0.0
    %2654 = vmatpush.msra.mxu0 0.0
    %2655 = vmatpush.msra.mxu0 0.0
    %2656 = vmatpush.msra.mxu0 0.0
    %2657 = vmatpush.msra.mxu0 0.0
    %2658 = vmatpush.msra.mxu0 0.0
    %2659 = vmatpush.msra.mxu0 0.0
    %2660 = vmatpush.msra.mxu0 0.0
    %2661 = vmatpush.msra.mxu0 0.0
    %2662 = vmatpush.msra.mxu0 %v2646
    %2663 = vmatmul.f32.gmra.mxu0 %v1598
    %v2664 = vpop.f32.mrf.mxu0
    %v2665 = vadd.f32 0.0, %v2664
    %2666 = vdwg.mxu0
    %v2667 = vsel %vm666, %v2665, 0.0
    %2668 = vadd.xlane.f32.xlu0 %v2667
    %v2669 = vpop.xlane.xlu0 %2668
    %v2670 = vmul.f32 %v2669, 0.015625
    %v2671 = vadd.f32 %v2670, 1e-05
    %v2672 = vrsqrt.pop %v2671
    %v2673 = vmul.f32 %v2672, %v2671
    %v2674 = vmul.f32 %v2673, %v2672
    %v2675 = vmul.f32 0.5, %v2674
    %v2676 = vsub.f32 1.5, %v2675
    %v2677 = vmul.f32 %v2672, %v2676
    %vm2678 = vweird.f32 %v2671
    %vm2679 = vweird.f32 %v2672
    %vm2680 = vmor %vm2678, %vm2679
    %v2681 = vsel %vm2680, %v2672, %v2677
    %v2682 = vmul.f32 %v2645, %v2681
    %v2684 = vsel %vm596, %v551, 0
    %2686 = vmatpush.msra.mxu0 0.0
    %2687 = vmatpush.msra.mxu0 0.0
    %2688 = vmatpush.msra.mxu0 0.0
    %2689 = vmatpush.msra.mxu0 0.0
    %2690 = vmatpush.msra.mxu0 0.0
    %2691 = vmatpush.msra.mxu0 0.0
    %2692 = vmatpush.msra.mxu0 0.0
    %2693 = vmatpush.msra.mxu0 0.0
    %2694 = vmatpush.msra.mxu0 0.0
    %2695 = vmatpush.msra.mxu0 0.0
    %2696 = vmatpush.msra.mxu0 0.0
    %2697 = vmatpush.msra.mxu0 0.0
    %2698 = vmatpush.msra.mxu0 0.0
    %2699 = vmatpush.msra.mxu0 0.0
    %2700 = vmatpush.msra.mxu0 0.0
    %2701 = vmatpush.msra.mxu0 %v2682
    %2702 = vmatmul.f32.gmra.mxu0 %v2684
    %v2703 = vpop.f32.mrf.mxu0
    %v2704 = vadd.f32 0.0, %v2703
    %2705 = vdwg.mxu0
    %v2706 = vld [vmem:[%s79] sm:$0xff]
    %v2707 = vld [vmem:[%s79 + $0x8] sm:$0xff]
    %v2708 = vld [vmem:[%s79 + $0x10] sm:$0xff]
    %v2709 = vld [vmem:[%s79 + $0x18] sm:$0xff]
    %v2710 = vld [vmem:[%s81] sm:$0x1]
    %v2712 = vperm.slane %v2710, 0
    %v2715 = vsel %vm666, %v2704, 0
    %2717 = vmatpush.msra.mxu0 0.0
    %2718 = vmatpush.msra.mxu0 0.0
    %2719 = vmatpush.msra.mxu0 0.0
    %2720 = vmatpush.msra.mxu0 0.0
    %2721 = vmatpush.msra.mxu0 0.0
    %2722 = vmatpush.msra.mxu0 0.0
    %2723 = vmatpush.msra.mxu0 0.0
    %2724 = vmatpush.msra.mxu0 0.0
    %2725 = vmatpush.msra.mxu0 0.0
    %2726 = vmatpush.msra.mxu0 0.0
    %2727 = vmatpush.msra.mxu0 0.0
    %2728 = vmatpush.msra.mxu0 0.0
    %2729 = vmatpush.msra.mxu0 %v2709
    %2730 = vmatpush.msra.mxu0 %v2708
    %2731 = vmatpush.msra.mxu0 %v2707
    %2732 = vmatpush.msra.mxu0 %v2706
    %2733 = vmatmul.f32.gmra.mxu0 %v2715
    %v2734 = vpop.f32.mrf.mxu0
    %v2735 = vadd.f32 %v2712, %v2734
    %2736 = vdwg.mxu0
    %vm2737 = vcmask 41984
    %2738 = vst.msk [vmem:[#allocation43] sm:$0x3] %vm2737, %v2735
    // Predicated region
    $region270: #{diffpool_forward.1} parent=1 // pred_check
      _
    $region271: #{diffpool_forward.1} parent=1 // pred_check_branch
      %2740 = sbr.rel (0) target = $region273
    $region272: #{diffpool_forward.1} parent=1 // pred_region
      %2742 = vsyncadd [#allocation4], 0
      %s2744 = sshll.u32 [#allocation43], 4
      %s2745 = int_to_ptr.vmem [resolvable:$true] %s2744
      %s2746 = sshll.u32 %s83, 4
      %s2747 = int_to_ptr.hbm [resolvable:$true] %s2746
      %2749 = dma.vmem_to_hbm [thread:$0]  %s2745, 32, %s2747, [#allocation4]
    $region273: #{diffpool_forward.1} parent=1 // pred_fallthru
      _
    // Predicated region
    $region274: #{diffpool_forward.1} parent=1 // pred_check
      _
    $region275: #{diffpool_forward.1} parent=1 // pred_check_branch
      %2751 = sbr.rel (0) target = $region277
    $region276: #{diffpool_forward.1} parent=1 // pred_region
      %2753 = dma.done [#allocation4], 32
    $region277: #{diffpool_forward.1} parent=1 // pred_fallthru
      _
    %2754 = vsyncpa [#allocation3], 1
    %2755 = vsyncpa [#allocation6], 1
    %2756 = vsyncpa [#allocation9], 1
    %2757 = vsyncpa [#allocation12], 1
    %2758 = vsyncpa [#allocation15], 1
    %2759 = vsyncpa [#allocation18], 1
    %2760 = vsyncpa [#allocation21], 1
    %2761 = vsyncpa [#allocation24], 1
    %2762 = vsyncpa [#allocation27], 1
    %2763 = vsyncpa [#allocation30], 1
    %2764 = vsyncpa [#allocation33], 1
    %2765 = vsyncpa [#allocation36], 1
    %2766 = vsyncpa [#allocation39], 1
    %2767 = vsyncpa [#allocation42], 1
    %2768 = vsyncpa [#allocation4], 1

</llo_original>
